<compile_context>
chip_gen: v6e
topology: v6e:2x2x1
jax: 0.10.0
libtpu: 0.0.40
codegen_flags: <defaults>
</compile_context>

<pallas_src>
import jax
import jax.numpy as jnp
from jax import lax
from jax.experimental import pallas as pl
from jax.experimental.pallas import tpu as pltpu

BN_EPS = 1e-5


# ---------------------------------------------------------------------------
# The single fused kernel (batch lane-packed: lanes 0..63 = image 0, 64..127 = image 1)
# ---------------------------------------------------------------------------
def _convnet2_kernel(p1_ref, w1_ref, b1_ref, w2_ref, b2_ref, w3_ref, b3_ref,
                     w4_ref, b4_ref, out_ref,
                     act1p_ref, c2_ref, act2p_ref, c3_ref,
                     m2s_ref, s2s_ref, p3s_ref):
    f32 = jnp.float32
    bf16 = jnp.bfloat16

    # ---- layer1: conv 7x7/s2/p3 (+BN fold) + ReLU + 2x2 max-pool + GAP f0.
    # One bf16 MXU dot over all four pool parities; block-diagonal weights keep
    # the two lane-packed images independent.
    y1 = jnp.dot(p1_ref[...], w1_ref[...], preferred_element_type=f32)   # (256,128)
    pooled1 = jnp.maximum(jnp.maximum(y1[0:64], y1[64:128]),
                          jnp.maximum(y1[128:192], y1[192:256]))         # parity max
    pooled1 = jnp.maximum(pooled1 + b1_ref[...], 0.0)                    # +shift, ReLU
    f0 = jnp.sum(pooled1, axis=0, keepdims=True) * (1.0 / 64.0)          # GAP over 8x8

    # Scatter the 8x8 map into a zero-padded flat 10x10 grid.  The pad ring
    # must stay zero (read as real zero padding by the layer-2 conv below).
    act1p_ref[...] = jnp.zeros(act1p_ref.shape, act1p_ref.dtype)
    for h in range(8):
        act1p_ref[pl.ds(h * 10 + 11, 8), :] = pooled1[h * 8:h * 8 + 8, :]

    # ---- layer2: 3x3 conv p1 (+BN) + ReLU, as 9 shift-and-accumulate bf16 dots.
    # c2 rows landing on the ring columns (w = 8, 9) are garbage, never read.
    acc = None
    for dh in range(3):
        for dw in range(3):
            lhs = act1p_ref[pl.ds(dh * 10 + dw, 78), :].astype(bf16)
            t = jnp.dot(lhs, w2_ref[dh * 3 + dw], preferred_element_type=f32)
            acc = t if acc is None else acc + t
    c2_ref[...] = jnp.maximum(acc + b2_ref[...], 0.0)                    # (78,128)

    # 2x2 max-pool: shifted full-width maxima + one strided downsample,
    # then GAP f1 as a single sum over the zero-ringed 6x6 buffer.
    m2s_ref[...] = jnp.maximum(
        jnp.maximum(c2_ref[pl.ds(0, 67), :], c2_ref[pl.ds(1, 67), :]),
        jnp.maximum(c2_ref[pl.ds(10, 67), :], c2_ref[pl.ds(11, 67), :]))
    act2p_ref[...] = jnp.zeros(act2p_ref.shape, act2p_ref.dtype)
    for hp in range(4):
        act2p_ref[pl.ds(6 * hp + 7, 4), :] = m2s_ref[pl.ds(20 * hp, 4, stride=2), :]
    f1 = jnp.sum(act2p_ref[...], axis=0, keepdims=True) * (1.0 / 16.0)

    # ---- layer3: 3x3 conv p1 (+BN) + ReLU, same shift-and-accumulate scheme.
    acc = None
    for dh in range(3):
        for dw in range(3):
            lhs = act2p_ref[pl.ds(dh * 6 + dw, 22), :].astype(bf16)
            t = jnp.dot(lhs, w3_ref[dh * 3 + dw], preferred_element_type=f32)
            acc = t if acc is None else acc + t
    c3_ref[...] = jnp.maximum(acc + b3_ref[...], 0.0)                    # (22,128)

    # 2x2 avg-pool: shifted full-width sums + strided downsample; GAP f2.
    s2s_ref[...] = (c3_ref[pl.ds(0, 15), :] + c3_ref[pl.ds(1, 15), :]
                    + c3_ref[pl.ds(6, 15), :] + c3_ref[pl.ds(7, 15), :])
    p3s_ref[pl.ds(0, 2), :] = s2s_ref[pl.ds(0, 2, stride=2), :] * 0.25
    p3s_ref[pl.ds(2, 2), :] = s2s_ref[pl.ds(12, 2, stride=2), :] * 0.25
    pooled3 = p3s_ref[...]                                               # (4,128)
    f2 = jnp.sum(pooled3, axis=0, keepdims=True) * 0.25

    # ---- layer4: 1x1 conv (+BN) + ReLU + GAP (avgpool5).
    y4 = jnp.dot(pooled3.astype(bf16), w4_ref[...], preferred_element_type=f32)
    y4 = jnp.maximum(y4 + b4_ref[...], 0.0)
    g4 = jnp.sum(y4, axis=0, keepdims=True) * 0.25

    # Output rows: f0, f1, f2, avgpool5(layer4); lanes = [img0 ch | img1 ch].
    out_ref[pl.ds(0, 1), :] = f0
    out_ref[pl.ds(1, 1), :] = f1
    out_ref[pl.ds(2, 1), :] = f2
    out_ref[pl.ds(3, 1), :] = g4


# ---------------------------------------------------------------------------
# Wrapper glue (a handful of tiny XLA ops)
# ---------------------------------------------------------------------------
def _blockdiag2(w):
    """(..., C, C) -> (..., 2C, 2C): two copies of w on the block diagonal.

    With the two batch images lane-packed side by side, the block-diagonal
    weight keeps them independent while the MXU contraction is 128 wide.
    """
    z = jnp.zeros_like(w)
    top = jnp.concatenate([w, z], axis=-1)
    bot = jnp.concatenate([z, w], axis=-1)
    return jnp.concatenate([top, bot], axis=-2)


def _fold_bn(w, b, gamma, beta, mean, var):
    """Fold eval-mode BatchNorm into the conv: w' = w*s, shift = (b-mean)*s+beta."""
    s = gamma / jnp.sqrt(var + BN_EPS)
    return w * s[:, None, None, None], (b - mean) * s + beta


@jax.jit
def convnet2_forward(x_nchw, params):
    x = jnp.transpose(x_nchw, (0, 2, 3, 1)).astype(jnp.float32)   # NCHW -> NHWC
    B, H, W, Cin = x.shape
    assert (B, H, W, Cin) == (2, 32, 32, 1), (
        "kernel is specialized to batch=2, 1x32x32 inputs (batch lane-packing)")

    # Fold BN (general trained stats supported) into conv weights / shifts.
    w1, sh1 = _fold_bn(params["w1"], params["b1"], params["bn_g1"],
                       params["bn_b1"], params["bn_m1"], params["bn_v1"])
    w2, sh2 = _fold_bn(params["w2"], params["b2"], params["bn_g2"],
                       params["bn_b2"], params["bn_m2"], params["bn_v2"])
    w3, sh3 = _fold_bn(params["w3"], params["b3"], params["bn_g3"],
                       params["bn_b3"], params["bn_m3"], params["bn_v3"])
    w4, sh4 = _fold_bn(params["w4"], params["b4"], params["bn_g4"],
                       params["bn_b4"], params["bn_m4"], params["bn_v4"])

    # Weights: (cin-major, cout), conv1 K padded 49->64, block-diagonal bf16.
    w1m = jnp.pad(jnp.transpose(w1, (2, 3, 1, 0)).reshape(49, 64), ((0, 15), (0, 0)))
    w1blk = _blockdiag2(w1m).astype(jnp.bfloat16)                              # (128,128)
    w2blk = _blockdiag2(jnp.transpose(w2, (2, 3, 1, 0)).reshape(9, 64, 64)
                        ).astype(jnp.bfloat16)                                 # (9,128,128)
    w3blk = _blockdiag2(jnp.transpose(w3, (2, 3, 1, 0)).reshape(9, 64, 64)
                        ).astype(jnp.bfloat16)
    w4blk = _blockdiag2(w4[:, :, 0, 0].T).astype(jnp.bfloat16)                 # (128,128)
    b1v = jnp.tile(sh1.reshape(1, 64), (1, 2)).astype(jnp.float32)             # (1,128)
    b2v = jnp.tile(sh2.reshape(1, 64), (1, 2)).astype(jnp.float32)
    b3v = jnp.tile(sh3.reshape(1, 64), (1, 2)).astype(jnp.float32)
    b4v = jnp.tile(sh4.reshape(1, 64), (1, 2)).astype(jnp.float32)

    # conv1 patches: ONE conv_general_dilated_patches call, then pad K 49->64
    # and reorder to (pool-parity, 8, 8) rows x (batch*64) lanes.
    patches = lax.conv_general_dilated_patches(
        x, filter_shape=(7, 7), window_strides=(2, 2),
        padding=((3, 3), (3, 3)),
        dimension_numbers=("NHWC", "HWIO", "NHWC"))                            # (2,16,16,49)
    p = jnp.pad(patches, ((0, 0), (0, 0), (0, 0), (0, 15)))                    # K -> 64
    p = p.reshape(B, 8, 2, 8, 2, 64)                                           # (b,hp,dh,wp,dw,k)
    p = jnp.transpose(p, (2, 4, 1, 3, 0, 5))                                   # (dh,dw,hp,wp,b,k)
    p1 = p.reshape(4 * 64, B * 64).astype(jnp.bfloat16)                        # (256,128)

    flops = 2 * 128 * 128 * (256 + 9 * 78 + 9 * 22 + 4)
    bytes_accessed = (p1.size * 2
                      + (w1blk.size + w2blk.size + w3blk.size + w4blk.size) * 2
                      + (b1v.size + b2v.size + b3v.size + b4v.size) * 4
                      + 4 * 128 * 4)

    out = pl.pallas_call(
        _convnet2_kernel,
        out_shape=jax.ShapeDtypeStruct((4, 128), jnp.float32),
        scratch_shapes=[
            pltpu.VMEM((100, 128), jnp.float32),  # act1p: zero-ringed 10x10 grid
            pltpu.VMEM((78, 128), jnp.float32),   # c2: conv2 output (flat)
            pltpu.VMEM((36, 128), jnp.float32),   # act2p: zero-ringed 6x6 grid
            pltpu.VMEM((22, 128), jnp.float32),   # c3: conv3 output (flat)
            pltpu.VMEM((67, 128), jnp.float32),   # m2: 2x2-max field (layer2)
            pltpu.VMEM((15, 128), jnp.float32),   # s2: 2x2-sum field (layer3)
            pltpu.VMEM((4, 128), jnp.float32),    # pooled3 (2x2 avg-pooled map)
        ],
        cost_estimate=pl.CostEstimate(flops=flops, transcendentals=0,
                                      bytes_accessed=bytes_accessed),
    )(p1, w1blk, b1v, w2blk, b2v, w3blk, b3v, w4blk, b4v)

    g = out.reshape(4, 2, 64)                 # rows: f0, f1, f2, avgpool5(layer4)
    # torch: cat([avgpool5(out), f0, f1, f2, f2], 1).view(B, -1) -> (B, 320)
    feat = jnp.concatenate([g[3], g[0], g[1], g[2], g[2]], axis=1)
    # Dropout(0.5) is identity in eval mode; num_classes <= 0 -> no classifier,
    # so the torch forward returns the same tensor twice.
    return feat, feat


# ---------------------------------------------------------------------------
# Parameter init (deterministic; matches __init__ shapes, kaiming fan_out,
# BN weight=1 / bias=0 / fresh running stats)
# ---------------------------------------------------------------------------
def init_params(key):
    specs = {  # name -> (cout, cin, kh, kw)
        "1": (64, 1, 7, 7),
        "2": (64, 64, 3, 3),
        "3": (64, 64, 3, 3),
        "4": (64, 64, 1, 1),
    }
    params = {}
    for name, (cout, cin, kh, kw) in specs.items():
        key, kw_key, kb_key = jax.random.split(key, 3)
        fan_out = cout * kh * kw
        std = (2.0 / fan_out) ** 0.5  # kaiming_normal_, mode='fan_out', relu
        params[f"w{name}"] = std * jax.random.normal(
            kw_key, (cout, cin, kh, kw), jnp.float32)
        fan_in = cin * kh * kw
        bound = 1.0 / (fan_in ** 0.5)
        params[f"b{name}"] = jax.random.uniform(
            kb_key, (cout,), jnp.float32, -bound, bound)
        params[f"bn_g{name}"] = jnp.ones((cout,), jnp.float32)    # gamma = 1
        params[f"bn_b{name}"] = jnp.zeros((cout,), jnp.float32)   # beta = 0
        params[f"bn_m{name}"] = jnp.zeros((cout,), jnp.float32)   # running_mean
        params[f"bn_v{name}"] = jnp.ones((cout,), jnp.float32)    # running_var
    return params


if __name__ == "__main__":
    key = jax.random.PRNGKey(0)
    pkey, xkey = jax.random.split(key)
    params = init_params(pkey)
    x = jax.random.normal(xkey, (2, 1, 32, 32), jnp.float32)  # NCHW, 1 channel

    feat, out = convnet2_forward(x, params)
    jax.block_until_ready((feat, out))
    assert feat.shape == (2, 320) and out.shape == (2, 320)
    assert bool(jnp.all(jnp.isfinite(feat)))
    print("KERNEL_OK")
</pallas_src>

<mosaic_0001>
module attributes {stable_mosaic.version = 11 : i64} {
  func.func @_convnet2_kernel(%arg0: memref<256x128xbf16, #tpu.memory_space<vmem>>, %arg1: memref<128x128xbf16, #tpu.memory_space<vmem>>, %arg2: memref<1x128xf32, #tpu.memory_space<vmem>>, %arg3: memref<9x128x128xbf16, #tpu.memory_space<vmem>>, %arg4: memref<1x128xf32, #tpu.memory_space<vmem>>, %arg5: memref<9x128x128xbf16, #tpu.memory_space<vmem>>, %arg6: memref<1x128xf32, #tpu.memory_space<vmem>>, %arg7: memref<128x128xbf16, #tpu.memory_space<vmem>>, %arg8: memref<1x128xf32, #tpu.memory_space<vmem>>, %arg9: memref<4x128xf32, #tpu.memory_space<vmem>>, %arg10: memref<100x128xf32, #tpu.memory_space<vmem>>, %arg11: memref<78x128xf32, #tpu.memory_space<vmem>>, %arg12: memref<36x128xf32, #tpu.memory_space<vmem>>, %arg13: memref<22x128xf32, #tpu.memory_space<vmem>>, %arg14: memref<67x128xf32, #tpu.memory_space<vmem>>, %arg15: memref<15x128xf32, #tpu.memory_space<vmem>>, %arg16: memref<4x128xf32, #tpu.memory_space<vmem>>) attributes {dimension_semantics = [], scalar_prefetch = 0 : i64, scratch_operands = 7 : i64, tpu.core_type = #tpu.core_type<tc>} {
    %c0 = arith.constant 0 : index
    %c0_0 = arith.constant 0 : index
    %0 = vector.load %arg0[%c0, %c0_0] : memref<256x128xbf16, #tpu.memory_space<vmem>>, vector<256x128xbf16>
    %c0_1 = arith.constant 0 : index
    %c0_2 = arith.constant 0 : index
    %1 = vector.load %arg1[%c0_1, %c0_2] : memref<128x128xbf16, #tpu.memory_space<vmem>>, vector<128x128xbf16>
    %cst = arith.constant dense<0.000000e+00> : vector<256x128xf32>
    %2 = tpu.matmul %0, %1, %cst {dimension_numbers = #tpu.dot_dimension_numbers<[1], [0], [0], [1], [0, 0, 1, 1], [], []>} : vector<256x128xbf16>, vector<128x128xbf16>, vector<256x128xf32> -> vector<256x128xf32>
    %3 = vector.extract_strided_slice %2 {offsets = [0, 0], sizes = [64, 128], strides = [1, 1]} : vector<256x128xf32> to vector<64x128xf32>
    %4 = vector.extract_strided_slice %2 {offsets = [64, 0], sizes = [64, 128], strides = [1, 1]} : vector<256x128xf32> to vector<64x128xf32>
    %5 = arith.maximumf %3, %4 : vector<64x128xf32>
    %6 = vector.extract_strided_slice %2 {offsets = [128, 0], sizes = [64, 128], strides = [1, 1]} : vector<256x128xf32> to vector<64x128xf32>
    %7 = vector.extract_strided_slice %2 {offsets = [192, 0], sizes = [64, 128], strides = [1, 1]} : vector<256x128xf32> to vector<64x128xf32>
    %8 = arith.maximumf %6, %7 : vector<64x128xf32>
    %9 = arith.maximumf %5, %8 : vector<64x128xf32>
    %c0_3 = arith.constant 0 : index
    %c0_4 = arith.constant 0 : index
    %10 = vector.load %arg2[%c0_3, %c0_4] : memref<1x128xf32, #tpu.memory_space<vmem>>, vector<1x128xf32>
    %11 = vector.broadcast %10 : vector<1x128xf32> to vector<64x128xf32>
    %12 = arith.addf %9, %11 : vector<64x128xf32>
    %cst_5 = arith.constant 0.000000e+00 : f32
    %13 = vector.broadcast %cst_5 : f32 to vector<64x128xf32>
    %14 = arith.maximumf %12, %13 : vector<64x128xf32>
    %cst_6 = arith.constant dense<0.000000e+00> : vector<128xf32>
    %15 = vector.multi_reduction <add>, %14, %cst_6 [0] : vector<64x128xf32> to vector<128xf32>
    %16 = vector.shape_cast %15 : vector<128xf32> to vector<1x128xf32>
    %cst_7 = arith.constant 1.562500e-02 : f32
    %17 = vector.broadcast %cst_7 : f32 to vector<1x128xf32>
    %18 = arith.mulf %16, %17 : vector<1x128xf32>
    %cst_8 = arith.constant 0.000000e+00 : f32
    %19 = vector.broadcast %cst_8 : f32 to vector<100x128xf32>
    %c0_9 = arith.constant 0 : index
    %c0_10 = arith.constant 0 : index
    %20 = vector.load %arg10[%c0_9, %c0_10] : memref<100x128xf32, #tpu.memory_space<vmem>>, vector<100x128xf32>
    tpu.vector_store %arg10[%c0_9, %c0_10], %19 {strides = array<i32>} : memref<100x128xf32, #tpu.memory_space<vmem>>, vector<100x128xf32>,
    %21 = vector.extract_strided_slice %14 {offsets = [0, 0], sizes = [8, 128], strides = [1, 1]} : vector<64x128xf32> to vector<8x128xf32>
    %c11 = arith.constant 11 : index
    %c0_11 = arith.constant 0 : index
    %22 = vector.load %arg10[%c11, %c0_11] : memref<100x128xf32, #tpu.memory_space<vmem>>, vector<8x128xf32>
    tpu.vector_store %arg10[%c11, %c0_11], %21 {strides = array<i32>} : memref<100x128xf32, #tpu.memory_space<vmem>>, vector<8x128xf32>,
    %23 = vector.extract_strided_slice %14 {offsets = [8, 0], sizes = [8, 128], strides = [1, 1]} : vector<64x128xf32> to vector<8x128xf32>
    %c21 = arith.constant 21 : index
    %c0_12 = arith.constant 0 : index
    %24 = vector.load %arg10[%c21, %c0_12] : memref<100x128xf32, #tpu.memory_space<vmem>>, vector<8x128xf32>
    tpu.vector_store %arg10[%c21, %c0_12], %23 {strides = array<i32>} : memref<100x128xf32, #tpu.memory_space<vmem>>, vector<8x128xf32>,
    %25 = vector.extract_strided_slice %14 {offsets = [16, 0], sizes = [8, 128], strides = [1, 1]} : vector<64x128xf32> to vector<8x128xf32>
    %c31 = arith.constant 31 : index
    %c0_13 = arith.constant 0 : index
    %26 = vector.load %arg10[%c31, %c0_13] : memref<100x128xf32, #tpu.memory_space<vmem>>, vector<8x128xf32>
    tpu.vector_store %arg10[%c31, %c0_13], %25 {strides = array<i32>} : memref<100x128xf32, #tpu.memory_space<vmem>>, vector<8x128xf32>,
    %27 = vector.extract_strided_slice %14 {offsets = [24, 0], sizes = [8, 128], strides = [1, 1]} : vector<64x128xf32> to vector<8x128xf32>
    %c41 = arith.constant 41 : index
    %c0_14 = arith.constant 0 : index
    %28 = vector.load %arg10[%c41, %c0_14] : memref<100x128xf32, #tpu.memory_space<vmem>>, vector<8x128xf32>
    tpu.vector_store %arg10[%c41, %c0_14], %27 {strides = array<i32>} : memref<100x128xf32, #tpu.memory_space<vmem>>, vector<8x128xf32>,
    %29 = vector.extract_strided_slice %14 {offsets = [32, 0], sizes = [8, 128], strides = [1, 1]} : vector<64x128xf32> to vector<8x128xf32>
    %c51 = arith.constant 51 : index
    %c0_15 = arith.constant 0 : index
    %30 = vector.load %arg10[%c51, %c0_15] : memref<100x128xf32, #tpu.memory_space<vmem>>, vector<8x128xf32>
    tpu.vector_store %arg10[%c51, %c0_15], %29 {strides = array<i32>} : memref<100x128xf32, #tpu.memory_space<vmem>>, vector<8x128xf32>,
    %31 = vector.extract_strided_slice %14 {offsets = [40, 0], sizes = [8, 128], strides = [1, 1]} : vector<64x128xf32> to vector<8x128xf32>
    %c61 = arith.constant 61 : index
    %c0_16 = arith.constant 0 : index
    %32 = vector.load %arg10[%c61, %c0_16] : memref<100x128xf32, #tpu.memory_space<vmem>>, vector<8x128xf32>
    tpu.vector_store %arg10[%c61, %c0_16], %31 {strides = array<i32>} : memref<100x128xf32, #tpu.memory_space<vmem>>, vector<8x128xf32>,
    %33 = vector.extract_strided_slice %14 {offsets = [48, 0], sizes = [8, 128], strides = [1, 1]} : vector<64x128xf32> to vector<8x128xf32>
    %c71 = arith.constant 71 : index
    %c0_17 = arith.constant 0 : index
    %34 = vector.load %arg10[%c71, %c0_17] : memref<100x128xf32, #tpu.memory_space<vmem>>, vector<8x128xf32>
    tpu.vector_store %arg10[%c71, %c0_17], %33 {strides = array<i32>} : memref<100x128xf32, #tpu.memory_space<vmem>>, vector<8x128xf32>,
    %35 = vector.extract_strided_slice %14 {offsets = [56, 0], sizes = [8, 128], strides = [1, 1]} : vector<64x128xf32> to vector<8x128xf32>
    %c81 = arith.constant 81 : index
    %c0_18 = arith.constant 0 : index
    %36 = vector.load %arg10[%c81, %c0_18] : memref<100x128xf32, #tpu.memory_space<vmem>>, vector<8x128xf32>
    tpu.vector_store %arg10[%c81, %c0_18], %35 {strides = array<i32>} : memref<100x128xf32, #tpu.memory_space<vmem>>, vector<8x128xf32>,
    %c0_19 = arith.constant 0 : index
    %c0_20 = arith.constant 0 : index
    %37 = vector.load %arg10[%c0_19, %c0_20] : memref<100x128xf32, #tpu.memory_space<vmem>>, vector<78x128xf32>
    %38 = arith.truncf %37 : vector<78x128xf32> to vector<78x128xbf16>
    %c0_21 = arith.constant 0 : index
    %c0_22 = arith.constant 0 : index
    %c0_23 = arith.constant 0 : index
    %39 = vector.load %arg3[%c0_21, %c0_22, %c0_23] : memref<9x128x128xbf16, #tpu.memory_space<vmem>>, vector<1x128x128xbf16>
    %40 = vector.shape_cast %39 : vector<1x128x128xbf16> to vector<128x128xbf16>
    %cst_24 = arith.constant dense<0.000000e+00> : vector<78x128xf32>
    %41 = tpu.matmul %38, %40, %cst_24 {dimension_numbers = #tpu.dot_dimension_numbers<[1], [0], [0], [1], [0, 0, 1, 1], [], []>} : vector<78x128xbf16>, vector<128x128xbf16>, vector<78x128xf32> -> vector<78x128xf32>
    %c1 = arith.constant 1 : index
    %c0_25 = arith.constant 0 : index
    %42 = vector.load %arg10[%c1, %c0_25] : memref<100x128xf32, #tpu.memory_space<vmem>>, vector<78x128xf32>
    %43 = arith.truncf %42 : vector<78x128xf32> to vector<78x128xbf16>
    %c1_26 = arith.constant 1 : index
    %c0_27 = arith.constant 0 : index
    %c0_28 = arith.constant 0 : index
    %44 = vector.load %arg3[%c1_26, %c0_27, %c0_28] : memref<9x128x128xbf16, #tpu.memory_space<vmem>>, vector<1x128x128xbf16>
    %45 = vector.shape_cast %44 : vector<1x128x128xbf16> to vector<128x128xbf16>
    %cst_29 = arith.constant dense<0.000000e+00> : vector<78x128xf32>
    %46 = tpu.matmul %43, %45, %cst_29 {dimension_numbers = #tpu.dot_dimension_numbers<[1], [0], [0], [1], [0, 0, 1, 1], [], []>} : vector<78x128xbf16>, vector<128x128xbf16>, vector<78x128xf32> -> vector<78x128xf32>
    %47 = arith.addf %41, %46 : vector<78x128xf32>
    %c2 = arith.constant 2 : index
    %c0_30 = arith.constant 0 : index
    %48 = vector.load %arg10[%c2, %c0_30] : memref<100x128xf32, #tpu.memory_space<vmem>>, vector<78x128xf32>
    %49 = arith.truncf %48 : vector<78x128xf32> to vector<78x128xbf16>
    %c2_31 = arith.constant 2 : index
    %c0_32 = arith.constant 0 : index
    %c0_33 = arith.constant 0 : index
    %50 = vector.load %arg3[%c2_31, %c0_32, %c0_33] : memref<9x128x128xbf16, #tpu.memory_space<vmem>>, vector<1x128x128xbf16>
    %51 = vector.shape_cast %50 : vector<1x128x128xbf16> to vector<128x128xbf16>
    %cst_34 = arith.constant dense<0.000000e+00> : vector<78x128xf32>
    %52 = tpu.matmul %49, %51, %cst_34 {dimension_numbers = #tpu.dot_dimension_numbers<[1], [0], [0], [1], [0, 0, 1, 1], [], []>} : vector<78x128xbf16>, vector<128x128xbf16>, vector<78x128xf32> -> vector<78x128xf32>
    %53 = arith.addf %47, %52 : vector<78x128xf32>
    %c10 = arith.constant 10 : index
    %c0_35 = arith.constant 0 : index
    %54 = vector.load %arg10[%c10, %c0_35] : memref<100x128xf32, #tpu.memory_space<vmem>>, vector<78x128xf32>
    %55 = arith.truncf %54 : vector<78x128xf32> to vector<78x128xbf16>
    %c3 = arith.constant 3 : index
    %c0_36 = arith.constant 0 : index
    %c0_37 = arith.constant 0 : index
    %56 = vector.load %arg3[%c3, %c0_36, %c0_37] : memref<9x128x128xbf16, #tpu.memory_space<vmem>>, vector<1x128x128xbf16>
    %57 = vector.shape_cast %56 : vector<1x128x128xbf16> to vector<128x128xbf16>
    %cst_38 = arith.constant dense<0.000000e+00> : vector<78x128xf32>
    %58 = tpu.matmul %55, %57, %cst_38 {dimension_numbers = #tpu.dot_dimension_numbers<[1], [0], [0], [1], [0, 0, 1, 1], [], []>} : vector<78x128xbf16>, vector<128x128xbf16>, vector<78x128xf32> -> vector<78x128xf32>
    %59 = arith.addf %53, %58 : vector<78x128xf32>
    %c11_39 = arith.constant 11 : index
    %c0_40 = arith.constant 0 : index
    %60 = vector.load %arg10[%c11_39, %c0_40] : memref<100x128xf32, #tpu.memory_space<vmem>>, vector<78x128xf32>
    %61 = arith.truncf %60 : vector<78x128xf32> to vector<78x128xbf16>
    %c4 = arith.constant 4 : index
    %c0_41 = arith.constant 0 : index
    %c0_42 = arith.constant 0 : index
    %62 = vector.load %arg3[%c4, %c0_41, %c0_42] : memref<9x128x128xbf16, #tpu.memory_space<vmem>>, vector<1x128x128xbf16>
    %63 = vector.shape_cast %62 : vector<1x128x128xbf16> to vector<128x128xbf16>
    %cst_43 = arith.constant dense<0.000000e+00> : vector<78x128xf32>
    %64 = tpu.matmul %61, %63, %cst_43 {dimension_numbers = #tpu.dot_dimension_numbers<[1], [0], [0], [1], [0, 0, 1, 1], [], []>} : vector<78x128xbf16>, vector<128x128xbf16>, vector<78x128xf32> -> vector<78x128xf32>
    %65 = arith.addf %59, %64 : vector<78x128xf32>
    %c12 = arith.constant 12 : index
    %c0_44 = arith.constant 0 : index
    %66 = vector.load %arg10[%c12, %c0_44] : memref<100x128xf32, #tpu.memory_space<vmem>>, vector<78x128xf32>
    %67 = arith.truncf %66 : vector<78x128xf32> to vector<78x128xbf16>
    %c5 = arith.constant 5 : index
    %c0_45 = arith.constant 0 : index
    %c0_46 = arith.constant 0 : index
    %68 = vector.load %arg3[%c5, %c0_45, %c0_46] : memref<9x128x128xbf16, #tpu.memory_space<vmem>>, vector<1x128x128xbf16>
    %69 = vector.shape_cast %68 : vector<1x128x128xbf16> to vector<128x128xbf16>
    %cst_47 = arith.constant dense<0.000000e+00> : vector<78x128xf32>
    %70 = tpu.matmul %67, %69, %cst_47 {dimension_numbers = #tpu.dot_dimension_numbers<[1], [0], [0], [1], [0, 0, 1, 1], [], []>} : vector<78x128xbf16>, vector<128x128xbf16>, vector<78x128xf32> -> vector<78x128xf32>
    %71 = arith.addf %65, %70 : vector<78x128xf32>
    %c20 = arith.constant 20 : index
    %c0_48 = arith.constant 0 : index
    %72 = vector.load %arg10[%c20, %c0_48] : memref<100x128xf32, #tpu.memory_space<vmem>>, vector<78x128xf32>
    %73 = arith.truncf %72 : vector<78x128xf32> to vector<78x128xbf16>
    %c6 = arith.constant 6 : index
    %c0_49 = arith.constant 0 : index
    %c0_50 = arith.constant 0 : index
    %74 = vector.load %arg3[%c6, %c0_49, %c0_50] : memref<9x128x128xbf16, #tpu.memory_space<vmem>>, vector<1x128x128xbf16>
    %75 = vector.shape_cast %74 : vector<1x128x128xbf16> to vector<128x128xbf16>
    %cst_51 = arith.constant dense<0.000000e+00> : vector<78x128xf32>
    %76 = tpu.matmul %73, %75, %cst_51 {dimension_numbers = #tpu.dot_dimension_numbers<[1], [0], [0], [1], [0, 0, 1, 1], [], []>} : vector<78x128xbf16>, vector<128x128xbf16>, vector<78x128xf32> -> vector<78x128xf32>
    %77 = arith.addf %71, %76 : vector<78x128xf32>
    %c21_52 = arith.constant 21 : index
    %c0_53 = arith.constant 0 : index
    %78 = vector.load %arg10[%c21_52, %c0_53] : memref<100x128xf32, #tpu.memory_space<vmem>>, vector<78x128xf32>
    %79 = arith.truncf %78 : vector<78x128xf32> to vector<78x128xbf16>
    %c7 = arith.constant 7 : index
    %c0_54 = arith.constant 0 : index
    %c0_55 = arith.constant 0 : index
    %80 = vector.load %arg3[%c7, %c0_54, %c0_55] : memref<9x128x128xbf16, #tpu.memory_space<vmem>>, vector<1x128x128xbf16>
    %81 = vector.shape_cast %80 : vector<1x128x128xbf16> to vector<128x128xbf16>
    %cst_56 = arith.constant dense<0.000000e+00> : vector<78x128xf32>
    %82 = tpu.matmul %79, %81, %cst_56 {dimension_numbers = #tpu.dot_dimension_numbers<[1], [0], [0], [1], [0, 0, 1, 1], [], []>} : vector<78x128xbf16>, vector<128x128xbf16>, vector<78x128xf32> -> vector<78x128xf32>
    %83 = arith.addf %77, %82 : vector<78x128xf32>
    %c22 = arith.constant 22 : index
    %c0_57 = arith.constant 0 : index
    %84 = vector.load %arg10[%c22, %c0_57] : memref<100x128xf32, #tpu.memory_space<vmem>>, vector<78x128xf32>
    %85 = arith.truncf %84 : vector<78x128xf32> to vector<78x128xbf16>
    %c8 = arith.constant 8 : index
    %c0_58 = arith.constant 0 : index
    %c0_59 = arith.constant 0 : index
    %86 = vector.load %arg3[%c8, %c0_58, %c0_59] : memref<9x128x128xbf16, #tpu.memory_space<vmem>>, vector<1x128x128xbf16>
    %87 = vector.shape_cast %86 : vector<1x128x128xbf16> to vector<128x128xbf16>
    %cst_60 = arith.constant dense<0.000000e+00> : vector<78x128xf32>
    %88 = tpu.matmul %85, %87, %cst_60 {dimension_numbers = #tpu.dot_dimension_numbers<[1], [0], [0], [1], [0, 0, 1, 1], [], []>} : vector<78x128xbf16>, vector<128x128xbf16>, vector<78x128xf32> -> vector<78x128xf32>
    %89 = arith.addf %83, %88 : vector<78x128xf32>
    %c0_61 = arith.constant 0 : index
    %c0_62 = arith.constant 0 : index
    %90 = vector.load %arg4[%c0_61, %c0_62] : memref<1x128xf32, #tpu.memory_space<vmem>>, vector<1x128xf32>
    %91 = vector.broadcast %90 : vector<1x128xf32> to vector<78x128xf32>
    %92 = arith.addf %89, %91 : vector<78x128xf32>
    %cst_63 = arith.constant 0.000000e+00 : f32
    %93 = vector.broadcast %cst_63 : f32 to vector<78x128xf32>
    %94 = arith.maximumf %92, %93 : vector<78x128xf32>
    %c0_64 = arith.constant 0 : index
    %c0_65 = arith.constant 0 : index
    %95 = vector.load %arg11[%c0_64, %c0_65] : memref<78x128xf32, #tpu.memory_space<vmem>>, vector<78x128xf32>
    tpu.vector_store %arg11[%c0_64, %c0_65], %94 {strides = array<i32>} : memref<78x128xf32, #tpu.memory_space<vmem>>, vector<78x128xf32>,
    %c0_66 = arith.constant 0 : index
    %c0_67 = arith.constant 0 : index
    %96 = vector.load %arg11[%c0_66, %c0_67] : memref<78x128xf32, #tpu.memory_space<vmem>>, vector<67x128xf32>
    %c1_68 = arith.constant 1 : index
    %c0_69 = arith.constant 0 : index
    %97 = vector.load %arg11[%c1_68, %c0_69] : memref<78x128xf32, #tpu.memory_space<vmem>>, vector<67x128xf32>
    %98 = arith.maximumf %96, %97 : vector<67x128xf32>
    %c10_70 = arith.constant 10 : index
    %c0_71 = arith.constant 0 : index
    %99 = vector.load %arg11[%c10_70, %c0_71] : memref<78x128xf32, #tpu.memory_space<vmem>>, vector<67x128xf32>
    %c11_72 = arith.constant 11 : index
    %c0_73 = arith.constant 0 : index
    %100 = vector.load %arg11[%c11_72, %c0_73] : memref<78x128xf32, #tpu.memory_space<vmem>>, vector<67x128xf32>
    %101 = arith.maximumf %99, %100 : vector<67x128xf32>
    %102 = arith.maximumf %98, %101 : vector<67x128xf32>
    %c0_74 = arith.constant 0 : index
    %c0_75 = arith.constant 0 : index
    %103 = vector.load %arg14[%c0_74, %c0_75] : memref<67x128xf32, #tpu.memory_space<vmem>>, vector<67x128xf32>
    tpu.vector_store %arg14[%c0_74, %c0_75], %102 {strides = array<i32>} : memref<67x128xf32, #tpu.memory_space<vmem>>, vector<67x128xf32>,
    %cst_76 = arith.constant 0.000000e+00 : f32
    %104 = vector.broadcast %cst_76 : f32 to vector<36x128xf32>
    %c0_77 = arith.constant 0 : index
    %c0_78 = arith.constant 0 : index
    %105 = vector.load %arg12[%c0_77, %c0_78] : memref<36x128xf32, #tpu.memory_space<vmem>>, vector<36x128xf32>
    tpu.vector_store %arg12[%c0_77, %c0_78], %104 {strides = array<i32>} : memref<36x128xf32, #tpu.memory_space<vmem>>, vector<36x128xf32>,
    %c0_79 = arith.constant 0 : index
    %c0_80 = arith.constant 0 : index
    %106 = tpu.strided_load %arg14[%c0_79, %c0_80] {strides = array<i32: 2, 1>} : memref<67x128xf32, #tpu.memory_space<vmem>>, vector<4x128xf32>
    %c7_81 = arith.constant 7 : index
    %c0_82 = arith.constant 0 : index
    %107 = vector.load %arg12[%c7_81, %c0_82] : memref<36x128xf32, #tpu.memory_space<vmem>>, vector<4x128xf32>
    tpu.vector_store %arg12[%c7_81, %c0_82], %106 {strides = array<i32>} : memref<36x128xf32, #tpu.memory_space<vmem>>, vector<4x128xf32>,
    %c20_83 = arith.constant 20 : index
    %c0_84 = arith.constant 0 : index
    %108 = tpu.strided_load %arg14[%c20_83, %c0_84] {strides = array<i32: 2, 1>} : memref<67x128xf32, #tpu.memory_space<vmem>>, vector<4x128xf32>
    %c13 = arith.constant 13 : index
    %c0_85 = arith.constant 0 : index
    %109 = vector.load %arg12[%c13, %c0_85] : memref<36x128xf32, #tpu.memory_space<vmem>>, vector<4x128xf32>
    tpu.vector_store %arg12[%c13, %c0_85], %108 {strides = array<i32>} : memref<36x128xf32, #tpu.memory_space<vmem>>, vector<4x128xf32>,
    %c40 = arith.constant 40 : index
    %c0_86 = arith.constant 0 : index
    %110 = tpu.strided_load %arg14[%c40, %c0_86] {strides = array<i32: 2, 1>} : memref<67x128xf32, #tpu.memory_space<vmem>>, vector<4x128xf32>
    %c19 = arith.constant 19 : index
    %c0_87 = arith.constant 0 : index
    %111 = vector.load %arg12[%c19, %c0_87] : memref<36x128xf32, #tpu.memory_space<vmem>>, vector<4x128xf32>
    tpu.vector_store %arg12[%c19, %c0_87], %110 {strides = array<i32>} : memref<36x128xf32, #tpu.memory_space<vmem>>, vector<4x128xf32>,
    %c60 = arith.constant 60 : index
    %c0_88 = arith.constant 0 : index
    %112 = tpu.strided_load %arg14[%c60, %c0_88] {strides = array<i32: 2, 1>} : memref<67x128xf32, #tpu.memory_space<vmem>>, vector<4x128xf32>
    %c25 = arith.constant 25 : index
    %c0_89 = arith.constant 0 : index
    %113 = vector.load %arg12[%c25, %c0_89] : memref<36x128xf32, #tpu.memory_space<vmem>>, vector<4x128xf32>
    tpu.vector_store %arg12[%c25, %c0_89], %112 {strides = array<i32>} : memref<36x128xf32, #tpu.memory_space<vmem>>, vector<4x128xf32>,
    %c0_90 = arith.constant 0 : index
    %c0_91 = arith.constant 0 : index
    %114 = vector.load %arg12[%c0_90, %c0_91] : memref<36x128xf32, #tpu.memory_space<vmem>>, vector<36x128xf32>
    %cst_92 = arith.constant dense<0.000000e+00> : vector<128xf32>
    %115 = vector.multi_reduction <add>, %114, %cst_92 [0] : vector<36x128xf32> to vector<128xf32>
    %116 = vector.shape_cast %115 : vector<128xf32> to vector<1x128xf32>
    %cst_93 = arith.constant 6.250000e-02 : f32
    %117 = vector.broadcast %cst_93 : f32 to vector<1x128xf32>
    %118 = arith.mulf %116, %117 : vector<1x128xf32>
    %c0_94 = arith.constant 0 : index
    %c0_95 = arith.constant 0 : index
    %119 = vector.load %arg12[%c0_94, %c0_95] : memref<36x128xf32, #tpu.memory_space<vmem>>, vector<22x128xf32>
    %120 = arith.truncf %119 : vector<22x128xf32> to vector<22x128xbf16>
    %c0_96 = arith.constant 0 : index
    %c0_97 = arith.constant 0 : index
    %c0_98 = arith.constant 0 : index
    %121 = vector.load %arg5[%c0_96, %c0_97, %c0_98] : memref<9x128x128xbf16, #tpu.memory_space<vmem>>, vector<1x128x128xbf16>
    %122 = vector.shape_cast %121 : vector<1x128x128xbf16> to vector<128x128xbf16>
    %cst_99 = arith.constant dense<0.000000e+00> : vector<22x128xf32>
    %123 = tpu.matmul %120, %122, %cst_99 {dimension_numbers = #tpu.dot_dimension_numbers<[1], [0], [0], [1], [0, 0, 1, 1], [], []>} : vector<22x128xbf16>, vector<128x128xbf16>, vector<22x128xf32> -> vector<22x128xf32>
    %c1_100 = arith.constant 1 : index
    %c0_101 = arith.constant 0 : index
    %124 = vector.load %arg12[%c1_100, %c0_101] : memref<36x128xf32, #tpu.memory_space<vmem>>, vector<22x128xf32>
    %125 = arith.truncf %124 : vector<22x128xf32> to vector<22x128xbf16>
    %c1_102 = arith.constant 1 : index
    %c0_103 = arith.constant 0 : index
    %c0_104 = arith.constant 0 : index
    %126 = vector.load %arg5[%c1_102, %c0_103, %c0_104] : memref<9x128x128xbf16, #tpu.memory_space<vmem>>, vector<1x128x128xbf16>
    %127 = vector.shape_cast %126 : vector<1x128x128xbf16> to vector<128x128xbf16>
    %cst_105 = arith.constant dense<0.000000e+00> : vector<22x128xf32>
    %128 = tpu.matmul %125, %127, %cst_105 {dimension_numbers = #tpu.dot_dimension_numbers<[1], [0], [0], [1], [0, 0, 1, 1], [], []>} : vector<22x128xbf16>, vector<128x128xbf16>, vector<22x128xf32> -> vector<22x128xf32>
    %129 = arith.addf %123, %128 : vector<22x128xf32>
    %c2_106 = arith.constant 2 : index
    %c0_107 = arith.constant 0 : index
    %130 = vector.load %arg12[%c2_106, %c0_107] : memref<36x128xf32, #tpu.memory_space<vmem>>, vector<22x128xf32>
    %131 = arith.truncf %130 : vector<22x128xf32> to vector<22x128xbf16>
    %c2_108 = arith.constant 2 : index
    %c0_109 = arith.constant 0 : index
    %c0_110 = arith.constant 0 : index
    %132 = vector.load %arg5[%c2_108, %c0_109, %c0_110] : memref<9x128x128xbf16, #tpu.memory_space<vmem>>, vector<1x128x128xbf16>
    %133 = vector.shape_cast %132 : vector<1x128x128xbf16> to vector<128x128xbf16>
    %cst_111 = arith.constant dense<0.000000e+00> : vector<22x128xf32>
    %134 = tpu.matmul %131, %133, %cst_111 {dimension_numbers = #tpu.dot_dimension_numbers<[1], [0], [0], [1], [0, 0, 1, 1], [], []>} : vector<22x128xbf16>, vector<128x128xbf16>, vector<22x128xf32> -> vector<22x128xf32>
    %135 = arith.addf %129, %134 : vector<22x128xf32>
    %c6_112 = arith.constant 6 : index
    %c0_113 = arith.constant 0 : index
    %136 = vector.load %arg12[%c6_112, %c0_113] : memref<36x128xf32, #tpu.memory_space<vmem>>, vector<22x128xf32>
    %137 = arith.truncf %136 : vector<22x128xf32> to vector<22x128xbf16>
    %c3_114 = arith.constant 3 : index
    %c0_115 = arith.constant 0 : index
    %c0_116 = arith.constant 0 : index
    %138 = vector.load %arg5[%c3_114, %c0_115, %c0_116] : memref<9x128x128xbf16, #tpu.memory_space<vmem>>, vector<1x128x128xbf16>
    %139 = vector.shape_cast %138 : vector<1x128x128xbf16> to vector<128x128xbf16>
    %cst_117 = arith.constant dense<0.000000e+00> : vector<22x128xf32>
    %140 = tpu.matmul %137, %139, %cst_117 {dimension_numbers = #tpu.dot_dimension_numbers<[1], [0], [0], [1], [0, 0, 1, 1], [], []>} : vector<22x128xbf16>, vector<128x128xbf16>, vector<22x128xf32> -> vector<22x128xf32>
    %141 = arith.addf %135, %140 : vector<22x128xf32>
    %c7_118 = arith.constant 7 : index
    %c0_119 = arith.constant 0 : index
    %142 = vector.load %arg12[%c7_118, %c0_119] : memref<36x128xf32, #tpu.memory_space<vmem>>, vector<22x128xf32>
    %143 = arith.truncf %142 : vector<22x128xf32> to vector<22x128xbf16>
    %c4_120 = arith.constant 4 : index
    %c0_121 = arith.constant 0 : index
    %c0_122 = arith.constant 0 : index
    %144 = vector.load %arg5[%c4_120, %c0_121, %c0_122] : memref<9x128x128xbf16, #tpu.memory_space<vmem>>, vector<1x128x128xbf16>
    %145 = vector.shape_cast %144 : vector<1x128x128xbf16> to vector<128x128xbf16>
    %cst_123 = arith.constant dense<0.000000e+00> : vector<22x128xf32>
    %146 = tpu.matmul %143, %145, %cst_123 {dimension_numbers = #tpu.dot_dimension_numbers<[1], [0], [0], [1], [0, 0, 1, 1], [], []>} : vector<22x128xbf16>, vector<128x128xbf16>, vector<22x128xf32> -> vector<22x128xf32>
    %147 = arith.addf %141, %146 : vector<22x128xf32>
    %c8_124 = arith.constant 8 : index
    %c0_125 = arith.constant 0 : index
    %148 = vector.load %arg12[%c8_124, %c0_125] : memref<36x128xf32, #tpu.memory_space<vmem>>, vector<22x128xf32>
    %149 = arith.truncf %148 : vector<22x128xf32> to vector<22x128xbf16>
    %c5_126 = arith.constant 5 : index
    %c0_127 = arith.constant 0 : index
    %c0_128 = arith.constant 0 : index
    %150 = vector.load %arg5[%c5_126, %c0_127, %c0_128] : memref<9x128x128xbf16, #tpu.memory_space<vmem>>, vector<1x128x128xbf16>
    %151 = vector.shape_cast %150 : vector<1x128x128xbf16> to vector<128x128xbf16>
    %cst_129 = arith.constant dense<0.000000e+00> : vector<22x128xf32>
    %152 = tpu.matmul %149, %151, %cst_129 {dimension_numbers = #tpu.dot_dimension_numbers<[1], [0], [0], [1], [0, 0, 1, 1], [], []>} : vector<22x128xbf16>, vector<128x128xbf16>, vector<22x128xf32> -> vector<22x128xf32>
    %153 = arith.addf %147, %152 : vector<22x128xf32>
    %c12_130 = arith.constant 12 : index
    %c0_131 = arith.constant 0 : index
    %154 = vector.load %arg12[%c12_130, %c0_131] : memref<36x128xf32, #tpu.memory_space<vmem>>, vector<22x128xf32>
    %155 = arith.truncf %154 : vector<22x128xf32> to vector<22x128xbf16>
    %c6_132 = arith.constant 6 : index
    %c0_133 = arith.constant 0 : index
    %c0_134 = arith.constant 0 : index
    %156 = vector.load %arg5[%c6_132, %c0_133, %c0_134] : memref<9x128x128xbf16, #tpu.memory_space<vmem>>, vector<1x128x128xbf16>
    %157 = vector.shape_cast %156 : vector<1x128x128xbf16> to vector<128x128xbf16>
    %cst_135 = arith.constant dense<0.000000e+00> : vector<22x128xf32>
    %158 = tpu.matmul %155, %157, %cst_135 {dimension_numbers = #tpu.dot_dimension_numbers<[1], [0], [0], [1], [0, 0, 1, 1], [], []>} : vector<22x128xbf16>, vector<128x128xbf16>, vector<22x128xf32> -> vector<22x128xf32>
    %159 = arith.addf %153, %158 : vector<22x128xf32>
    %c13_136 = arith.constant 13 : index
    %c0_137 = arith.constant 0 : index
    %160 = vector.load %arg12[%c13_136, %c0_137] : memref<36x128xf32, #tpu.memory_space<vmem>>, vector<22x128xf32>
    %161 = arith.truncf %160 : vector<22x128xf32> to vector<22x128xbf16>
    %c7_138 = arith.constant 7 : index
    %c0_139 = arith.constant 0 : index
    %c0_140 = arith.constant 0 : index
    %162 = vector.load %arg5[%c7_138, %c0_139, %c0_140] : memref<9x128x128xbf16, #tpu.memory_space<vmem>>, vector<1x128x128xbf16>
    %163 = vector.shape_cast %162 : vector<1x128x128xbf16> to vector<128x128xbf16>
    %cst_141 = arith.constant dense<0.000000e+00> : vector<22x128xf32>
    %164 = tpu.matmul %161, %163, %cst_141 {dimension_numbers = #tpu.dot_dimension_numbers<[1], [0], [0], [1], [0, 0, 1, 1], [], []>} : vector<22x128xbf16>, vector<128x128xbf16>, vector<22x128xf32> -> vector<22x128xf32>
    %165 = arith.addf %159, %164 : vector<22x128xf32>
    %c14 = arith.constant 14 : index
    %c0_142 = arith.constant 0 : index
    %166 = vector.load %arg12[%c14, %c0_142] : memref<36x128xf32, #tpu.memory_space<vmem>>, vector<22x128xf32>
    %167 = arith.truncf %166 : vector<22x128xf32> to vector<22x128xbf16>
    %c8_143 = arith.constant 8 : index
    %c0_144 = arith.constant 0 : index
    %c0_145 = arith.constant 0 : index
    %168 = vector.load %arg5[%c8_143, %c0_144, %c0_145] : memref<9x128x128xbf16, #tpu.memory_space<vmem>>, vector<1x128x128xbf16>
    %169 = vector.shape_cast %168 : vector<1x128x128xbf16> to vector<128x128xbf16>
    %cst_146 = arith.constant dense<0.000000e+00> : vector<22x128xf32>
    %170 = tpu.matmul %167, %169, %cst_146 {dimension_numbers = #tpu.dot_dimension_numbers<[1], [0], [0], [1], [0, 0, 1, 1], [], []>} : vector<22x128xbf16>, vector<128x128xbf16>, vector<22x128xf32> -> vector<22x128xf32>
    %171 = arith.addf %165, %170 : vector<22x128xf32>
    %c0_147 = arith.constant 0 : index
    %c0_148 = arith.constant 0 : index
    %172 = vector.load %arg6[%c0_147, %c0_148] : memref<1x128xf32, #tpu.memory_space<vmem>>, vector<1x128xf32>
    %173 = vector.broadcast %172 : vector<1x128xf32> to vector<22x128xf32>
    %174 = arith.addf %171, %173 : vector<22x128xf32>
    %cst_149 = arith.constant 0.000000e+00 : f32
    %175 = vector.broadcast %cst_149 : f32 to vector<22x128xf32>
    %176 = arith.maximumf %174, %175 : vector<22x128xf32>
    %c0_150 = arith.constant 0 : index
    %c0_151 = arith.constant 0 : index
    %177 = vector.load %arg13[%c0_150, %c0_151] : memref<22x128xf32, #tpu.memory_space<vmem>>, vector<22x128xf32>
    tpu.vector_store %arg13[%c0_150, %c0_151], %176 {strides = array<i32>} : memref<22x128xf32, #tpu.memory_space<vmem>>, vector<22x128xf32>,
    %c0_152 = arith.constant 0 : index
    %c0_153 = arith.constant 0 : index
    %178 = vector.load %arg13[%c0_152, %c0_153] : memref<22x128xf32, #tpu.memory_space<vmem>>, vector<15x128xf32>
    %c1_154 = arith.constant 1 : index
    %c0_155 = arith.constant 0 : index
    %179 = vector.load %arg13[%c1_154, %c0_155] : memref<22x128xf32, #tpu.memory_space<vmem>>, vector<15x128xf32>
    %180 = arith.addf %178, %179 : vector<15x128xf32>
    %c6_156 = arith.constant 6 : index
    %c0_157 = arith.constant 0 : index
    %181 = vector.load %arg13[%c6_156, %c0_157] : memref<22x128xf32, #tpu.memory_space<vmem>>, vector<15x128xf32>
    %182 = arith.addf %180, %181 : vector<15x128xf32>
    %c7_158 = arith.constant 7 : index
    %c0_159 = arith.constant 0 : index
    %183 = vector.load %arg13[%c7_158, %c0_159] : memref<22x128xf32, #tpu.memory_space<vmem>>, vector<15x128xf32>
    %184 = arith.addf %182, %183 : vector<15x128xf32>
    %c0_160 = arith.constant 0 : index
    %c0_161 = arith.constant 0 : index
    %185 = vector.load %arg15[%c0_160, %c0_161] : memref<15x128xf32, #tpu.memory_space<vmem>>, vector<15x128xf32>
    tpu.vector_store %arg15[%c0_160, %c0_161], %184 {strides = array<i32>} : memref<15x128xf32, #tpu.memory_space<vmem>>, vector<15x128xf32>,
    %c0_162 = arith.constant 0 : index
    %c0_163 = arith.constant 0 : index
    %186 = tpu.strided_load %arg15[%c0_162, %c0_163] {strides = array<i32: 2, 1>} : memref<15x128xf32, #tpu.memory_space<vmem>>, vector<2x128xf32>
    %cst_164 = arith.constant 2.500000e-01 : f32
    %187 = vector.broadcast %cst_164 : f32 to vector<2x128xf32>
    %188 = arith.mulf %186, %187 : vector<2x128xf32>
    %c0_165 = arith.constant 0 : index
    %c0_166 = arith.constant 0 : index
    %189 = vector.load %arg16[%c0_165, %c0_166] : memref<4x128xf32, #tpu.memory_space<vmem>>, vector<2x128xf32>
    tpu.vector_store %arg16[%c0_165, %c0_166], %188 {strides = array<i32>} : memref<4x128xf32, #tpu.memory_space<vmem>>, vector<2x128xf32>,
    %c12_167 = arith.constant 12 : index
    %c0_168 = arith.constant 0 : index
    %190 = tpu.strided_load %arg15[%c12_167, %c0_168] {strides = array<i32: 2, 1>} : memref<15x128xf32, #tpu.memory_space<vmem>>, vector<2x128xf32>
    %cst_169 = arith.constant 2.500000e-01 : f32
    %191 = vector.broadcast %cst_169 : f32 to vector<2x128xf32>
    %192 = arith.mulf %190, %191 : vector<2x128xf32>
    %c2_170 = arith.constant 2 : index
    %c0_171 = arith.constant 0 : index
    %193 = vector.load %arg16[%c2_170, %c0_171] : memref<4x128xf32, #tpu.memory_space<vmem>>, vector<2x128xf32>
    tpu.vector_store %arg16[%c2_170, %c0_171], %192 {strides = array<i32>} : memref<4x128xf32, #tpu.memory_space<vmem>>, vector<2x128xf32>,
    %c0_172 = arith.constant 0 : index
    %c0_173 = arith.constant 0 : index
    %194 = vector.load %arg16[%c0_172, %c0_173] : memref<4x128xf32, #tpu.memory_space<vmem>>, vector<4x128xf32>
    %cst_174 = arith.constant dense<0.000000e+00> : vector<128xf32>
    %195 = vector.multi_reduction <add>, %194, %cst_174 [0] : vector<4x128xf32> to vector<128xf32>
    %196 = vector.shape_cast %195 : vector<128xf32> to vector<1x128xf32>
    %cst_175 = arith.constant 2.500000e-01 : f32
    %197 = vector.broadcast %cst_175 : f32 to vector<1x128xf32>
    %198 = arith.mulf %196, %197 : vector<1x128xf32>
    %199 = arith.truncf %194 : vector<4x128xf32> to vector<4x128xbf16>
    %c0_176 = arith.constant 0 : index
    %c0_177 = arith.constant 0 : index
    %200 = vector.load %arg7[%c0_176, %c0_177] : memref<128x128xbf16, #tpu.memory_space<vmem>>, vector<128x128xbf16>
    %cst_178 = arith.constant dense<0.000000e+00> : vector<4x128xf32>
    %201 = tpu.matmul %199, %200, %cst_178 {dimension_numbers = #tpu.dot_dimension_numbers<[1], [0], [0], [1], [0, 0, 1, 1], [], []>} : vector<4x128xbf16>, vector<128x128xbf16>, vector<4x128xf32> -> vector<4x128xf32>
    %c0_179 = arith.constant 0 : index
    %c0_180 = arith.constant 0 : index
    %202 = vector.load %arg8[%c0_179, %c0_180] : memref<1x128xf32, #tpu.memory_space<vmem>>, vector<1x128xf32>
    %203 = vector.broadcast %202 : vector<1x128xf32> to vector<4x128xf32>
    %204 = arith.addf %201, %203 : vector<4x128xf32>
    %cst_181 = arith.constant 0.000000e+00 : f32
    %205 = vector.broadcast %cst_181 : f32 to vector<4x128xf32>
    %206 = arith.maximumf %204, %205 : vector<4x128xf32>
    %cst_182 = arith.constant dense<0.000000e+00> : vector<128xf32>
    %207 = vector.multi_reduction <add>, %206, %cst_182 [0] : vector<4x128xf32> to vector<128xf32>
    %208 = vector.shape_cast %207 : vector<128xf32> to vector<1x128xf32>
    %cst_183 = arith.constant 2.500000e-01 : f32
    %209 = vector.broadcast %cst_183 : f32 to vector<1x128xf32>
    %210 = arith.mulf %208, %209 : vector<1x128xf32>
    %c0_184 = arith.constant 0 : index
    %c0_185 = arith.constant 0 : index
    %211 = vector.load %arg9[%c0_184, %c0_185] : memref<4x128xf32, #tpu.memory_space<vmem>>, vector<1x128xf32>
    tpu.vector_store %arg9[%c0_184, %c0_185], %18 {strides = array<i32>} : memref<4x128xf32, #tpu.memory_space<vmem>>, vector<1x128xf32>,
    %c1_186 = arith.constant 1 : index
    %c0_187 = arith.constant 0 : index
    %212 = vector.load %arg9[%c1_186, %c0_187] : memref<4x128xf32, #tpu.memory_space<vmem>>, vector<1x128xf32>
    tpu.vector_store %arg9[%c1_186, %c0_187], %118 {strides = array<i32>} : memref<4x128xf32, #tpu.memory_space<vmem>>, vector<1x128xf32>,
    %c2_188 = arith.constant 2 : index
    %c0_189 = arith.constant 0 : index
    %213 = vector.load %arg9[%c2_188, %c0_189] : memref<4x128xf32, #tpu.memory_space<vmem>>, vector<1x128xf32>
    tpu.vector_store %arg9[%c2_188, %c0_189], %198 {strides = array<i32>} : memref<4x128xf32, #tpu.memory_space<vmem>>, vector<1x128xf32>,
    %c3_190 = arith.constant 3 : index
    %c0_191 = arith.constant 0 : index
    %214 = vector.load %arg9[%c3_190, %c0_191] : memref<4x128xf32, #tpu.memory_space<vmem>>, vector<1x128xf32>
    tpu.vector_store %arg9[%c3_190, %c0_191], %210 {strides = array<i32>} : memref<4x128xf32, #tpu.memory_space<vmem>>, vector<1x128xf32>,
    return
  }
}

</mosaic_0001>

<llo_original>
// kernel: squeeze.8
$region0: #{squeeze.8}
  %s0 = inlined_call_operand.vmem [shape: f32[128], index: 0, kind: input, shape index: {}]
  %s1 = inlined_call_operand.vmem [shape: f32[2,64], index: 1, kind: output, shape index: {}]
  $region1: #{squeeze.8} parent=0
    #allocation0 [shape = 'u8[4096]{0}', space=vmem, size = 0x1000, scoped, tag = 'scoped mem for output reshape']
    #allocation1 [shape = 'u8[4096]{0}', space=vmem, size = 0x1000, scoped, tag = 'scoped mem for input reshape']
    %s3 = sshll.u32 1, 1
    %s4 = ssub.s32 %s3, 1
    %v5 = vld [vmem:[%s0] sm:%s4]
    %6 = vst [vmem:[#allocation1] sm:%s4] %v5
    %v7 = vld [vmem:[#allocation1] sm:$0x1]
    %vm8 = vcmask 523264
    %9 = vst.msk [vmem:[#allocation0] sm:$0x1] %vm8, %v7
    %v10 = vld [vmem:[#allocation1] sm:$0x1]
    %11 = vrot.lane.b32.xlu0 %v10, 64
    %v12 = vpop.permute.xlu0 %11
    %vm13 = vcmask 523264
    %s14 = scalar_lea.vmem [#allocation0], 1
    %15 = vst.msk [vmem:[%s14] sm:$0x1] %vm13, %v12
    %s17 = sshll.u32 1, 2
    %s18 = ssub.s32 %s17, 1
    %v20 = vld [vmem:[#allocation0] sm:%s18]
    %s21 = sshll.u32 1, 2
    %s22 = ssub.s32 %s21, 1
    %23 = vst [vmem:[%s1] sm:%s22] %v20

// kernel: convnet2_forward.1
$region0: #{convnet2_forward.1}
  #allocation0 [shape = 'u32[]', space=smem, size = 0x4, offset = 0x4, fixed_abs, tag = 'smem constant byte address 0x4 - core index']
  #allocation1 [shape = 'u32[144,128]{1,0:T(1,128)}', space=vmem, size = 0x12000, scoped, tag = 'internal scratch']
  #allocation2 [shape = 'f32[100,128]{1,0:T(8,128)}', space=vmem, size = 0xd000, scoped, tag = 'scratch operand']
  #allocation3 [shape = 'f32[78,128]{1,0:T(8,128)}', space=vmem, size = 0xa000, scoped, tag = 'scratch operand']
  #allocation4 [shape = 'f32[36,128]{1,0:T(8,128)}', space=vmem, size = 0x5000, scoped, tag = 'scratch operand']
  #allocation5 [shape = 'f32[22,128]{1,0:T(8,128)}', space=vmem, size = 0x3000, scoped, tag = 'scratch operand']
  #allocation6 [shape = 'f32[67,128]{1,0:T(8,128)}', space=vmem, size = 0x9000, scoped, tag = 'scratch operand']
  #allocation7 [shape = 'f32[15,128]{1,0:T(8,128)}', space=vmem, size = 0x2000, scoped, tag = 'scratch operand']
  #allocation8 [shape = 'f32[4,128]{1,0:T(4,128)}', space=vmem, size = 0x800, scoped, tag = 'scratch operand']
  %s0 = inlined_call_operand.vmem [shape: bf16[256,128], index: 0, kind: input, shape index: {}]
  %s1 = inlined_call_operand.vmem [shape: bf16[128,128], index: 1, kind: input, shape index: {}]
  %s2 = inlined_call_operand.vmem [shape: f32[1,128], index: 2, kind: input, shape index: {}]
  %s3 = inlined_call_operand.vmem [shape: bf16[9,128,128], index: 3, kind: input, shape index: {}]
  %s4 = inlined_call_operand.vmem [shape: f32[1,128], index: 4, kind: input, shape index: {}]
  %s5 = inlined_call_operand.vmem [shape: bf16[9,128,128], index: 5, kind: input, shape index: {}]
  %s6 = inlined_call_operand.vmem [shape: f32[1,128], index: 6, kind: input, shape index: {}]
  %s7 = inlined_call_operand.vmem [shape: bf16[128,128], index: 7, kind: input, shape index: {}]
  %s8 = inlined_call_operand.vmem [shape: f32[1,128], index: 8, kind: input, shape index: {}]
  %s9 = inlined_call_operand.vmem [shape: f32[4,128], index: 9, kind: output, shape index: {}]
  %s10 = sld [smem:[#allocation0]]
  $region46: #{convnet2_forward.1} parent=0
    _
  %s12 = ssub.s32 1, %s10
  %s13 = scalar_select 0, %s12, %s10
  // Predicated region
  $region2: #{convnet2_forward.1} parent=0 // pred_check
    _
  $region3: #{convnet2_forward.1} parent=0 // pred_check_branch
    %15 = sbr.rel (0) target = $region5
  $region4: #{convnet2_forward.1} parent=0 // pred_region
    _
  $region5: #{convnet2_forward.1} parent=0 // pred_fallthru
    _
  // Predicated region
  $region6: #{convnet2_forward.1} parent=0 // pred_check
    _
  $region7: #{convnet2_forward.1} parent=0 // pred_check_branch
    %17 = sbr.rel (0) target = $region9
  $region8: #{convnet2_forward.1} parent=0 // pred_region
    _
  $region9: #{convnet2_forward.1} parent=0 // pred_fallthru
    _
  // Predicated region
  $region10: #{convnet2_forward.1} parent=0 // pred_check
    _
  $region11: #{convnet2_forward.1} parent=0 // pred_check_branch
    %19 = sbr.rel (0) target = $region13
  $region12: #{convnet2_forward.1} parent=0 // pred_region
    _
  $region13: #{convnet2_forward.1} parent=0 // pred_fallthru
    _
  // Predicated region
  $region14: #{convnet2_forward.1} parent=0 // pred_check
    _
  $region15: #{convnet2_forward.1} parent=0 // pred_check_branch
    %21 = sbr.rel (0) target = $region17
  $region16: #{convnet2_forward.1} parent=0 // pred_region
    _
  $region17: #{convnet2_forward.1} parent=0 // pred_fallthru
    _
  // Predicated region
  $region18: #{convnet2_forward.1} parent=0 // pred_check
    _
  $region19: #{convnet2_forward.1} parent=0 // pred_check_branch
    %23 = sbr.rel (0) target = $region21
  $region20: #{convnet2_forward.1} parent=0 // pred_region
    _
  $region21: #{convnet2_forward.1} parent=0 // pred_fallthru
    _
  // Predicated region
  $region22: #{convnet2_forward.1} parent=0 // pred_check
    _
  $region23: #{convnet2_forward.1} parent=0 // pred_check_branch
    %25 = sbr.rel (0) target = $region25
  $region24: #{convnet2_forward.1} parent=0 // pred_region
    _
  $region25: #{convnet2_forward.1} parent=0 // pred_fallthru
    _
  // Predicated region
  $region26: #{convnet2_forward.1} parent=0 // pred_check
    _
  $region27: #{convnet2_forward.1} parent=0 // pred_check_branch
    %27 = sbr.rel (0) target = $region29
  $region28: #{convnet2_forward.1} parent=0 // pred_region
    _
  $region29: #{convnet2_forward.1} parent=0 // pred_fallthru
    _
  // Predicated region
  $region30: #{convnet2_forward.1} parent=0 // pred_check
    _
  $region31: #{convnet2_forward.1} parent=0 // pred_check_branch
    %29 = sbr.rel (0) target = $region33
  $region32: #{convnet2_forward.1} parent=0 // pred_region
    _
  $region33: #{convnet2_forward.1} parent=0 // pred_fallthru
    _
  // Predicated region
  $region34: #{convnet2_forward.1} parent=0 // pred_check
    _
  $region35: #{convnet2_forward.1} parent=0 // pred_check_branch
    %31 = sbr.rel (0) target = $region37
  $region36: #{convnet2_forward.1} parent=0 // pred_region
    _
  $region37: #{convnet2_forward.1} parent=0 // pred_fallthru
    _
  %v33 = vld [vmem:[%s0] sm:$0xf]
  %v34 = vld [vmem:[%s0 + $0x4] sm:$0xf]
  %v35 = vld [vmem:[%s0 + $0x8] sm:$0xf]
  %v36 = vld [vmem:[%s0 + $0xc] sm:$0xf]
  %v37 = vld [vmem:[%s0 + $0x10] sm:$0xf]
  %v38 = vld [vmem:[%s0 + $0x14] sm:$0xf]
  %v39 = vld [vmem:[%s0 + $0x18] sm:$0xf]
  %v40 = vld [vmem:[%s0 + $0x1c] sm:$0xf]
  %v41 = vld [vmem:[%s0 + $0x20] sm:$0xf]
  %v42 = vld [vmem:[%s0 + $0x24] sm:$0xf]
  %v43 = vld [vmem:[%s0 + $0x28] sm:$0xf]
  %v44 = vld [vmem:[%s0 + $0x2c] sm:$0xf]
  %v45 = vld [vmem:[%s0 + $0x30] sm:$0xf]
  %v46 = vld [vmem:[%s0 + $0x34] sm:$0xf]
  %v47 = vld [vmem:[%s0 + $0x38] sm:$0xf]
  %v48 = vld [vmem:[%s0 + $0x3c] sm:$0xf]
  %v49 = vld [vmem:[%s0 + $0x40] sm:$0xf]
  %v50 = vld [vmem:[%s0 + $0x44] sm:$0xf]
  %v51 = vld [vmem:[%s0 + $0x48] sm:$0xf]
  %v52 = vld [vmem:[%s0 + $0x4c] sm:$0xf]
  %v53 = vld [vmem:[%s0 + $0x50] sm:$0xf]
  %v54 = vld [vmem:[%s0 + $0x54] sm:$0xf]
  %v55 = vld [vmem:[%s0 + $0x58] sm:$0xf]
  %v56 = vld [vmem:[%s0 + $0x5c] sm:$0xf]
  %v57 = vld [vmem:[%s0 + $0x60] sm:$0xf]
  %v58 = vld [vmem:[%s0 + $0x64] sm:$0xf]
  %v59 = vld [vmem:[%s0 + $0x68] sm:$0xf]
  %v60 = vld [vmem:[%s0 + $0x6c] sm:$0xf]
  %v61 = vld [vmem:[%s0 + $0x70] sm:$0xf]
  %v62 = vld [vmem:[%s0 + $0x74] sm:$0xf]
  %v63 = vld [vmem:[%s0 + $0x78] sm:$0xf]
  %v64 = vld [vmem:[%s0 + $0x7c] sm:$0xf]
  %v65 = vld [vmem:[%s1] sm:$0xf]
  %v66 = vld [vmem:[%s1 + $0x4] sm:$0xf]
  %v67 = vld [vmem:[%s1 + $0x8] sm:$0xf]
  %v68 = vld [vmem:[%s1 + $0xc] sm:$0xf]
  %v69 = vld [vmem:[%s1 + $0x10] sm:$0xf]
  %v70 = vld [vmem:[%s1 + $0x14] sm:$0xf]
  %v71 = vld [vmem:[%s1 + $0x18] sm:$0xf]
  %v72 = vld [vmem:[%s1 + $0x1c] sm:$0xf]
  %v73 = vld [vmem:[%s1 + $0x20] sm:$0xf]
  %v74 = vld [vmem:[%s1 + $0x24] sm:$0xf]
  %v75 = vld [vmem:[%s1 + $0x28] sm:$0xf]
  %v76 = vld [vmem:[%s1 + $0x2c] sm:$0xf]
  %v77 = vld [vmem:[%s1 + $0x30] sm:$0xf]
  %v78 = vld [vmem:[%s1 + $0x34] sm:$0xf]
  %v79 = vld [vmem:[%s1 + $0x38] sm:$0xf]
  %v80 = vld [vmem:[%s1 + $0x3c] sm:$0xf]
  %v113 = vunpack.c.l.b16 %v33
  %v114 = vunpack.c.l.b16 %v34
  %v115 = vunpack.c.l.b16 %v35
  %v116 = vunpack.c.l.b16 %v36
  %v117 = vunpack.c.l.b16 %v37
  %v118 = vunpack.c.l.b16 %v38
  %v119 = vunpack.c.l.b16 %v39
  %v120 = vunpack.c.l.b16 %v40
  %v121 = vunpack.c.l.b16 %v41
  %v122 = vunpack.c.l.b16 %v42
  %v123 = vunpack.c.l.b16 %v43
  %v124 = vunpack.c.l.b16 %v44
  %v125 = vunpack.c.l.b16 %v45
  %v126 = vunpack.c.l.b16 %v46
  %v127 = vunpack.c.l.b16 %v47
  %v128 = vunpack.c.l.b16 %v48
  %v129 = vunpack.c.l.b16 %v49
  %v130 = vunpack.c.l.b16 %v50
  %v131 = vunpack.c.l.b16 %v51
  %v132 = vunpack.c.l.b16 %v52
  %v133 = vunpack.c.l.b16 %v53
  %v134 = vunpack.c.l.b16 %v54
  %v135 = vunpack.c.l.b16 %v55
  %v136 = vunpack.c.l.b16 %v56
  %v137 = vunpack.c.l.b16 %v57
  %v138 = vunpack.c.l.b16 %v58
  %v139 = vunpack.c.l.b16 %v59
  %v140 = vunpack.c.l.b16 %v60
  %v141 = vunpack.c.l.b16 %v61
  %v142 = vunpack.c.l.b16 %v62
  %v143 = vunpack.c.l.b16 %v63
  %v144 = vunpack.c.l.b16 %v64
  %v145 = vpack.c.b16 %v114, %v113
  %v146 = vpack.c.b16 %v116, %v115
  %v147 = vpack.c.b16 %v118, %v117
  %v148 = vpack.c.b16 %v120, %v119
  %v149 = vpack.c.b16 %v122, %v121
  %v150 = vpack.c.b16 %v124, %v123
  %v151 = vpack.c.b16 %v126, %v125
  %v152 = vpack.c.b16 %v128, %v127
  %v153 = vpack.c.b16 %v130, %v129
  %v154 = vpack.c.b16 %v132, %v131
  %v155 = vpack.c.b16 %v134, %v133
  %v156 = vpack.c.b16 %v136, %v135
  %v157 = vpack.c.b16 %v138, %v137
  %v158 = vpack.c.b16 %v140, %v139
  %v159 = vpack.c.b16 %v142, %v141
  %v160 = vpack.c.b16 %v144, %v143
  %v193 = vunpack.c.l.b16 %v65
  %v194 = vunpack.c.l.b16 %v66
  %v195 = vunpack.c.l.b16 %v67
  %v196 = vunpack.c.l.b16 %v68
  %v197 = vunpack.c.l.b16 %v69
  %v198 = vunpack.c.l.b16 %v70
  %v199 = vunpack.c.l.b16 %v71
  %v200 = vunpack.c.l.b16 %v72
  %v201 = vunpack.c.l.b16 %v73
  %v202 = vunpack.c.l.b16 %v74
  %v203 = vunpack.c.l.b16 %v75
  %v204 = vunpack.c.l.b16 %v76
  %v205 = vunpack.c.l.b16 %v77
  %v206 = vunpack.c.l.b16 %v78
  %v207 = vunpack.c.l.b16 %v79
  %v208 = vunpack.c.l.b16 %v80
  %v209 = vpack.c.b16 %v194, %v193
  %v210 = vpack.c.b16 %v196, %v195
  %v211 = vpack.c.b16 %v198, %v197
  %v212 = vpack.c.b16 %v200, %v199
  %v213 = vpack.c.b16 %v202, %v201
  %v214 = vpack.c.b16 %v204, %v203
  %v215 = vpack.c.b16 %v206, %v205
  %v216 = vpack.c.b16 %v208, %v207
  %225 = vmatprep.subr.bf16.mxu0 0
  %226 = vmatpush1.bf16.msra.mxu0 %v216
  %227 = vmatprep.subr.bf16.mxu0 0
  %228 = vmatpush1.bf16.msra.mxu0 %v215
  %229 = vmatprep.subr.bf16.mxu0 0
  %230 = vmatpush1.bf16.msra.mxu0 %v214
  %231 = vmatprep.subr.bf16.mxu0 0
  %232 = vmatpush1.bf16.msra.mxu0 %v213
  %233 = vmatprep.subr.bf16.mxu0 0
  %234 = vmatpush1.bf16.msra.mxu0 %v212
  %235 = vmatprep.subr.bf16.mxu0 0
  %236 = vmatpush1.bf16.msra.mxu0 %v211
  %237 = vmatprep.subr.bf16.mxu0 0
  %238 = vmatpush1.bf16.msra.mxu0 %v210
  %239 = vmatprep.subr.bf16.mxu0 0
  %240 = vmatpush1.bf16.msra.mxu0 %v209
  %241 = vmatprep.subr.bf16.mxu0 0
  %242 = vmatpush2.bf16.msra.mxu0 0
  %243 = vmatprep.subr.bf16.mxu0 0
  %244 = vmatpush2.bf16.msra.mxu0 0
  %245 = vmatprep.subr.bf16.mxu0 0
  %246 = vmatpush2.bf16.msra.mxu0 0
  %247 = vmatprep.subr.bf16.mxu0 0
  %248 = vmatpush2.bf16.msra.mxu0 0
  %249 = vmatprep.subr.bf16.mxu0 0
  %250 = vmatpush2.bf16.msra.mxu0 0
  %251 = vmatprep.subr.bf16.mxu0 0
  %252 = vmatpush2.bf16.msra.mxu0 0
  %253 = vmatprep.subr.bf16.mxu0 0
  %254 = vmatpush2.bf16.msra.mxu0 0
  %255 = vmatprep.subr.bf16.mxu0 0
  %256 = vmatpush2.bf16.msra.mxu0 0
  %257 = vmatprep.mubr.bf16.mxu0 0
  %258 = vmatmul.mubr.bf16.gmra.mxu0 %v145
  %v259 = vpop.f32.mrf.mxu0
  %v260 = vadd.f32 0.0, %v259
  %v261 = vpop.f32.mrf.mxu0
  %v262 = vpop.f32.mrf.mxu0
  %v263 = vadd.f32 0.0, %v262
  %v264 = vpop.f32.mrf.mxu0
  %265 = vmatprep.mubr.bf16.mxu0 0
  %266 = vmatmul.mubr.bf16.gmra.mxu0 %v146
  %v267 = vpop.f32.mrf.mxu0
  %v268 = vadd.f32 0.0, %v267
  %v269 = vpop.f32.mrf.mxu0
  %v270 = vpop.f32.mrf.mxu0
  %v271 = vadd.f32 0.0, %v270
  %v272 = vpop.f32.mrf.mxu0
  %273 = vmatprep.mubr.bf16.mxu0 0
  %274 = vmatmul.mubr.bf16.gmra.mxu0 %v147
  %v275 = vpop.f32.mrf.mxu0
  %v276 = vadd.f32 0.0, %v275
  %v277 = vpop.f32.mrf.mxu0
  %v278 = vpop.f32.mrf.mxu0
  %v279 = vadd.f32 0.0, %v278
  %v280 = vpop.f32.mrf.mxu0
  %281 = vmatprep.mubr.bf16.mxu0 0
  %282 = vmatmul.mubr.bf16.gmra.mxu0 %v148
  %v283 = vpop.f32.mrf.mxu0
  %v284 = vadd.f32 0.0, %v283
  %v285 = vpop.f32.mrf.mxu0
  %v286 = vpop.f32.mrf.mxu0
  %v287 = vadd.f32 0.0, %v286
  %v288 = vpop.f32.mrf.mxu0
  %289 = vmatprep.mubr.bf16.mxu0 0
  %290 = vmatmul.mubr.bf16.gmra.mxu0 %v149
  %v291 = vpop.f32.mrf.mxu0
  %v292 = vadd.f32 0.0, %v291
  %v293 = vpop.f32.mrf.mxu0
  %v294 = vpop.f32.mrf.mxu0
  %v295 = vadd.f32 0.0, %v294
  %v296 = vpop.f32.mrf.mxu0
  %297 = vmatprep.mubr.bf16.mxu0 0
  %298 = vmatmul.mubr.bf16.gmra.mxu0 %v150
  %v299 = vpop.f32.mrf.mxu0
  %v300 = vadd.f32 0.0, %v299
  %v301 = vpop.f32.mrf.mxu0
  %v302 = vpop.f32.mrf.mxu0
  %v303 = vadd.f32 0.0, %v302
  %v304 = vpop.f32.mrf.mxu0
  %305 = vmatprep.mubr.bf16.mxu0 0
  %306 = vmatmul.mubr.bf16.gmra.mxu0 %v151
  %v307 = vpop.f32.mrf.mxu0
  %v308 = vadd.f32 0.0, %v307
  %v309 = vpop.f32.mrf.mxu0
  %v310 = vpop.f32.mrf.mxu0
  %v311 = vadd.f32 0.0, %v310
  %v312 = vpop.f32.mrf.mxu0
  %313 = vmatprep.mubr.bf16.mxu0 0
  %314 = vmatmul.mubr.bf16.gmra.mxu0 %v152
  %v315 = vpop.f32.mrf.mxu0
  %v316 = vadd.f32 0.0, %v315
  %v317 = vpop.f32.mrf.mxu0
  %v318 = vpop.f32.mrf.mxu0
  %v319 = vadd.f32 0.0, %v318
  %v320 = vpop.f32.mrf.mxu0
  %321 = vmatprep.mubr.bf16.mxu0 0
  %322 = vmatmul.mubr.bf16.gmra.mxu0 %v153
  %v323 = vpop.f32.mrf.mxu0
  %v324 = vadd.f32 0.0, %v323
  %v325 = vpop.f32.mrf.mxu0
  %v326 = vpop.f32.mrf.mxu0
  %v327 = vadd.f32 0.0, %v326
  %v328 = vpop.f32.mrf.mxu0
  %329 = vmatprep.mubr.bf16.mxu0 0
  %330 = vmatmul.mubr.bf16.gmra.mxu0 %v154
  %v331 = vpop.f32.mrf.mxu0
  %v332 = vadd.f32 0.0, %v331
  %v333 = vpop.f32.mrf.mxu0
  %v334 = vpop.f32.mrf.mxu0
  %v335 = vadd.f32 0.0, %v334
  %v336 = vpop.f32.mrf.mxu0
  %337 = vmatprep.mubr.bf16.mxu0 0
  %338 = vmatmul.mubr.bf16.gmra.mxu0 %v155
  %v339 = vpop.f32.mrf.mxu0
  %v340 = vadd.f32 0.0, %v339
  %v341 = vpop.f32.mrf.mxu0
  %v342 = vpop.f32.mrf.mxu0
  %v343 = vadd.f32 0.0, %v342
  %v344 = vpop.f32.mrf.mxu0
  %345 = vmatprep.mubr.bf16.mxu0 0
  %346 = vmatmul.mubr.bf16.gmra.mxu0 %v156
  %v347 = vpop.f32.mrf.mxu0
  %v348 = vadd.f32 0.0, %v347
  %v349 = vpop.f32.mrf.mxu0
  %v350 = vpop.f32.mrf.mxu0
  %v351 = vadd.f32 0.0, %v350
  %v352 = vpop.f32.mrf.mxu0
  %353 = vmatprep.mubr.bf16.mxu0 0
  %354 = vmatmul.mubr.bf16.gmra.mxu0 %v157
  %v355 = vpop.f32.mrf.mxu0
  %v356 = vadd.f32 0.0, %v355
  %v357 = vpop.f32.mrf.mxu0
  %v358 = vpop.f32.mrf.mxu0
  %v359 = vadd.f32 0.0, %v358
  %v360 = vpop.f32.mrf.mxu0
  %361 = vmatprep.mubr.bf16.mxu0 0
  %362 = vmatmul.mubr.bf16.gmra.mxu0 %v158
  %v363 = vpop.f32.mrf.mxu0
  %v364 = vadd.f32 0.0, %v363
  %v365 = vpop.f32.mrf.mxu0
  %v366 = vpop.f32.mrf.mxu0
  %v367 = vadd.f32 0.0, %v366
  %v368 = vpop.f32.mrf.mxu0
  %369 = vmatprep.mubr.bf16.mxu0 0
  %370 = vmatmul.mubr.bf16.gmra.mxu0 %v159
  %v371 = vpop.f32.mrf.mxu0
  %v372 = vadd.f32 0.0, %v371
  %v373 = vpop.f32.mrf.mxu0
  %v374 = vpop.f32.mrf.mxu0
  %v375 = vadd.f32 0.0, %v374
  %v376 = vpop.f32.mrf.mxu0
  %377 = vmatprep.mubr.bf16.mxu0 0
  %378 = vmatmul.mubr.bf16.gmra.mxu0 %v160
  %v379 = vpop.f32.mrf.mxu0
  %v380 = vadd.f32 0.0, %v379
  %v381 = vpop.f32.mrf.mxu0
  %v382 = vpop.f32.mrf.mxu0
  %v383 = vadd.f32 0.0, %v382
  %v384 = vpop.f32.mrf.mxu0
  %385 = vdwg.mxu0
  %v386 = vmax.f32 %v260, %v292
  %v387 = vmax.f32 %v263, %v295
  %v388 = vmax.f32 %v268, %v300
  %v389 = vmax.f32 %v271, %v303
  %v390 = vmax.f32 %v276, %v308
  %v391 = vmax.f32 %v279, %v311
  %v392 = vmax.f32 %v284, %v316
  %v393 = vmax.f32 %v287, %v319
  %v394 = vmax.f32 %v324, %v356
  %v395 = vmax.f32 %v327, %v359
  %v396 = vmax.f32 %v332, %v364
  %v397 = vmax.f32 %v335, %v367
  %v398 = vmax.f32 %v340, %v372
  %v399 = vmax.f32 %v343, %v375
  %v400 = vmax.f32 %v348, %v380
  %v401 = vmax.f32 %v351, %v383
  %v402 = vmax.f32 %v386, %v394
  %v403 = vmax.f32 %v387, %v395
  %v404 = vmax.f32 %v388, %v396
  %v405 = vmax.f32 %v389, %v397
  %v406 = vmax.f32 %v390, %v398
  %v407 = vmax.f32 %v391, %v399
  %v408 = vmax.f32 %v392, %v400
  %v409 = vmax.f32 %v393, %v401
  %v410 = vld [vmem:[%s2] sm:$0x1]
  %v412 = vlaneseq
  %v413 = vshrl.u32 %v412, 7
  %v414 = vsub.s32 0, %v413
  %v415 = vrot.slane %v410, %v414
  %v417 = vadd.f32 %v402, %v415
  %v418 = vadd.f32 %v403, %v415
  %v419 = vadd.f32 %v404, %v415
  %v420 = vadd.f32 %v405, %v415
  %v421 = vadd.f32 %v406, %v415
  %v422 = vadd.f32 %v407, %v415
  %v423 = vadd.f32 %v408, %v415
  %v424 = vadd.f32 %v409, %v415
  %v425 = vmax.f32 %v417, 0.0
  %v426 = vmax.f32 %v418, 0.0
  %v427 = vmax.f32 %v419, 0.0
  %v428 = vmax.f32 %v420, 0.0
  %v429 = vmax.f32 %v421, 0.0
  %v430 = vmax.f32 %v422, 0.0
  %v431 = vmax.f32 %v423, 0.0
  %v432 = vmax.f32 %v424, 0.0
  %v433 = vadd.f32 %v425, %v426
  %v434 = vadd.f32 %v433, %v427
  %v435 = vadd.f32 %v434, %v428
  %v436 = vadd.f32 %v435, %v429
  %v437 = vadd.f32 %v436, %v430
  %v438 = vadd.f32 %v437, %v431
  %v439 = vadd.f32 %v438, %v432
  %v440 = vrot.slane %v439, 4
  %v441 = vadd.f32 %v439, %v440
  %v442 = vrot.slane %v441, 2
  %v443 = vadd.f32 %v441, %v442
  %v444 = vrot.slane %v443, 1
  %v445 = vadd.f32 %v443, %v444
  %v446 = vmul.f32 %v445, 0.015625
  %447 = vst [vmem:[#allocation2] sm:$0xff] 0.0
  %448 = vst [vmem:[#allocation2 + $0x8] sm:$0xff] 0.0
  %449 = vst [vmem:[#allocation2 + $0x10] sm:$0xff] 0.0
  %450 = vst [vmem:[#allocation2 + $0x18] sm:$0xff] 0.0
  %451 = vst [vmem:[#allocation2 + $0x20] sm:$0xff] 0.0
  %452 = vst [vmem:[#allocation2 + $0x28] sm:$0xff] 0.0
  %453 = vst [vmem:[#allocation2 + $0x30] sm:$0xff] 0.0
  %454 = vst [vmem:[#allocation2 + $0x38] sm:$0xff] 0.0
  %455 = vst [vmem:[#allocation2 + $0x40] sm:$0xff] 0.0
  %456 = vst [vmem:[#allocation2 + $0x48] sm:$0xff] 0.0
  %457 = vst [vmem:[#allocation2 + $0x50] sm:$0xff] 0.0
  %458 = vst [vmem:[#allocation2 + $0x58] sm:$0xff] 0.0
  %459 = vst [vmem:[#allocation2 + $0x60] sm:$0xf] 0.0
  %460 = vst [vmem:[#allocation2 + $0xb] sm:$0xff] %v425
  %461 = vst [vmem:[#allocation2 + $0x15] sm:$0xff] %v426
  %462 = vst [vmem:[#allocation2 + $0x1f] sm:$0xff] %v427
  %463 = vst [vmem:[#allocation2 + $0x29] sm:$0xff] %v428
  %464 = vst [vmem:[#allocation2 + $0x33] sm:$0xff] %v429
  %465 = vst [vmem:[#allocation2 + $0x3d] sm:$0xff] %v430
  %466 = vst [vmem:[#allocation2 + $0x47] sm:$0xff] %v431
  %467 = vst [vmem:[#allocation2 + $0x51] sm:$0xff] %v432
  %v468 = vld [vmem:[#allocation2] sm:$0xff]
  %v469 = vld [vmem:[#allocation2 + $0x8] sm:$0xff]
  %v470 = vld [vmem:[#allocation2 + $0x10] sm:$0xff]
  %v471 = vld [vmem:[#allocation2 + $0x18] sm:$0xff]
  %v472 = vld [vmem:[#allocation2 + $0x20] sm:$0xff]
  %v473 = vld [vmem:[#allocation2 + $0x28] sm:$0xff]
  %v474 = vld [vmem:[#allocation2 + $0x30] sm:$0xff]
  %v475 = vld [vmem:[#allocation2 + $0x38] sm:$0xff]
  %v476 = vld [vmem:[#allocation2 + $0x40] sm:$0xff]
  %v477 = vld [vmem:[#allocation2 + $0x48] sm:$0x3f]
  %v478 = vpack.c.bf16 %v469, %v468
  %v479 = vpack.c.bf16 %v471, %v470
  %v480 = vpack.c.bf16 %v473, %v472
  %v481 = vpack.c.bf16 %v475, %v474
  %v482 = vpack.c.bf16 %v477, %v476
  %v483 = vld [vmem:[%s3] sm:$0xf]
  %v484 = vld [vmem:[%s3 + $0x4] sm:$0xf]
  %v485 = vld [vmem:[%s3 + $0x8] sm:$0xf]
  %v486 = vld [vmem:[%s3 + $0xc] sm:$0xf]
  %v487 = vld [vmem:[%s3 + $0x10] sm:$0xf]
  %v488 = vld [vmem:[%s3 + $0x14] sm:$0xf]
  %v489 = vld [vmem:[%s3 + $0x18] sm:$0xf]
  %v490 = vld [vmem:[%s3 + $0x1c] sm:$0xf]
  %v491 = vld [vmem:[%s3 + $0x20] sm:$0xf]
  %v492 = vld [vmem:[%s3 + $0x24] sm:$0xf]
  %v493 = vld [vmem:[%s3 + $0x28] sm:$0xf]
  %v494 = vld [vmem:[%s3 + $0x2c] sm:$0xf]
  %v495 = vld [vmem:[%s3 + $0x30] sm:$0xf]
  %v496 = vld [vmem:[%s3 + $0x34] sm:$0xf]
  %v497 = vld [vmem:[%s3 + $0x38] sm:$0xf]
  %v498 = vld [vmem:[%s3 + $0x3c] sm:$0xf]
  %v499 = vld [vmem:[#allocation2 + $0x1] sm:$0xff]
  %v500 = vld [vmem:[#allocation2 + $0x9] sm:$0xff]
  %v501 = vld [vmem:[#allocation2 + $0x11] sm:$0xff]
  %v502 = vld [vmem:[#allocation2 + $0x19] sm:$0xff]
  %v503 = vld [vmem:[#allocation2 + $0x21] sm:$0xff]
  %v504 = vld [vmem:[#allocation2 + $0x29] sm:$0xff]
  %v505 = vld [vmem:[#allocation2 + $0x31] sm:$0xff]
  %v506 = vld [vmem:[#allocation2 + $0x39] sm:$0xff]
  %v507 = vld [vmem:[#allocation2 + $0x41] sm:$0xff]
  %v508 = vld [vmem:[#allocation2 + $0x49] sm:$0x3f]
  %v509 = vpack.c.bf16 %v500, %v499
  %v510 = vpack.c.bf16 %v502, %v501
  %v511 = vpack.c.bf16 %v504, %v503
  %v512 = vpack.c.bf16 %v506, %v505
  %v513 = vpack.c.bf16 %v508, %v507
  %s514 = scalar_lea.vmem %s3, 64
  %v515 = vld [vmem:[%s514] sm:$0xf]
  %v516 = vld [vmem:[%s514 + $0x4] sm:$0xf]
  %v517 = vld [vmem:[%s514 + $0x8] sm:$0xf]
  %v518 = vld [vmem:[%s514 + $0xc] sm:$0xf]
  %v519 = vld [vmem:[%s514 + $0x10] sm:$0xf]
  %v520 = vld [vmem:[%s514 + $0x14] sm:$0xf]
  %v521 = vld [vmem:[%s514 + $0x18] sm:$0xf]
  %v522 = vld [vmem:[%s514 + $0x1c] sm:$0xf]
  %v523 = vld [vmem:[%s514 + $0x20] sm:$0xf]
  %v524 = vld [vmem:[%s514 + $0x24] sm:$0xf]
  %v525 = vld [vmem:[%s514 + $0x28] sm:$0xf]
  %v526 = vld [vmem:[%s514 + $0x2c] sm:$0xf]
  %v527 = vld [vmem:[%s514 + $0x30] sm:$0xf]
  %v528 = vld [vmem:[%s514 + $0x34] sm:$0xf]
  %v529 = vld [vmem:[%s514 + $0x38] sm:$0xf]
  %v530 = vld [vmem:[%s514 + $0x3c] sm:$0xf]
  %v547 = vunpack.c.l.b16 %v515
  %v548 = vunpack.c.l.b16 %v516
  %v549 = vunpack.c.l.b16 %v517
  %v550 = vunpack.c.l.b16 %v518
  %v551 = vunpack.c.l.b16 %v519
  %v552 = vunpack.c.l.b16 %v520
  %v553 = vunpack.c.l.b16 %v521
  %v554 = vunpack.c.l.b16 %v522
  %v555 = vunpack.c.l.b16 %v523
  %v556 = vunpack.c.l.b16 %v524
  %v557 = vunpack.c.l.b16 %v525
  %v558 = vunpack.c.l.b16 %v526
  %v559 = vunpack.c.l.b16 %v527
  %v560 = vunpack.c.l.b16 %v528
  %v561 = vunpack.c.l.b16 %v529
  %v562 = vunpack.c.l.b16 %v530
  %v563 = vpack.c.b16 %v548, %v547
  %v564 = vpack.c.b16 %v550, %v549
  %v565 = vpack.c.b16 %v552, %v551
  %v566 = vpack.c.b16 %v554, %v553
  %v567 = vpack.c.b16 %v556, %v555
  %v568 = vpack.c.b16 %v558, %v557
  %v569 = vpack.c.b16 %v560, %v559
  %v570 = vpack.c.b16 %v562, %v561
  %579 = vmatprep.subr.bf16.mxu0 0
  %580 = vmatpush1.bf16.msra.mxu0 %v570
  %581 = vmatprep.subr.bf16.mxu0 0
  %582 = vmatpush1.bf16.msra.mxu0 %v569
  %583 = vmatprep.subr.bf16.mxu0 0
  %584 = vmatpush1.bf16.msra.mxu0 %v568
  %585 = vmatprep.subr.bf16.mxu0 0
  %586 = vmatpush1.bf16.msra.mxu0 %v567
  %587 = vmatprep.subr.bf16.mxu0 0
  %588 = vmatpush1.bf16.msra.mxu0 %v566
  %589 = vmatprep.subr.bf16.mxu0 0
  %590 = vmatpush1.bf16.msra.mxu0 %v565
  %591 = vmatprep.subr.bf16.mxu0 0
  %592 = vmatpush1.bf16.msra.mxu0 %v564
  %593 = vmatprep.subr.bf16.mxu0 0
  %594 = vmatpush1.bf16.msra.mxu0 %v563
  %595 = vmatprep.subr.bf16.mxu0 0
  %596 = vmatpush2.bf16.msra.mxu0 0
  %597 = vmatprep.subr.bf16.mxu0 0
  %598 = vmatpush2.bf16.msra.mxu0 0
  %599 = vmatprep.subr.bf16.mxu0 0
  %600 = vmatpush2.bf16.msra.mxu0 0
  %601 = vmatprep.subr.bf16.mxu0 0
  %602 = vmatpush2.bf16.msra.mxu0 0
  %603 = vmatprep.subr.bf16.mxu0 0
  %604 = vmatpush2.bf16.msra.mxu0 0
  %605 = vmatprep.subr.bf16.mxu0 0
  %606 = vmatpush2.bf16.msra.mxu0 0
  %607 = vmatprep.subr.bf16.mxu0 0
  %608 = vmatpush2.bf16.msra.mxu0 0
  %609 = vmatprep.subr.bf16.mxu0 0
  %610 = vmatpush2.bf16.msra.mxu0 0
  %611 = vmatprep.mubr.bf16.mxu0 0
  %612 = vmatmul.mubr.bf16.gmra.mxu0 %v509
  %v613 = vpop.f32.mrf.mxu0
  %v614 = vadd.f32 0.0, %v613
  %v615 = vpop.f32.mrf.mxu0
  %v616 = vpop.f32.mrf.mxu0
  %v617 = vadd.f32 0.0, %v616
  %v618 = vpop.f32.mrf.mxu0
  %619 = vmatprep.mubr.bf16.mxu0 0
  %620 = vmatmul.mubr.bf16.gmra.mxu0 %v510
  %v621 = vpop.f32.mrf.mxu0
  %v622 = vadd.f32 0.0, %v621
  %v623 = vpop.f32.mrf.mxu0
  %v624 = vpop.f32.mrf.mxu0
  %v625 = vadd.f32 0.0, %v624
  %v626 = vpop.f32.mrf.mxu0
  %627 = vmatprep.mubr.bf16.mxu0 0
  %628 = vmatmul.mubr.bf16.gmra.mxu0 %v511
  %v629 = vpop.f32.mrf.mxu0
  %v630 = vadd.f32 0.0, %v629
  %v631 = vpop.f32.mrf.mxu0
  %v632 = vpop.f32.mrf.mxu0
  %v633 = vadd.f32 0.0, %v632
  %v634 = vpop.f32.mrf.mxu0
  %635 = vmatprep.mubr.bf16.mxu0 0
  %636 = vmatmul.mubr.bf16.gmra.mxu0 %v512
  %v637 = vpop.f32.mrf.mxu0
  %v638 = vadd.f32 0.0, %v637
  %v639 = vpop.f32.mrf.mxu0
  %v640 = vpop.f32.mrf.mxu0
  %v641 = vadd.f32 0.0, %v640
  %v642 = vpop.f32.mrf.mxu0
  %643 = vmatprep.mubr.bf16.mxu0 0
  %644 = vmatmul.mubr.bf16.gmra.mxu0 %v513
  %v645 = vpop.f32.mrf.mxu0
  %v646 = vadd.f32 0.0, %v645
  %v647 = vpop.f32.mrf.mxu0
  %v648 = vpop.f32.mrf.mxu0
  %v649 = vadd.f32 0.0, %v648
  %v650 = vpop.f32.mrf.mxu0
  %651 = vdwg.mxu0
  %v668 = vunpack.c.l.b16 %v483
  %v669 = vunpack.c.l.b16 %v484
  %v670 = vunpack.c.l.b16 %v485
  %v671 = vunpack.c.l.b16 %v486
  %v672 = vunpack.c.l.b16 %v487
  %v673 = vunpack.c.l.b16 %v488
  %v674 = vunpack.c.l.b16 %v489
  %v675 = vunpack.c.l.b16 %v490
  %v676 = vunpack.c.l.b16 %v491
  %v677 = vunpack.c.l.b16 %v492
  %v678 = vunpack.c.l.b16 %v493
  %v679 = vunpack.c.l.b16 %v494
  %v680 = vunpack.c.l.b16 %v495
  %v681 = vunpack.c.l.b16 %v496
  %v682 = vunpack.c.l.b16 %v497
  %v683 = vunpack.c.l.b16 %v498
  %v684 = vpack.c.b16 %v669, %v668
  %v685 = vpack.c.b16 %v671, %v670
  %v686 = vpack.c.b16 %v673, %v672
  %v687 = vpack.c.b16 %v675, %v674
  %v688 = vpack.c.b16 %v677, %v676
  %v689 = vpack.c.b16 %v679, %v678
  %v690 = vpack.c.b16 %v681, %v680
  %v691 = vpack.c.b16 %v683, %v682
  %700 = vmatprep.subr.bf16.mxu0 0
  %701 = vmatpush1.bf16.msra.mxu0 %v691
  %702 = vmatprep.subr.bf16.mxu0 0
  %703 = vmatpush1.bf16.msra.mxu0 %v690
  %704 = vmatprep.subr.bf16.mxu0 0
  %705 = vmatpush1.bf16.msra.mxu0 %v689
  %706 = vmatprep.subr.bf16.mxu0 0
  %707 = vmatpush1.bf16.msra.mxu0 %v688
  %708 = vmatprep.subr.bf16.mxu0 0
  %709 = vmatpush1.bf16.msra.mxu0 %v687
  %710 = vmatprep.subr.bf16.mxu0 0
  %711 = vmatpush1.bf16.msra.mxu0 %v686
  %712 = vmatprep.subr.bf16.mxu0 0
  %713 = vmatpush1.bf16.msra.mxu0 %v685
  %714 = vmatprep.subr.bf16.mxu0 0
  %715 = vmatpush1.bf16.msra.mxu0 %v684
  %716 = vmatprep.subr.bf16.mxu0 0
  %717 = vmatpush2.bf16.msra.mxu0 0
  %718 = vmatprep.subr.bf16.mxu0 0
  %719 = vmatpush2.bf16.msra.mxu0 0
  %720 = vmatprep.subr.bf16.mxu0 0
  %721 = vmatpush2.bf16.msra.mxu0 0
  %722 = vmatprep.subr.bf16.mxu0 0
  %723 = vmatpush2.bf16.msra.mxu0 0
  %724 = vmatprep.subr.bf16.mxu0 0
  %725 = vmatpush2.bf16.msra.mxu0 0
  %726 = vmatprep.subr.bf16.mxu0 0
  %727 = vmatpush2.bf16.msra.mxu0 0
  %728 = vmatprep.subr.bf16.mxu0 0
  %729 = vmatpush2.bf16.msra.mxu0 0
  %730 = vmatprep.subr.bf16.mxu0 0
  %731 = vmatpush2.bf16.msra.mxu0 0
  %732 = vmatprep.mubr.bf16.mxu0 0
  %733 = vmatmul.mubr.bf16.gmra.mxu0 %v478
  %v734 = vpop.f32.mrf.mxu0
  %v735 = vadd.f32 %v614, %v734
  %v736 = vpop.f32.mrf.mxu0
  %v737 = vpop.f32.mrf.mxu0
  %v738 = vadd.f32 %v617, %v737
  %v739 = vpop.f32.mrf.mxu0
  %740 = vmatprep.mubr.bf16.mxu0 0
  %741 = vmatmul.mubr.bf16.gmra.mxu0 %v479
  %v742 = vpop.f32.mrf.mxu0
  %v743 = vadd.f32 %v622, %v742
  %v744 = vpop.f32.mrf.mxu0
  %v745 = vpop.f32.mrf.mxu0
  %v746 = vadd.f32 %v625, %v745
  %v747 = vpop.f32.mrf.mxu0
  %748 = vmatprep.mubr.bf16.mxu0 0
  %749 = vmatmul.mubr.bf16.gmra.mxu0 %v480
  %v750 = vpop.f32.mrf.mxu0
  %v751 = vadd.f32 %v630, %v750
  %v752 = vpop.f32.mrf.mxu0
  %v753 = vpop.f32.mrf.mxu0
  %v754 = vadd.f32 %v633, %v753
  %v755 = vpop.f32.mrf.mxu0
  %756 = vmatprep.mubr.bf16.mxu0 0
  %757 = vmatmul.mubr.bf16.gmra.mxu0 %v481
  %v758 = vpop.f32.mrf.mxu0
  %v759 = vadd.f32 %v638, %v758
  %v760 = vpop.f32.mrf.mxu0
  %v761 = vpop.f32.mrf.mxu0
  %v762 = vadd.f32 %v641, %v761
  %v763 = vpop.f32.mrf.mxu0
  %764 = vmatprep.mubr.bf16.mxu0 0
  %765 = vmatmul.mubr.bf16.gmra.mxu0 %v482
  %v766 = vpop.f32.mrf.mxu0
  %v767 = vadd.f32 %v646, %v766
  %v768 = vpop.f32.mrf.mxu0
  %v769 = vpop.f32.mrf.mxu0
  %v770 = vadd.f32 %v649, %v769
  %v771 = vpop.f32.mrf.mxu0
  %772 = vdwg.mxu0
  %v773 = vld [vmem:[#allocation2 + $0x2] sm:$0xff]
  %v774 = vld [vmem:[#allocation2 + $0xa] sm:$0xff]
  %v775 = vld [vmem:[#allocation2 + $0x12] sm:$0xff]
  %v776 = vld [vmem:[#allocation2 + $0x1a] sm:$0xff]
  %v777 = vld [vmem:[#allocation2 + $0x22] sm:$0xff]
  %v778 = vld [vmem:[#allocation2 + $0x2a] sm:$0xff]
  %v779 = vld [vmem:[#allocation2 + $0x32] sm:$0xff]
  %v780 = vld [vmem:[#allocation2 + $0x3a] sm:$0xff]
  %v781 = vld [vmem:[#allocation2 + $0x42] sm:$0xff]
  %v782 = vld [vmem:[#allocation2 + $0x4a] sm:$0x3f]
  %v783 = vpack.c.bf16 %v774, %v773
  %v784 = vpack.c.bf16 %v776, %v775
  %v785 = vpack.c.bf16 %v778, %v777
  %v786 = vpack.c.bf16 %v780, %v779
  %v787 = vpack.c.bf16 %v782, %v781
  %s788 = scalar_lea.vmem %s3, 128
  %v789 = vld [vmem:[%s788] sm:$0xf]
  %v790 = vld [vmem:[%s788 + $0x4] sm:$0xf]
  %v791 = vld [vmem:[%s788 + $0x8] sm:$0xf]
  %v792 = vld [vmem:[%s788 + $0xc] sm:$0xf]
  %v793 = vld [vmem:[%s788 + $0x10] sm:$0xf]
  %v794 = vld [vmem:[%s788 + $0x14] sm:$0xf]
  %v795 = vld [vmem:[%s788 + $0x18] sm:$0xf]
  %v796 = vld [vmem:[%s788 + $0x1c] sm:$0xf]
  %v797 = vld [vmem:[%s788 + $0x20] sm:$0xf]
  %v798 = vld [vmem:[%s788 + $0x24] sm:$0xf]
  %v799 = vld [vmem:[%s788 + $0x28] sm:$0xf]
  %v800 = vld [vmem:[%s788 + $0x2c] sm:$0xf]
  %v801 = vld [vmem:[%s788 + $0x30] sm:$0xf]
  %v802 = vld [vmem:[%s788 + $0x34] sm:$0xf]
  %v803 = vld [vmem:[%s788 + $0x38] sm:$0xf]
  %v804 = vld [vmem:[%s788 + $0x3c] sm:$0xf]
  %v821 = vunpack.c.l.b16 %v789
  %v822 = vunpack.c.l.b16 %v790
  %v823 = vunpack.c.l.b16 %v791
  %v824 = vunpack.c.l.b16 %v792
  %v825 = vunpack.c.l.b16 %v793
  %v826 = vunpack.c.l.b16 %v794
  %v827 = vunpack.c.l.b16 %v795
  %v828 = vunpack.c.l.b16 %v796
  %v829 = vunpack.c.l.b16 %v797
  %v830 = vunpack.c.l.b16 %v798
  %v831 = vunpack.c.l.b16 %v799
  %v832 = vunpack.c.l.b16 %v800
  %v833 = vunpack.c.l.b16 %v801
  %v834 = vunpack.c.l.b16 %v802
  %v835 = vunpack.c.l.b16 %v803
  %v836 = vunpack.c.l.b16 %v804
  %v837 = vpack.c.b16 %v822, %v821
  %v838 = vpack.c.b16 %v824, %v823
  %v839 = vpack.c.b16 %v826, %v825
  %v840 = vpack.c.b16 %v828, %v827
  %v841 = vpack.c.b16 %v830, %v829
  %v842 = vpack.c.b16 %v832, %v831
  %v843 = vpack.c.b16 %v834, %v833
  %v844 = vpack.c.b16 %v836, %v835
  %853 = vmatprep.subr.bf16.mxu0 0
  %854 = vmatpush1.bf16.msra.mxu0 %v844
  %855 = vmatprep.subr.bf16.mxu0 0
  %856 = vmatpush1.bf16.msra.mxu0 %v843
  %857 = vmatprep.subr.bf16.mxu0 0
  %858 = vmatpush1.bf16.msra.mxu0 %v842
  %859 = vmatprep.subr.bf16.mxu0 0
  %860 = vmatpush1.bf16.msra.mxu0 %v841
  %861 = vmatprep.subr.bf16.mxu0 0
  %862 = vmatpush1.bf16.msra.mxu0 %v840
  %863 = vmatprep.subr.bf16.mxu0 0
  %864 = vmatpush1.bf16.msra.mxu0 %v839
  %865 = vmatprep.subr.bf16.mxu0 0
  %866 = vmatpush1.bf16.msra.mxu0 %v838
  %867 = vmatprep.subr.bf16.mxu0 0
  %868 = vmatpush1.bf16.msra.mxu0 %v837
  %869 = vmatprep.subr.bf16.mxu0 0
  %870 = vmatpush2.bf16.msra.mxu0 0
  %871 = vmatprep.subr.bf16.mxu0 0
  %872 = vmatpush2.bf16.msra.mxu0 0
  %873 = vmatprep.subr.bf16.mxu0 0
  %874 = vmatpush2.bf16.msra.mxu0 0
  %875 = vmatprep.subr.bf16.mxu0 0
  %876 = vmatpush2.bf16.msra.mxu0 0
  %877 = vmatprep.subr.bf16.mxu0 0
  %878 = vmatpush2.bf16.msra.mxu0 0
  %879 = vmatprep.subr.bf16.mxu0 0
  %880 = vmatpush2.bf16.msra.mxu0 0
  %881 = vmatprep.subr.bf16.mxu0 0
  %882 = vmatpush2.bf16.msra.mxu0 0
  %883 = vmatprep.subr.bf16.mxu0 0
  %884 = vmatpush2.bf16.msra.mxu0 0
  %885 = vmatprep.mubr.bf16.mxu0 0
  %886 = vmatmul.mubr.bf16.gmra.mxu0 %v783
  %v887 = vpop.f32.mrf.mxu0
  %v888 = vadd.f32 0.0, %v887
  %v889 = vpop.f32.mrf.mxu0
  %v890 = vpop.f32.mrf.mxu0
  %v891 = vadd.f32 0.0, %v890
  %v892 = vpop.f32.mrf.mxu0
  %893 = vmatprep.mubr.bf16.mxu0 0
  %894 = vmatmul.mubr.bf16.gmra.mxu0 %v784
  %v895 = vpop.f32.mrf.mxu0
  %v896 = vadd.f32 0.0, %v895
  %v897 = vpop.f32.mrf.mxu0
  %v898 = vpop.f32.mrf.mxu0
  %v899 = vadd.f32 0.0, %v898
  %v900 = vpop.f32.mrf.mxu0
  %901 = vmatprep.mubr.bf16.mxu0 0
  %902 = vmatmul.mubr.bf16.gmra.mxu0 %v785
  %v903 = vpop.f32.mrf.mxu0
  %v904 = vadd.f32 0.0, %v903
  %v905 = vpop.f32.mrf.mxu0
  %v906 = vpop.f32.mrf.mxu0
  %v907 = vadd.f32 0.0, %v906
  %v908 = vpop.f32.mrf.mxu0
  %909 = vmatprep.mubr.bf16.mxu0 0
  %910 = vmatmul.mubr.bf16.gmra.mxu0 %v786
  %v911 = vpop.f32.mrf.mxu0
  %v912 = vadd.f32 0.0, %v911
  %v913 = vpop.f32.mrf.mxu0
  %v914 = vpop.f32.mrf.mxu0
  %v915 = vadd.f32 0.0, %v914
  %v916 = vpop.f32.mrf.mxu0
  %917 = vmatprep.mubr.bf16.mxu0 0
  %918 = vmatmul.mubr.bf16.gmra.mxu0 %v787
  %v919 = vpop.f32.mrf.mxu0
  %v920 = vadd.f32 0.0, %v919
  %v921 = vpop.f32.mrf.mxu0
  %v922 = vpop.f32.mrf.mxu0
  %v923 = vadd.f32 0.0, %v922
  %v924 = vpop.f32.mrf.mxu0
  %925 = vdwg.mxu0
  %v926 = vadd.f32 %v735, %v888
  %v927 = vadd.f32 %v738, %v891
  %v928 = vadd.f32 %v743, %v896
  %v929 = vadd.f32 %v746, %v899
  %v930 = vadd.f32 %v751, %v904
  %v931 = vadd.f32 %v754, %v907
  %v932 = vadd.f32 %v759, %v912
  %v933 = vadd.f32 %v762, %v915
  %v934 = vadd.f32 %v767, %v920
  %v935 = vadd.f32 %v770, %v923
  %v936 = vld [vmem:[#allocation2 + $0xa] sm:$0xff]
  %v937 = vld [vmem:[#allocation2 + $0x12] sm:$0xff]
  %v938 = vld [vmem:[#allocation2 + $0x1a] sm:$0xff]
  %v939 = vld [vmem:[#allocation2 + $0x22] sm:$0xff]
  %v940 = vld [vmem:[#allocation2 + $0x2a] sm:$0xff]
  %v941 = vld [vmem:[#allocation2 + $0x32] sm:$0xff]
  %v942 = vld [vmem:[#allocation2 + $0x3a] sm:$0xff]
  %v943 = vld [vmem:[#allocation2 + $0x42] sm:$0xff]
  %v944 = vld [vmem:[#allocation2 + $0x4a] sm:$0xff]
  %v945 = vld [vmem:[#allocation2 + $0x52] sm:$0x3f]
  %v946 = vpack.c.bf16 %v937, %v936
  %v947 = vpack.c.bf16 %v939, %v938
  %v948 = vpack.c.bf16 %v941, %v940
  %v949 = vpack.c.bf16 %v943, %v942
  %v950 = vpack.c.bf16 %v945, %v944
  %s951 = scalar_lea.vmem %s3, 192
  %v952 = vld [vmem:[%s951] sm:$0xf]
  %v953 = vld [vmem:[%s951 + $0x4] sm:$0xf]
  %v954 = vld [vmem:[%s951 + $0x8] sm:$0xf]
  %v955 = vld [vmem:[%s951 + $0xc] sm:$0xf]
  %v956 = vld [vmem:[%s951 + $0x10] sm:$0xf]
  %v957 = vld [vmem:[%s951 + $0x14] sm:$0xf]
  %v958 = vld [vmem:[%s951 + $0x18] sm:$0xf]
  %v959 = vld [vmem:[%s951 + $0x1c] sm:$0xf]
  %v960 = vld [vmem:[%s951 + $0x20] sm:$0xf]
  %v961 = vld [vmem:[%s951 + $0x24] sm:$0xf]
  %v962 = vld [vmem:[%s951 + $0x28] sm:$0xf]
  %v963 = vld [vmem:[%s951 + $0x2c] sm:$0xf]
  %v964 = vld [vmem:[%s951 + $0x30] sm:$0xf]
  %v965 = vld [vmem:[%s951 + $0x34] sm:$0xf]
  %v966 = vld [vmem:[%s951 + $0x38] sm:$0xf]
  %v967 = vld [vmem:[%s951 + $0x3c] sm:$0xf]
  %v984 = vunpack.c.l.b16 %v952
  %v985 = vunpack.c.l.b16 %v953
  %v986 = vunpack.c.l.b16 %v954
  %v987 = vunpack.c.l.b16 %v955
  %v988 = vunpack.c.l.b16 %v956
  %v989 = vunpack.c.l.b16 %v957
  %v990 = vunpack.c.l.b16 %v958
  %v991 = vunpack.c.l.b16 %v959
  %v992 = vunpack.c.l.b16 %v960
  %v993 = vunpack.c.l.b16 %v961
  %v994 = vunpack.c.l.b16 %v962
  %v995 = vunpack.c.l.b16 %v963
  %v996 = vunpack.c.l.b16 %v964
  %v997 = vunpack.c.l.b16 %v965
  %v998 = vunpack.c.l.b16 %v966
  %v999 = vunpack.c.l.b16 %v967
  %v1000 = vpack.c.b16 %v985, %v984
  %v1001 = vpack.c.b16 %v987, %v986
  %v1002 = vpack.c.b16 %v989, %v988
  %v1003 = vpack.c.b16 %v991, %v990
  %v1004 = vpack.c.b16 %v993, %v992
  %v1005 = vpack.c.b16 %v995, %v994
  %v1006 = vpack.c.b16 %v997, %v996
  %v1007 = vpack.c.b16 %v999, %v998
  %1016 = vmatprep.subr.bf16.mxu0 0
  %1017 = vmatpush1.bf16.msra.mxu0 %v1007
  %1018 = vmatprep.subr.bf16.mxu0 0
  %1019 = vmatpush1.bf16.msra.mxu0 %v1006
  %1020 = vmatprep.subr.bf16.mxu0 0
  %1021 = vmatpush1.bf16.msra.mxu0 %v1005
  %1022 = vmatprep.subr.bf16.mxu0 0
  %1023 = vmatpush1.bf16.msra.mxu0 %v1004
  %1024 = vmatprep.subr.bf16.mxu0 0
  %1025 = vmatpush1.bf16.msra.mxu0 %v1003
  %1026 = vmatprep.subr.bf16.mxu0 0
  %1027 = vmatpush1.bf16.msra.mxu0 %v1002
  %1028 = vmatprep.subr.bf16.mxu0 0
  %1029 = vmatpush1.bf16.msra.mxu0 %v1001
  %1030 = vmatprep.subr.bf16.mxu0 0
  %1031 = vmatpush1.bf16.msra.mxu0 %v1000
  %1032 = vmatprep.subr.bf16.mxu0 0
  %1033 = vmatpush2.bf16.msra.mxu0 0
  %1034 = vmatprep.subr.bf16.mxu0 0
  %1035 = vmatpush2.bf16.msra.mxu0 0
  %1036 = vmatprep.subr.bf16.mxu0 0
  %1037 = vmatpush2.bf16.msra.mxu0 0
  %1038 = vmatprep.subr.bf16.mxu0 0
  %1039 = vmatpush2.bf16.msra.mxu0 0
  %1040 = vmatprep.subr.bf16.mxu0 0
  %1041 = vmatpush2.bf16.msra.mxu0 0
  %1042 = vmatprep.subr.bf16.mxu0 0
  %1043 = vmatpush2.bf16.msra.mxu0 0
  %1044 = vmatprep.subr.bf16.mxu0 0
  %1045 = vmatpush2.bf16.msra.mxu0 0
  %1046 = vmatprep.subr.bf16.mxu0 0
  %1047 = vmatpush2.bf16.msra.mxu0 0
  %1048 = vmatprep.mubr.bf16.mxu0 0
  %1049 = vmatmul.mubr.bf16.gmra.mxu0 %v946
  %v1050 = vpop.f32.mrf.mxu0
  %v1051 = vadd.f32 0.0, %v1050
  %v1052 = vpop.f32.mrf.mxu0
  %v1053 = vpop.f32.mrf.mxu0
  %v1054 = vadd.f32 0.0, %v1053
  %v1055 = vpop.f32.mrf.mxu0
  %1056 = vmatprep.mubr.bf16.mxu0 0
  %1057 = vmatmul.mubr.bf16.gmra.mxu0 %v947
  %v1058 = vpop.f32.mrf.mxu0
  %v1059 = vadd.f32 0.0, %v1058
  %v1060 = vpop.f32.mrf.mxu0
  %v1061 = vpop.f32.mrf.mxu0
  %v1062 = vadd.f32 0.0, %v1061
  %v1063 = vpop.f32.mrf.mxu0
  %1064 = vmatprep.mubr.bf16.mxu0 0
  %1065 = vmatmul.mubr.bf16.gmra.mxu0 %v948
  %v1066 = vpop.f32.mrf.mxu0
  %v1067 = vadd.f32 0.0, %v1066
  %v1068 = vpop.f32.mrf.mxu0
  %v1069 = vpop.f32.mrf.mxu0
  %v1070 = vadd.f32 0.0, %v1069
  %v1071 = vpop.f32.mrf.mxu0
  %1072 = vmatprep.mubr.bf16.mxu0 0
  %1073 = vmatmul.mubr.bf16.gmra.mxu0 %v949
  %v1074 = vpop.f32.mrf.mxu0
  %v1075 = vadd.f32 0.0, %v1074
  %v1076 = vpop.f32.mrf.mxu0
  %v1077 = vpop.f32.mrf.mxu0
  %v1078 = vadd.f32 0.0, %v1077
  %v1079 = vpop.f32.mrf.mxu0
  %1080 = vmatprep.mubr.bf16.mxu0 0
  %1081 = vmatmul.mubr.bf16.gmra.mxu0 %v950
  %v1082 = vpop.f32.mrf.mxu0
  %v1083 = vadd.f32 0.0, %v1082
  %v1084 = vpop.f32.mrf.mxu0
  %v1085 = vpop.f32.mrf.mxu0
  %v1086 = vadd.f32 0.0, %v1085
  %v1087 = vpop.f32.mrf.mxu0
  %1088 = vdwg.mxu0
  %v1089 = vadd.f32 %v926, %v1051
  %v1090 = vadd.f32 %v927, %v1054
  %v1091 = vadd.f32 %v928, %v1059
  %v1092 = vadd.f32 %v929, %v1062
  %v1093 = vadd.f32 %v930, %v1067
  %v1094 = vadd.f32 %v931, %v1070
  %v1095 = vadd.f32 %v932, %v1075
  %v1096 = vadd.f32 %v933, %v1078
  %v1097 = vadd.f32 %v934, %v1083
  %v1098 = vadd.f32 %v935, %v1086
  %v1099 = vld [vmem:[#allocation2 + $0xb] sm:$0xff]
  %v1100 = vld [vmem:[#allocation2 + $0x13] sm:$0xff]
  %v1101 = vld [vmem:[#allocation2 + $0x1b] sm:$0xff]
  %v1102 = vld [vmem:[#allocation2 + $0x23] sm:$0xff]
  %v1103 = vld [vmem:[#allocation2 + $0x2b] sm:$0xff]
  %v1104 = vld [vmem:[#allocation2 + $0x33] sm:$0xff]
  %v1105 = vld [vmem:[#allocation2 + $0x3b] sm:$0xff]
  %v1106 = vld [vmem:[#allocation2 + $0x43] sm:$0xff]
  %v1107 = vld [vmem:[#allocation2 + $0x4b] sm:$0xff]
  %v1108 = vld [vmem:[#allocation2 + $0x53] sm:$0x3f]
  %v1109 = vpack.c.bf16 %v1100, %v1099
  %v1110 = vpack.c.bf16 %v1102, %v1101
  %v1111 = vpack.c.bf16 %v1104, %v1103
  %v1112 = vpack.c.bf16 %v1106, %v1105
  %v1113 = vpack.c.bf16 %v1108, %v1107
  %s1114 = scalar_lea.vmem %s3, 256
  %v1115 = vld [vmem:[%s1114] sm:$0xf]
  %v1116 = vld [vmem:[%s1114 + $0x4] sm:$0xf]
  %v1117 = vld [vmem:[%s1114 + $0x8] sm:$0xf]
  %v1118 = vld [vmem:[%s1114 + $0xc] sm:$0xf]
  %v1119 = vld [vmem:[%s1114 + $0x10] sm:$0xf]
  %v1120 = vld [vmem:[%s1114 + $0x14] sm:$0xf]
  %v1121 = vld [vmem:[%s1114 + $0x18] sm:$0xf]
  %v1122 = vld [vmem:[%s1114 + $0x1c] sm:$0xf]
  %v1123 = vld [vmem:[%s1114 + $0x20] sm:$0xf]
  %v1124 = vld [vmem:[%s1114 + $0x24] sm:$0xf]
  %v1125 = vld [vmem:[%s1114 + $0x28] sm:$0xf]
  %v1126 = vld [vmem:[%s1114 + $0x2c] sm:$0xf]
  %v1127 = vld [vmem:[%s1114 + $0x30] sm:$0xf]
  %v1128 = vld [vmem:[%s1114 + $0x34] sm:$0xf]
  %v1129 = vld [vmem:[%s1114 + $0x38] sm:$0xf]
  %v1130 = vld [vmem:[%s1114 + $0x3c] sm:$0xf]
  %v1147 = vunpack.c.l.b16 %v1115
  %v1148 = vunpack.c.l.b16 %v1116
  %v1149 = vunpack.c.l.b16 %v1117
  %v1150 = vunpack.c.l.b16 %v1118
  %v1151 = vunpack.c.l.b16 %v1119
  %v1152 = vunpack.c.l.b16 %v1120
  %v1153 = vunpack.c.l.b16 %v1121
  %v1154 = vunpack.c.l.b16 %v1122
  %v1155 = vunpack.c.l.b16 %v1123
  %v1156 = vunpack.c.l.b16 %v1124
  %v1157 = vunpack.c.l.b16 %v1125
  %v1158 = vunpack.c.l.b16 %v1126
  %v1159 = vunpack.c.l.b16 %v1127
  %v1160 = vunpack.c.l.b16 %v1128
  %v1161 = vunpack.c.l.b16 %v1129
  %v1162 = vunpack.c.l.b16 %v1130
  %v1163 = vpack.c.b16 %v1148, %v1147
  %v1164 = vpack.c.b16 %v1150, %v1149
  %v1165 = vpack.c.b16 %v1152, %v1151
  %v1166 = vpack.c.b16 %v1154, %v1153
  %v1167 = vpack.c.b16 %v1156, %v1155
  %v1168 = vpack.c.b16 %v1158, %v1157
  %v1169 = vpack.c.b16 %v1160, %v1159
  %v1170 = vpack.c.b16 %v1162, %v1161
  %1179 = vmatprep.subr.bf16.mxu0 0
  %1180 = vmatpush1.bf16.msra.mxu0 %v1170
  %1181 = vmatprep.subr.bf16.mxu0 0
  %1182 = vmatpush1.bf16.msra.mxu0 %v1169
  %1183 = vmatprep.subr.bf16.mxu0 0
  %1184 = vmatpush1.bf16.msra.mxu0 %v1168
  %1185 = vmatprep.subr.bf16.mxu0 0
  %1186 = vmatpush1.bf16.msra.mxu0 %v1167
  %1187 = vmatprep.subr.bf16.mxu0 0
  %1188 = vmatpush1.bf16.msra.mxu0 %v1166
  %1189 = vmatprep.subr.bf16.mxu0 0
  %1190 = vmatpush1.bf16.msra.mxu0 %v1165
  %1191 = vmatprep.subr.bf16.mxu0 0
  %1192 = vmatpush1.bf16.msra.mxu0 %v1164
  %1193 = vmatprep.subr.bf16.mxu0 0
  %1194 = vmatpush1.bf16.msra.mxu0 %v1163
  %1195 = vmatprep.subr.bf16.mxu0 0
  %1196 = vmatpush2.bf16.msra.mxu0 0
  %1197 = vmatprep.subr.bf16.mxu0 0
  %1198 = vmatpush2.bf16.msra.mxu0 0
  %1199 = vmatprep.subr.bf16.mxu0 0
  %1200 = vmatpush2.bf16.msra.mxu0 0
  %1201 = vmatprep.subr.bf16.mxu0 0
  %1202 = vmatpush2.bf16.msra.mxu0 0
  %1203 = vmatprep.subr.bf16.mxu0 0
  %1204 = vmatpush2.bf16.msra.mxu0 0
  %1205 = vmatprep.subr.bf16.mxu0 0
  %1206 = vmatpush2.bf16.msra.mxu0 0
  %1207 = vmatprep.subr.bf16.mxu0 0
  %1208 = vmatpush2.bf16.msra.mxu0 0
  %1209 = vmatprep.subr.bf16.mxu0 0
  %1210 = vmatpush2.bf16.msra.mxu0 0
  %1211 = vmatprep.mubr.bf16.mxu0 0
  %1212 = vmatmul.mubr.bf16.gmra.mxu0 %v1109
  %v1213 = vpop.f32.mrf.mxu0
  %v1214 = vadd.f32 0.0, %v1213
  %v1215 = vpop.f32.mrf.mxu0
  %v1216 = vpop.f32.mrf.mxu0
  %v1217 = vadd.f32 0.0, %v1216
  %v1218 = vpop.f32.mrf.mxu0
  %1219 = vmatprep.mubr.bf16.mxu0 0
  %1220 = vmatmul.mubr.bf16.gmra.mxu0 %v1110
  %v1221 = vpop.f32.mrf.mxu0
  %v1222 = vadd.f32 0.0, %v1221
  %v1223 = vpop.f32.mrf.mxu0
  %v1224 = vpop.f32.mrf.mxu0
  %v1225 = vadd.f32 0.0, %v1224
  %v1226 = vpop.f32.mrf.mxu0
  %1227 = vmatprep.mubr.bf16.mxu0 0
  %1228 = vmatmul.mubr.bf16.gmra.mxu0 %v1111
  %v1229 = vpop.f32.mrf.mxu0
  %v1230 = vadd.f32 0.0, %v1229
  %v1231 = vpop.f32.mrf.mxu0
  %v1232 = vpop.f32.mrf.mxu0
  %v1233 = vadd.f32 0.0, %v1232
  %v1234 = vpop.f32.mrf.mxu0
  %1235 = vmatprep.mubr.bf16.mxu0 0
  %1236 = vmatmul.mubr.bf16.gmra.mxu0 %v1112
  %v1237 = vpop.f32.mrf.mxu0
  %v1238 = vadd.f32 0.0, %v1237
  %v1239 = vpop.f32.mrf.mxu0
  %v1240 = vpop.f32.mrf.mxu0
  %v1241 = vadd.f32 0.0, %v1240
  %v1242 = vpop.f32.mrf.mxu0
  %1243 = vmatprep.mubr.bf16.mxu0 0
  %1244 = vmatmul.mubr.bf16.gmra.mxu0 %v1113
  %v1245 = vpop.f32.mrf.mxu0
  %v1246 = vadd.f32 0.0, %v1245
  %v1247 = vpop.f32.mrf.mxu0
  %v1248 = vpop.f32.mrf.mxu0
  %v1249 = vadd.f32 0.0, %v1248
  %v1250 = vpop.f32.mrf.mxu0
  %1251 = vdwg.mxu0
  %v1252 = vadd.f32 %v1089, %v1214
  %v1253 = vadd.f32 %v1090, %v1217
  %v1254 = vadd.f32 %v1091, %v1222
  %v1255 = vadd.f32 %v1092, %v1225
  %v1256 = vadd.f32 %v1093, %v1230
  %v1257 = vadd.f32 %v1094, %v1233
  %v1258 = vadd.f32 %v1095, %v1238
  %v1259 = vadd.f32 %v1096, %v1241
  %v1260 = vadd.f32 %v1097, %v1246
  %v1261 = vadd.f32 %v1098, %v1249
  %v1262 = vld [vmem:[#allocation2 + $0xc] sm:$0xff]
  %v1263 = vld [vmem:[#allocation2 + $0x14] sm:$0xff]
  %v1264 = vld [vmem:[#allocation2 + $0x1c] sm:$0xff]
  %v1265 = vld [vmem:[#allocation2 + $0x24] sm:$0xff]
  %v1266 = vld [vmem:[#allocation2 + $0x2c] sm:$0xff]
  %v1267 = vld [vmem:[#allocation2 + $0x34] sm:$0xff]
  %v1268 = vld [vmem:[#allocation2 + $0x3c] sm:$0xff]
  %v1269 = vld [vmem:[#allocation2 + $0x44] sm:$0xff]
  %v1270 = vld [vmem:[#allocation2 + $0x4c] sm:$0xff]
  %v1271 = vld [vmem:[#allocation2 + $0x54] sm:$0x3f]
  %v1272 = vpack.c.bf16 %v1263, %v1262
  %v1273 = vpack.c.bf16 %v1265, %v1264
  %v1274 = vpack.c.bf16 %v1267, %v1266
  %v1275 = vpack.c.bf16 %v1269, %v1268
  %v1276 = vpack.c.bf16 %v1271, %v1270
  %s1277 = scalar_lea.vmem %s3, 320
  %v1278 = vld [vmem:[%s1277] sm:$0xf]
  %v1279 = vld [vmem:[%s1277 + $0x4] sm:$0xf]
  %v1280 = vld [vmem:[%s1277 + $0x8] sm:$0xf]
  %v1281 = vld [vmem:[%s1277 + $0xc] sm:$0xf]
  %v1282 = vld [vmem:[%s1277 + $0x10] sm:$0xf]
  %v1283 = vld [vmem:[%s1277 + $0x14] sm:$0xf]
  %v1284 = vld [vmem:[%s1277 + $0x18] sm:$0xf]
  %v1285 = vld [vmem:[%s1277 + $0x1c] sm:$0xf]
  %v1286 = vld [vmem:[%s1277 + $0x20] sm:$0xf]
  %v1287 = vld [vmem:[%s1277 + $0x24] sm:$0xf]
  %v1288 = vld [vmem:[%s1277 + $0x28] sm:$0xf]
  %v1289 = vld [vmem:[%s1277 + $0x2c] sm:$0xf]
  %v1290 = vld [vmem:[%s1277 + $0x30] sm:$0xf]
  %v1291 = vld [vmem:[%s1277 + $0x34] sm:$0xf]
  %v1292 = vld [vmem:[%s1277 + $0x38] sm:$0xf]
  %v1293 = vld [vmem:[%s1277 + $0x3c] sm:$0xf]
  %v1310 = vunpack.c.l.b16 %v1278
  %v1311 = vunpack.c.l.b16 %v1279
  %v1312 = vunpack.c.l.b16 %v1280
  %v1313 = vunpack.c.l.b16 %v1281
  %v1314 = vunpack.c.l.b16 %v1282
  %v1315 = vunpack.c.l.b16 %v1283
  %v1316 = vunpack.c.l.b16 %v1284
  %v1317 = vunpack.c.l.b16 %v1285
  %v1318 = vunpack.c.l.b16 %v1286
  %v1319 = vunpack.c.l.b16 %v1287
  %v1320 = vunpack.c.l.b16 %v1288
  %v1321 = vunpack.c.l.b16 %v1289
  %v1322 = vunpack.c.l.b16 %v1290
  %v1323 = vunpack.c.l.b16 %v1291
  %v1324 = vunpack.c.l.b16 %v1292
  %v1325 = vunpack.c.l.b16 %v1293
  %v1326 = vpack.c.b16 %v1311, %v1310
  %v1327 = vpack.c.b16 %v1313, %v1312
  %v1328 = vpack.c.b16 %v1315, %v1314
  %v1329 = vpack.c.b16 %v1317, %v1316
  %v1330 = vpack.c.b16 %v1319, %v1318
  %v1331 = vpack.c.b16 %v1321, %v1320
  %v1332 = vpack.c.b16 %v1323, %v1322
  %v1333 = vpack.c.b16 %v1325, %v1324
  %1342 = vmatprep.subr.bf16.mxu0 0
  %1343 = vmatpush1.bf16.msra.mxu0 %v1333
  %1344 = vmatprep.subr.bf16.mxu0 0
  %1345 = vmatpush1.bf16.msra.mxu0 %v1332
  %1346 = vmatprep.subr.bf16.mxu0 0
  %1347 = vmatpush1.bf16.msra.mxu0 %v1331
  %1348 = vmatprep.subr.bf16.mxu0 0
  %1349 = vmatpush1.bf16.msra.mxu0 %v1330
  %1350 = vmatprep.subr.bf16.mxu0 0
  %1351 = vmatpush1.bf16.msra.mxu0 %v1329
  %1352 = vmatprep.subr.bf16.mxu0 0
  %1353 = vmatpush1.bf16.msra.mxu0 %v1328
  %1354 = vmatprep.subr.bf16.mxu0 0
  %1355 = vmatpush1.bf16.msra.mxu0 %v1327
  %1356 = vmatprep.subr.bf16.mxu0 0
  %1357 = vmatpush1.bf16.msra.mxu0 %v1326
  %1358 = vmatprep.subr.bf16.mxu0 0
  %1359 = vmatpush2.bf16.msra.mxu0 0
  %1360 = vmatprep.subr.bf16.mxu0 0
  %1361 = vmatpush2.bf16.msra.mxu0 0
  %1362 = vmatprep.subr.bf16.mxu0 0
  %1363 = vmatpush2.bf16.msra.mxu0 0
  %1364 = vmatprep.subr.bf16.mxu0 0
  %1365 = vmatpush2.bf16.msra.mxu0 0
  %1366 = vmatprep.subr.bf16.mxu0 0
  %1367 = vmatpush2.bf16.msra.mxu0 0
  %1368 = vmatprep.subr.bf16.mxu0 0
  %1369 = vmatpush2.bf16.msra.mxu0 0
  %1370 = vmatprep.subr.bf16.mxu0 0
  %1371 = vmatpush2.bf16.msra.mxu0 0
  %1372 = vmatprep.subr.bf16.mxu0 0
  %1373 = vmatpush2.bf16.msra.mxu0 0
  %1374 = vmatprep.mubr.bf16.mxu0 0
  %1375 = vmatmul.mubr.bf16.gmra.mxu0 %v1272
  %v1376 = vpop.f32.mrf.mxu0
  %v1377 = vadd.f32 0.0, %v1376
  %v1378 = vpop.f32.mrf.mxu0
  %v1379 = vpop.f32.mrf.mxu0
  %v1380 = vadd.f32 0.0, %v1379
  %v1381 = vpop.f32.mrf.mxu0
  %1382 = vmatprep.mubr.bf16.mxu0 0
  %1383 = vmatmul.mubr.bf16.gmra.mxu0 %v1273
  %v1384 = vpop.f32.mrf.mxu0
  %v1385 = vadd.f32 0.0, %v1384
  %v1386 = vpop.f32.mrf.mxu0
  %v1387 = vpop.f32.mrf.mxu0
  %v1388 = vadd.f32 0.0, %v1387
  %v1389 = vpop.f32.mrf.mxu0
  %1390 = vmatprep.mubr.bf16.mxu0 0
  %1391 = vmatmul.mubr.bf16.gmra.mxu0 %v1274
  %v1392 = vpop.f32.mrf.mxu0
  %v1393 = vadd.f32 0.0, %v1392
  %v1394 = vpop.f32.mrf.mxu0
  %v1395 = vpop.f32.mrf.mxu0
  %v1396 = vadd.f32 0.0, %v1395
  %v1397 = vpop.f32.mrf.mxu0
  %1398 = vmatprep.mubr.bf16.mxu0 0
  %1399 = vmatmul.mubr.bf16.gmra.mxu0 %v1275
  %v1400 = vpop.f32.mrf.mxu0
  %v1401 = vadd.f32 0.0, %v1400
  %v1402 = vpop.f32.mrf.mxu0
  %v1403 = vpop.f32.mrf.mxu0
  %v1404 = vadd.f32 0.0, %v1403
  %v1405 = vpop.f32.mrf.mxu0
  %1406 = vmatprep.mubr.bf16.mxu0 0
  %1407 = vmatmul.mubr.bf16.gmra.mxu0 %v1276
  %v1408 = vpop.f32.mrf.mxu0
  %v1409 = vadd.f32 0.0, %v1408
  %v1410 = vpop.f32.mrf.mxu0
  %v1411 = vpop.f32.mrf.mxu0
  %v1412 = vadd.f32 0.0, %v1411
  %v1413 = vpop.f32.mrf.mxu0
  %1414 = vdwg.mxu0
  %v1415 = vadd.f32 %v1252, %v1377
  %v1416 = vadd.f32 %v1253, %v1380
  %v1417 = vadd.f32 %v1254, %v1385
  %v1418 = vadd.f32 %v1255, %v1388
  %v1419 = vadd.f32 %v1256, %v1393
  %v1420 = vadd.f32 %v1257, %v1396
  %v1421 = vadd.f32 %v1258, %v1401
  %v1422 = vadd.f32 %v1259, %v1404
  %v1423 = vadd.f32 %v1260, %v1409
  %v1424 = vadd.f32 %v1261, %v1412
  %v1425 = vld [vmem:[#allocation2 + $0x14] sm:$0xff]
  %v1426 = vld [vmem:[#allocation2 + $0x1c] sm:$0xff]
  %v1427 = vld [vmem:[#allocation2 + $0x24] sm:$0xff]
  %v1428 = vld [vmem:[#allocation2 + $0x2c] sm:$0xff]
  %v1429 = vld [vmem:[#allocation2 + $0x34] sm:$0xff]
  %v1430 = vld [vmem:[#allocation2 + $0x3c] sm:$0xff]
  %v1431 = vld [vmem:[#allocation2 + $0x44] sm:$0xff]
  %v1432 = vld [vmem:[#allocation2 + $0x4c] sm:$0xff]
  %v1433 = vld [vmem:[#allocation2 + $0x54] sm:$0xff]
  %v1434 = vld [vmem:[#allocation2 + $0x5c] sm:$0x3f]
  %v1435 = vpack.c.bf16 %v1426, %v1425
  %v1436 = vpack.c.bf16 %v1428, %v1427
  %v1437 = vpack.c.bf16 %v1430, %v1429
  %v1438 = vpack.c.bf16 %v1432, %v1431
  %v1439 = vpack.c.bf16 %v1434, %v1433
  %s1440 = scalar_lea.vmem %s3, 384
  %v1441 = vld [vmem:[%s1440] sm:$0xf]
  %v1442 = vld [vmem:[%s1440 + $0x4] sm:$0xf]
  %v1443 = vld [vmem:[%s1440 + $0x8] sm:$0xf]
  %v1444 = vld [vmem:[%s1440 + $0xc] sm:$0xf]
  %v1445 = vld [vmem:[%s1440 + $0x10] sm:$0xf]
  %v1446 = vld [vmem:[%s1440 + $0x14] sm:$0xf]
  %v1447 = vld [vmem:[%s1440 + $0x18] sm:$0xf]
  %v1448 = vld [vmem:[%s1440 + $0x1c] sm:$0xf]
  %v1449 = vld [vmem:[%s1440 + $0x20] sm:$0xf]
  %v1450 = vld [vmem:[%s1440 + $0x24] sm:$0xf]
  %v1451 = vld [vmem:[%s1440 + $0x28] sm:$0xf]
  %v1452 = vld [vmem:[%s1440 + $0x2c] sm:$0xf]
  %v1453 = vld [vmem:[%s1440 + $0x30] sm:$0xf]
  %v1454 = vld [vmem:[%s1440 + $0x34] sm:$0xf]
  %v1455 = vld [vmem:[%s1440 + $0x38] sm:$0xf]
  %v1456 = vld [vmem:[%s1440 + $0x3c] sm:$0xf]
  %v1473 = vunpack.c.l.b16 %v1441
  %v1474 = vunpack.c.l.b16 %v1442
  %v1475 = vunpack.c.l.b16 %v1443
  %v1476 = vunpack.c.l.b16 %v1444
  %v1477 = vunpack.c.l.b16 %v1445
  %v1478 = vunpack.c.l.b16 %v1446
  %v1479 = vunpack.c.l.b16 %v1447
  %v1480 = vunpack.c.l.b16 %v1448
  %v1481 = vunpack.c.l.b16 %v1449
  %v1482 = vunpack.c.l.b16 %v1450
  %v1483 = vunpack.c.l.b16 %v1451
  %v1484 = vunpack.c.l.b16 %v1452
  %v1485 = vunpack.c.l.b16 %v1453
  %v1486 = vunpack.c.l.b16 %v1454
  %v1487 = vunpack.c.l.b16 %v1455
  %v1488 = vunpack.c.l.b16 %v1456
  %v1489 = vpack.c.b16 %v1474, %v1473
  %v1490 = vpack.c.b16 %v1476, %v1475
  %v1491 = vpack.c.b16 %v1478, %v1477
  %v1492 = vpack.c.b16 %v1480, %v1479
  %v1493 = vpack.c.b16 %v1482, %v1481
  %v1494 = vpack.c.b16 %v1484, %v1483
  %v1495 = vpack.c.b16 %v1486, %v1485
  %v1496 = vpack.c.b16 %v1488, %v1487
  %1505 = vmatprep.subr.bf16.mxu0 0
  %1506 = vmatpush1.bf16.msra.mxu0 %v1496
  %1507 = vmatprep.subr.bf16.mxu0 0
  %1508 = vmatpush1.bf16.msra.mxu0 %v1495
  %1509 = vmatprep.subr.bf16.mxu0 0
  %1510 = vmatpush1.bf16.msra.mxu0 %v1494
  %1511 = vmatprep.subr.bf16.mxu0 0
  %1512 = vmatpush1.bf16.msra.mxu0 %v1493
  %1513 = vmatprep.subr.bf16.mxu0 0
  %1514 = vmatpush1.bf16.msra.mxu0 %v1492
  %1515 = vmatprep.subr.bf16.mxu0 0
  %1516 = vmatpush1.bf16.msra.mxu0 %v1491
  %1517 = vmatprep.subr.bf16.mxu0 0
  %1518 = vmatpush1.bf16.msra.mxu0 %v1490
  %1519 = vmatprep.subr.bf16.mxu0 0
  %1520 = vmatpush1.bf16.msra.mxu0 %v1489
  %1521 = vmatprep.subr.bf16.mxu0 0
  %1522 = vmatpush2.bf16.msra.mxu0 0
  %1523 = vmatprep.subr.bf16.mxu0 0
  %1524 = vmatpush2.bf16.msra.mxu0 0
  %1525 = vmatprep.subr.bf16.mxu0 0
  %1526 = vmatpush2.bf16.msra.mxu0 0
  %1527 = vmatprep.subr.bf16.mxu0 0
  %1528 = vmatpush2.bf16.msra.mxu0 0
  %1529 = vmatprep.subr.bf16.mxu0 0
  %1530 = vmatpush2.bf16.msra.mxu0 0
  %1531 = vmatprep.subr.bf16.mxu0 0
  %1532 = vmatpush2.bf16.msra.mxu0 0
  %1533 = vmatprep.subr.bf16.mxu0 0
  %1534 = vmatpush2.bf16.msra.mxu0 0
  %1535 = vmatprep.subr.bf16.mxu0 0
  %1536 = vmatpush2.bf16.msra.mxu0 0
  %1537 = vmatprep.mubr.bf16.mxu0 0
  %1538 = vmatmul.mubr.bf16.gmra.mxu0 %v1435
  %v1539 = vpop.f32.mrf.mxu0
  %v1540 = vadd.f32 0.0, %v1539
  %v1541 = vpop.f32.mrf.mxu0
  %v1542 = vpop.f32.mrf.mxu0
  %v1543 = vadd.f32 0.0, %v1542
  %v1544 = vpop.f32.mrf.mxu0
  %1545 = vmatprep.mubr.bf16.mxu0 0
  %1546 = vmatmul.mubr.bf16.gmra.mxu0 %v1436
  %v1547 = vpop.f32.mrf.mxu0
  %v1548 = vadd.f32 0.0, %v1547
  %v1549 = vpop.f32.mrf.mxu0
  %v1550 = vpop.f32.mrf.mxu0
  %v1551 = vadd.f32 0.0, %v1550
  %v1552 = vpop.f32.mrf.mxu0
  %1553 = vmatprep.mubr.bf16.mxu0 0
  %1554 = vmatmul.mubr.bf16.gmra.mxu0 %v1437
  %v1555 = vpop.f32.mrf.mxu0
  %v1556 = vadd.f32 0.0, %v1555
  %v1557 = vpop.f32.mrf.mxu0
  %v1558 = vpop.f32.mrf.mxu0
  %v1559 = vadd.f32 0.0, %v1558
  %v1560 = vpop.f32.mrf.mxu0
  %1561 = vmatprep.mubr.bf16.mxu0 0
  %1562 = vmatmul.mubr.bf16.gmra.mxu0 %v1438
  %v1563 = vpop.f32.mrf.mxu0
  %v1564 = vadd.f32 0.0, %v1563
  %v1565 = vpop.f32.mrf.mxu0
  %v1566 = vpop.f32.mrf.mxu0
  %v1567 = vadd.f32 0.0, %v1566
  %v1568 = vpop.f32.mrf.mxu0
  %1569 = vmatprep.mubr.bf16.mxu0 0
  %1570 = vmatmul.mubr.bf16.gmra.mxu0 %v1439
  %v1571 = vpop.f32.mrf.mxu0
  %v1572 = vadd.f32 0.0, %v1571
  %v1573 = vpop.f32.mrf.mxu0
  %v1574 = vpop.f32.mrf.mxu0
  %v1575 = vadd.f32 0.0, %v1574
  %v1576 = vpop.f32.mrf.mxu0
  %1577 = vdwg.mxu0
  %v1578 = vadd.f32 %v1415, %v1540
  %v1579 = vadd.f32 %v1416, %v1543
  %v1580 = vadd.f32 %v1417, %v1548
  %v1581 = vadd.f32 %v1418, %v1551
  %v1582 = vadd.f32 %v1419, %v1556
  %v1583 = vadd.f32 %v1420, %v1559
  %v1584 = vadd.f32 %v1421, %v1564
  %v1585 = vadd.f32 %v1422, %v1567
  %v1586 = vadd.f32 %v1423, %v1572
  %v1587 = vadd.f32 %v1424, %v1575
  %v1588 = vld [vmem:[#allocation2 + $0x15] sm:$0xff]
  %v1589 = vld [vmem:[#allocation2 + $0x1d] sm:$0xff]
  %v1590 = vld [vmem:[#allocation2 + $0x25] sm:$0xff]
  %v1591 = vld [vmem:[#allocation2 + $0x2d] sm:$0xff]
  %v1592 = vld [vmem:[#allocation2 + $0x35] sm:$0xff]
  %v1593 = vld [vmem:[#allocation2 + $0x3d] sm:$0xff]
  %v1594 = vld [vmem:[#allocation2 + $0x45] sm:$0xff]
  %v1595 = vld [vmem:[#allocation2 + $0x4d] sm:$0xff]
  %v1596 = vld [vmem:[#allocation2 + $0x55] sm:$0xff]
  %v1597 = vld [vmem:[#allocation2 + $0x5d] sm:$0x3f]
  %v1598 = vpack.c.bf16 %v1589, %v1588
  %v1599 = vpack.c.bf16 %v1591, %v1590
  %v1600 = vpack.c.bf16 %v1593, %v1592
  %v1601 = vpack.c.bf16 %v1595, %v1594
  %v1602 = vpack.c.bf16 %v1597, %v1596
  %s1603 = scalar_lea.vmem %s3, 448
  %v1604 = vld [vmem:[%s1603] sm:$0xf]
  %v1605 = vld [vmem:[%s1603 + $0x4] sm:$0xf]
  %v1606 = vld [vmem:[%s1603 + $0x8] sm:$0xf]
  %v1607 = vld [vmem:[%s1603 + $0xc] sm:$0xf]
  %v1608 = vld [vmem:[%s1603 + $0x10] sm:$0xf]
  %v1609 = vld [vmem:[%s1603 + $0x14] sm:$0xf]
  %v1610 = vld [vmem:[%s1603 + $0x18] sm:$0xf]
  %v1611 = vld [vmem:[%s1603 + $0x1c] sm:$0xf]
  %v1612 = vld [vmem:[%s1603 + $0x20] sm:$0xf]
  %v1613 = vld [vmem:[%s1603 + $0x24] sm:$0xf]
  %v1614 = vld [vmem:[%s1603 + $0x28] sm:$0xf]
  %v1615 = vld [vmem:[%s1603 + $0x2c] sm:$0xf]
  %v1616 = vld [vmem:[%s1603 + $0x30] sm:$0xf]
  %v1617 = vld [vmem:[%s1603 + $0x34] sm:$0xf]
  %v1618 = vld [vmem:[%s1603 + $0x38] sm:$0xf]
  %v1619 = vld [vmem:[%s1603 + $0x3c] sm:$0xf]
  %v1636 = vunpack.c.l.b16 %v1604
  %v1637 = vunpack.c.l.b16 %v1605
  %v1638 = vunpack.c.l.b16 %v1606
  %v1639 = vunpack.c.l.b16 %v1607
  %v1640 = vunpack.c.l.b16 %v1608
  %v1641 = vunpack.c.l.b16 %v1609
  %v1642 = vunpack.c.l.b16 %v1610
  %v1643 = vunpack.c.l.b16 %v1611
  %v1644 = vunpack.c.l.b16 %v1612
  %v1645 = vunpack.c.l.b16 %v1613
  %v1646 = vunpack.c.l.b16 %v1614
  %v1647 = vunpack.c.l.b16 %v1615
  %v1648 = vunpack.c.l.b16 %v1616
  %v1649 = vunpack.c.l.b16 %v1617
  %v1650 = vunpack.c.l.b16 %v1618
  %v1651 = vunpack.c.l.b16 %v1619
  %v1652 = vpack.c.b16 %v1637, %v1636
  %v1653 = vpack.c.b16 %v1639, %v1638
  %v1654 = vpack.c.b16 %v1641, %v1640
  %v1655 = vpack.c.b16 %v1643, %v1642
  %v1656 = vpack.c.b16 %v1645, %v1644
  %v1657 = vpack.c.b16 %v1647, %v1646
  %v1658 = vpack.c.b16 %v1649, %v1648
  %v1659 = vpack.c.b16 %v1651, %v1650
  %1668 = vmatprep.subr.bf16.mxu0 0
  %1669 = vmatpush1.bf16.msra.mxu0 %v1659
  %1670 = vmatprep.subr.bf16.mxu0 0
  %1671 = vmatpush1.bf16.msra.mxu0 %v1658
  %1672 = vmatprep.subr.bf16.mxu0 0
  %1673 = vmatpush1.bf16.msra.mxu0 %v1657
  %1674 = vmatprep.subr.bf16.mxu0 0
  %1675 = vmatpush1.bf16.msra.mxu0 %v1656
  %1676 = vmatprep.subr.bf16.mxu0 0
  %1677 = vmatpush1.bf16.msra.mxu0 %v1655
  %1678 = vmatprep.subr.bf16.mxu0 0
  %1679 = vmatpush1.bf16.msra.mxu0 %v1654
  %1680 = vmatprep.subr.bf16.mxu0 0
  %1681 = vmatpush1.bf16.msra.mxu0 %v1653
  %1682 = vmatprep.subr.bf16.mxu0 0
  %1683 = vmatpush1.bf16.msra.mxu0 %v1652
  %1684 = vmatprep.subr.bf16.mxu0 0
  %1685 = vmatpush2.bf16.msra.mxu0 0
  %1686 = vmatprep.subr.bf16.mxu0 0
  %1687 = vmatpush2.bf16.msra.mxu0 0
  %1688 = vmatprep.subr.bf16.mxu0 0
  %1689 = vmatpush2.bf16.msra.mxu0 0
  %1690 = vmatprep.subr.bf16.mxu0 0
  %1691 = vmatpush2.bf16.msra.mxu0 0
  %1692 = vmatprep.subr.bf16.mxu0 0
  %1693 = vmatpush2.bf16.msra.mxu0 0
  %1694 = vmatprep.subr.bf16.mxu0 0
  %1695 = vmatpush2.bf16.msra.mxu0 0
  %1696 = vmatprep.subr.bf16.mxu0 0
  %1697 = vmatpush2.bf16.msra.mxu0 0
  %1698 = vmatprep.subr.bf16.mxu0 0
  %1699 = vmatpush2.bf16.msra.mxu0 0
  %1700 = vmatprep.mubr.bf16.mxu0 0
  %1701 = vmatmul.mubr.bf16.gmra.mxu0 %v1598
  %v1702 = vpop.f32.mrf.mxu0
  %v1703 = vadd.f32 0.0, %v1702
  %v1704 = vpop.f32.mrf.mxu0
  %v1705 = vpop.f32.mrf.mxu0
  %v1706 = vadd.f32 0.0, %v1705
  %v1707 = vpop.f32.mrf.mxu0
  %1708 = vmatprep.mubr.bf16.mxu0 0
  %1709 = vmatmul.mubr.bf16.gmra.mxu0 %v1599
  %v1710 = vpop.f32.mrf.mxu0
  %v1711 = vadd.f32 0.0, %v1710
  %v1712 = vpop.f32.mrf.mxu0
  %v1713 = vpop.f32.mrf.mxu0
  %v1714 = vadd.f32 0.0, %v1713
  %v1715 = vpop.f32.mrf.mxu0
  %1716 = vmatprep.mubr.bf16.mxu0 0
  %1717 = vmatmul.mubr.bf16.gmra.mxu0 %v1600
  %v1718 = vpop.f32.mrf.mxu0
  %v1719 = vadd.f32 0.0, %v1718
  %v1720 = vpop.f32.mrf.mxu0
  %v1721 = vpop.f32.mrf.mxu0
  %v1722 = vadd.f32 0.0, %v1721
  %v1723 = vpop.f32.mrf.mxu0
  %1724 = vmatprep.mubr.bf16.mxu0 0
  %1725 = vmatmul.mubr.bf16.gmra.mxu0 %v1601
  %v1726 = vpop.f32.mrf.mxu0
  %v1727 = vadd.f32 0.0, %v1726
  %v1728 = vpop.f32.mrf.mxu0
  %v1729 = vpop.f32.mrf.mxu0
  %v1730 = vadd.f32 0.0, %v1729
  %v1731 = vpop.f32.mrf.mxu0
  %1732 = vmatprep.mubr.bf16.mxu0 0
  %1733 = vmatmul.mubr.bf16.gmra.mxu0 %v1602
  %v1734 = vpop.f32.mrf.mxu0
  %v1735 = vadd.f32 0.0, %v1734
  %v1736 = vpop.f32.mrf.mxu0
  %v1737 = vpop.f32.mrf.mxu0
  %v1738 = vadd.f32 0.0, %v1737
  %v1739 = vpop.f32.mrf.mxu0
  %1740 = vdwg.mxu0
  %v1741 = vadd.f32 %v1578, %v1703
  %v1742 = vadd.f32 %v1579, %v1706
  %v1743 = vadd.f32 %v1580, %v1711
  %v1744 = vadd.f32 %v1581, %v1714
  %v1745 = vadd.f32 %v1582, %v1719
  %v1746 = vadd.f32 %v1583, %v1722
  %v1747 = vadd.f32 %v1584, %v1727
  %v1748 = vadd.f32 %v1585, %v1730
  %v1749 = vadd.f32 %v1586, %v1735
  %v1750 = vadd.f32 %v1587, %v1738
  %v1751 = vld [vmem:[#allocation2 + $0x16] sm:$0xff]
  %v1752 = vld [vmem:[#allocation2 + $0x1e] sm:$0xff]
  %v1753 = vld [vmem:[#allocation2 + $0x26] sm:$0xff]
  %v1754 = vld [vmem:[#allocation2 + $0x2e] sm:$0xff]
  %v1755 = vld [vmem:[#allocation2 + $0x36] sm:$0xff]
  %v1756 = vld [vmem:[#allocation2 + $0x3e] sm:$0xff]
  %v1757 = vld [vmem:[#allocation2 + $0x46] sm:$0xff]
  %v1758 = vld [vmem:[#allocation2 + $0x4e] sm:$0xff]
  %v1759 = vld [vmem:[#allocation2 + $0x56] sm:$0xff]
  %v1760 = vld [vmem:[#allocation2 + $0x5e] sm:$0x3f]
  %v1761 = vpack.c.bf16 %v1752, %v1751
  %v1762 = vpack.c.bf16 %v1754, %v1753
  %v1763 = vpack.c.bf16 %v1756, %v1755
  %v1764 = vpack.c.bf16 %v1758, %v1757
  %v1765 = vpack.c.bf16 %v1760, %v1759
  %s1766 = scalar_lea.vmem %s3, 512
  %v1767 = vld [vmem:[%s1766] sm:$0xf]
  %v1768 = vld [vmem:[%s1766 + $0x4] sm:$0xf]
  %v1769 = vld [vmem:[%s1766 + $0x8] sm:$0xf]
  %v1770 = vld [vmem:[%s1766 + $0xc] sm:$0xf]
  %v1771 = vld [vmem:[%s1766 + $0x10] sm:$0xf]
  %v1772 = vld [vmem:[%s1766 + $0x14] sm:$0xf]
  %v1773 = vld [vmem:[%s1766 + $0x18] sm:$0xf]
  %v1774 = vld [vmem:[%s1766 + $0x1c] sm:$0xf]
  %v1775 = vld [vmem:[%s1766 + $0x20] sm:$0xf]
  %v1776 = vld [vmem:[%s1766 + $0x24] sm:$0xf]
  %v1777 = vld [vmem:[%s1766 + $0x28] sm:$0xf]
  %v1778 = vld [vmem:[%s1766 + $0x2c] sm:$0xf]
  %v1779 = vld [vmem:[%s1766 + $0x30] sm:$0xf]
  %v1780 = vld [vmem:[%s1766 + $0x34] sm:$0xf]
  %v1781 = vld [vmem:[%s1766 + $0x38] sm:$0xf]
  %v1782 = vld [vmem:[%s1766 + $0x3c] sm:$0xf]
  %v1799 = vunpack.c.l.b16 %v1767
  %v1800 = vunpack.c.l.b16 %v1768
  %v1801 = vunpack.c.l.b16 %v1769
  %v1802 = vunpack.c.l.b16 %v1770
  %v1803 = vunpack.c.l.b16 %v1771
  %v1804 = vunpack.c.l.b16 %v1772
  %v1805 = vunpack.c.l.b16 %v1773
  %v1806 = vunpack.c.l.b16 %v1774
  %v1807 = vunpack.c.l.b16 %v1775
  %v1808 = vunpack.c.l.b16 %v1776
  %v1809 = vunpack.c.l.b16 %v1777
  %v1810 = vunpack.c.l.b16 %v1778
  %v1811 = vunpack.c.l.b16 %v1779
  %v1812 = vunpack.c.l.b16 %v1780
  %v1813 = vunpack.c.l.b16 %v1781
  %v1814 = vunpack.c.l.b16 %v1782
  %v1815 = vpack.c.b16 %v1800, %v1799
  %v1816 = vpack.c.b16 %v1802, %v1801
  %v1817 = vpack.c.b16 %v1804, %v1803
  %v1818 = vpack.c.b16 %v1806, %v1805
  %v1819 = vpack.c.b16 %v1808, %v1807
  %v1820 = vpack.c.b16 %v1810, %v1809
  %v1821 = vpack.c.b16 %v1812, %v1811
  %v1822 = vpack.c.b16 %v1814, %v1813
  %1831 = vmatprep.subr.bf16.mxu0 0
  %1832 = vmatpush1.bf16.msra.mxu0 %v1822
  %1833 = vmatprep.subr.bf16.mxu0 0
  %1834 = vmatpush1.bf16.msra.mxu0 %v1821
  %1835 = vmatprep.subr.bf16.mxu0 0
  %1836 = vmatpush1.bf16.msra.mxu0 %v1820
  %1837 = vmatprep.subr.bf16.mxu0 0
  %1838 = vmatpush1.bf16.msra.mxu0 %v1819
  %1839 = vmatprep.subr.bf16.mxu0 0
  %1840 = vmatpush1.bf16.msra.mxu0 %v1818
  %1841 = vmatprep.subr.bf16.mxu0 0
  %1842 = vmatpush1.bf16.msra.mxu0 %v1817
  %1843 = vmatprep.subr.bf16.mxu0 0
  %1844 = vmatpush1.bf16.msra.mxu0 %v1816
  %1845 = vmatprep.subr.bf16.mxu0 0
  %1846 = vmatpush1.bf16.msra.mxu0 %v1815
  %1847 = vmatprep.subr.bf16.mxu0 0
  %1848 = vmatpush2.bf16.msra.mxu0 0
  %1849 = vmatprep.subr.bf16.mxu0 0
  %1850 = vmatpush2.bf16.msra.mxu0 0
  %1851 = vmatprep.subr.bf16.mxu0 0
  %1852 = vmatpush2.bf16.msra.mxu0 0
  %1853 = vmatprep.subr.bf16.mxu0 0
  %1854 = vmatpush2.bf16.msra.mxu0 0
  %1855 = vmatprep.subr.bf16.mxu0 0
  %1856 = vmatpush2.bf16.msra.mxu0 0
  %1857 = vmatprep.subr.bf16.mxu0 0
  %1858 = vmatpush2.bf16.msra.mxu0 0
  %1859 = vmatprep.subr.bf16.mxu0 0
  %1860 = vmatpush2.bf16.msra.mxu0 0
  %1861 = vmatprep.subr.bf16.mxu0 0
  %1862 = vmatpush2.bf16.msra.mxu0 0
  %1863 = vmatprep.mubr.bf16.mxu0 0
  %1864 = vmatmul.mubr.bf16.gmra.mxu0 %v1761
  %v1865 = vpop.f32.mrf.mxu0
  %v1866 = vadd.f32 0.0, %v1865
  %v1867 = vpop.f32.mrf.mxu0
  %v1868 = vpop.f32.mrf.mxu0
  %v1869 = vadd.f32 0.0, %v1868
  %v1870 = vpop.f32.mrf.mxu0
  %1871 = vmatprep.mubr.bf16.mxu0 0
  %1872 = vmatmul.mubr.bf16.gmra.mxu0 %v1762
  %v1873 = vpop.f32.mrf.mxu0
  %v1874 = vadd.f32 0.0, %v1873
  %v1875 = vpop.f32.mrf.mxu0
  %v1876 = vpop.f32.mrf.mxu0
  %v1877 = vadd.f32 0.0, %v1876
  %v1878 = vpop.f32.mrf.mxu0
  %1879 = vmatprep.mubr.bf16.mxu0 0
  %1880 = vmatmul.mubr.bf16.gmra.mxu0 %v1763
  %v1881 = vpop.f32.mrf.mxu0
  %v1882 = vadd.f32 0.0, %v1881
  %v1883 = vpop.f32.mrf.mxu0
  %v1884 = vpop.f32.mrf.mxu0
  %v1885 = vadd.f32 0.0, %v1884
  %v1886 = vpop.f32.mrf.mxu0
  %1887 = vmatprep.mubr.bf16.mxu0 0
  %1888 = vmatmul.mubr.bf16.gmra.mxu0 %v1764
  %v1889 = vpop.f32.mrf.mxu0
  %v1890 = vadd.f32 0.0, %v1889
  %v1891 = vpop.f32.mrf.mxu0
  %v1892 = vpop.f32.mrf.mxu0
  %v1893 = vadd.f32 0.0, %v1892
  %v1894 = vpop.f32.mrf.mxu0
  %1895 = vmatprep.mubr.bf16.mxu0 0
  %1896 = vmatmul.mubr.bf16.gmra.mxu0 %v1765
  %v1897 = vpop.f32.mrf.mxu0
  %v1898 = vadd.f32 0.0, %v1897
  %v1899 = vpop.f32.mrf.mxu0
  %v1900 = vpop.f32.mrf.mxu0
  %v1901 = vadd.f32 0.0, %v1900
  %v1902 = vpop.f32.mrf.mxu0
  %1903 = vdwg.mxu0
  %v1904 = vadd.f32 %v1741, %v1866
  %v1905 = vadd.f32 %v1742, %v1869
  %v1906 = vadd.f32 %v1743, %v1874
  %v1907 = vadd.f32 %v1744, %v1877
  %v1908 = vadd.f32 %v1745, %v1882
  %v1909 = vadd.f32 %v1746, %v1885
  %v1910 = vadd.f32 %v1747, %v1890
  %v1911 = vadd.f32 %v1748, %v1893
  %v1912 = vadd.f32 %v1749, %v1898
  %v1913 = vadd.f32 %v1750, %v1901
  %v1914 = vld [vmem:[%s4] sm:$0x1]
  %v1916 = vlaneseq
  %v1917 = vshrl.u32 %v1916, 7
  %v1918 = vsub.s32 0, %v1917
  %v1919 = vrot.slane %v1914, %v1918
  %v1921 = vadd.f32 %v1904, %v1919
  %v1922 = vadd.f32 %v1905, %v1919
  %v1923 = vadd.f32 %v1906, %v1919
  %v1924 = vadd.f32 %v1907, %v1919
  %v1925 = vadd.f32 %v1908, %v1919
  %v1926 = vadd.f32 %v1909, %v1919
  %v1927 = vadd.f32 %v1910, %v1919
  %v1928 = vadd.f32 %v1911, %v1919
  %v1929 = vadd.f32 %v1912, %v1919
  %v1930 = vadd.f32 %v1913, %v1919
  %v1931 = vmax.f32 %v1921, 0.0
  %v1932 = vmax.f32 %v1922, 0.0
  %v1933 = vmax.f32 %v1923, 0.0
  %v1934 = vmax.f32 %v1924, 0.0
  %v1935 = vmax.f32 %v1925, 0.0
  %v1936 = vmax.f32 %v1926, 0.0
  %v1937 = vmax.f32 %v1927, 0.0
  %v1938 = vmax.f32 %v1928, 0.0
  %v1939 = vmax.f32 %v1929, 0.0
  %v1940 = vmax.f32 %v1930, 0.0
  %1941 = vst [vmem:[#allocation3] sm:$0xff] %v1931
  %1942 = vst [vmem:[#allocation3 + $0x8] sm:$0xff] %v1932
  %1943 = vst [vmem:[#allocation3 + $0x10] sm:$0xff] %v1933
  %1944 = vst [vmem:[#allocation3 + $0x18] sm:$0xff] %v1934
  %1945 = vst [vmem:[#allocation3 + $0x20] sm:$0xff] %v1935
  %1946 = vst [vmem:[#allocation3 + $0x28] sm:$0xff] %v1936
  %1947 = vst [vmem:[#allocation3 + $0x30] sm:$0xff] %v1937
  %1948 = vst [vmem:[#allocation3 + $0x38] sm:$0xff] %v1938
  %1949 = vst [vmem:[#allocation3 + $0x40] sm:$0xff] %v1939
  %1950 = vst [vmem:[#allocation3 + $0x48] sm:$0x3f] %v1940
  %v1951 = vld [vmem:[#allocation3] sm:$0xff]
  %v1952 = vld [vmem:[#allocation3 + $0x8] sm:$0xff]
  %v1953 = vld [vmem:[#allocation3 + $0x10] sm:$0xff]
  %v1954 = vld [vmem:[#allocation3 + $0x18] sm:$0xff]
  %v1955 = vld [vmem:[#allocation3 + $0x20] sm:$0xff]
  %v1956 = vld [vmem:[#allocation3 + $0x28] sm:$0xff]
  %v1957 = vld [vmem:[#allocation3 + $0x30] sm:$0xff]
  %v1958 = vld [vmem:[#allocation3 + $0x38] sm:$0xff]
  %v1959 = vld [vmem:[#allocation3 + $0x40] sm:$0x7]
  %v1960 = vld [vmem:[#allocation3 + $0x1] sm:$0xff]
  %v1961 = vld [vmem:[#allocation3 + $0x9] sm:$0xff]
  %v1962 = vld [vmem:[#allocation3 + $0x11] sm:$0xff]
  %v1963 = vld [vmem:[#allocation3 + $0x19] sm:$0xff]
  %v1964 = vld [vmem:[#allocation3 + $0x21] sm:$0xff]
  %v1965 = vld [vmem:[#allocation3 + $0x29] sm:$0xff]
  %v1966 = vld [vmem:[#allocation3 + $0x31] sm:$0xff]
  %v1967 = vld [vmem:[#allocation3 + $0x39] sm:$0xff]
  %v1968 = vld [vmem:[#allocation3 + $0x41] sm:$0x7]
  %v1969 = vmax.f32 %v1951, %v1960
  %v1970 = vmax.f32 %v1952, %v1961
  %v1971 = vmax.f32 %v1953, %v1962
  %v1972 = vmax.f32 %v1954, %v1963
  %v1973 = vmax.f32 %v1955, %v1964
  %v1974 = vmax.f32 %v1956, %v1965
  %v1975 = vmax.f32 %v1957, %v1966
  %v1976 = vmax.f32 %v1958, %v1967
  %v1977 = vmax.f32 %v1959, %v1968
  %v1978 = vld [vmem:[#allocation3 + $0xa] sm:$0xff]
  %v1979 = vld [vmem:[#allocation3 + $0x12] sm:$0xff]
  %v1980 = vld [vmem:[#allocation3 + $0x1a] sm:$0xff]
  %v1981 = vld [vmem:[#allocation3 + $0x22] sm:$0xff]
  %v1982 = vld [vmem:[#allocation3 + $0x2a] sm:$0xff]
  %v1983 = vld [vmem:[#allocation3 + $0x32] sm:$0xff]
  %v1984 = vld [vmem:[#allocation3 + $0x3a] sm:$0xff]
  %v1985 = vld [vmem:[#allocation3 + $0x42] sm:$0xff]
  %v1986 = vld [vmem:[#allocation3 + $0x4a] sm:$0x7]
  %v1987 = vld [vmem:[#allocation3 + $0xb] sm:$0xff]
  %v1988 = vld [vmem:[#allocation3 + $0x13] sm:$0xff]
  %v1989 = vld [vmem:[#allocation3 + $0x1b] sm:$0xff]
  %v1990 = vld [vmem:[#allocation3 + $0x23] sm:$0xff]
  %v1991 = vld [vmem:[#allocation3 + $0x2b] sm:$0xff]
  %v1992 = vld [vmem:[#allocation3 + $0x33] sm:$0xff]
  %v1993 = vld [vmem:[#allocation3 + $0x3b] sm:$0xff]
  %v1994 = vld [vmem:[#allocation3 + $0x43] sm:$0xff]
  %v1995 = vld [vmem:[#allocation3 + $0x4b] sm:$0x7]
  %v1996 = vmax.f32 %v1978, %v1987
  %v1997 = vmax.f32 %v1979, %v1988
  %v1998 = vmax.f32 %v1980, %v1989
  %v1999 = vmax.f32 %v1981, %v1990
  %v2000 = vmax.f32 %v1982, %v1991
  %v2001 = vmax.f32 %v1983, %v1992
  %v2002 = vmax.f32 %v1984, %v1993
  %v2003 = vmax.f32 %v1985, %v1994
  %v2004 = vmax.f32 %v1986, %v1995
  %v2005 = vmax.f32 %v1969, %v1996
  %v2006 = vmax.f32 %v1970, %v1997
  %v2007 = vmax.f32 %v1971, %v1998
  %v2008 = vmax.f32 %v1972, %v1999
  %v2009 = vmax.f32 %v1973, %v2000
  %v2010 = vmax.f32 %v1974, %v2001
  %v2011 = vmax.f32 %v1975, %v2002
  %v2012 = vmax.f32 %v1976, %v2003
  %v2013 = vmax.f32 %v1977, %v2004
  %2014 = vst [vmem:[#allocation6] sm:$0xff] %v2005
  %2015 = vst [vmem:[#allocation6 + $0x8] sm:$0xff] %v2006
  %2016 = vst [vmem:[#allocation6 + $0x10] sm:$0xff] %v2007
  %2017 = vst [vmem:[#allocation6 + $0x18] sm:$0xff] %v2008
  %2018 = vst [vmem:[#allocation6 + $0x20] sm:$0xff] %v2009
  %2019 = vst [vmem:[#allocation6 + $0x28] sm:$0xff] %v2010
  %2020 = vst [vmem:[#allocation6 + $0x30] sm:$0xff] %v2011
  %2021 = vst [vmem:[#allocation6 + $0x38] sm:$0xff] %v2012
  %2022 = vst [vmem:[#allocation6 + $0x40] sm:$0x7] %v2013
  %2023 = vst [vmem:[#allocation4] sm:$0xff] 0.0
  %2024 = vst [vmem:[#allocation4 + $0x8] sm:$0xff] 0.0
  %2025 = vst [vmem:[#allocation4 + $0x10] sm:$0xff] 0.0
  %2026 = vst [vmem:[#allocation4 + $0x18] sm:$0xff] 0.0
  %2027 = vst [vmem:[#allocation4 + $0x20] sm:$0xf] 0.0
  %v2028 = vld [vmem:[#allocation6] ss:$2 sm:$0xf]
  %2029 = vst [vmem:[#allocation4 + $0x7] sm:$0xf] %v2028
  %s2030 = scalar_lea.vmem [#allocation6], 20
  %v2031 = vld [vmem:[%s2030] ss:$2 sm:$0xf]
  %2032 = vst [vmem:[#allocation4 + $0xd] sm:$0xf] %v2031
  %s2033 = scalar_lea.vmem [#allocation6], 40
  %v2034 = vld [vmem:[%s2033] ss:$2 sm:$0xf]
  %2035 = vst [vmem:[#allocation4 + $0x13] sm:$0xf] %v2034
  %s2036 = scalar_lea.vmem [#allocation6], 60
  %v2037 = vld [vmem:[%s2036] ss:$2 sm:$0xf]
  %2038 = vst [vmem:[#allocation4 + $0x19] sm:$0xf] %v2037
  %v2039 = vld [vmem:[#allocation4] sm:$0xff]
  %v2040 = vld [vmem:[#allocation4 + $0x8] sm:$0xff]
  %v2041 = vld [vmem:[#allocation4 + $0x10] sm:$0xff]
  %v2042 = vld [vmem:[#allocation4 + $0x18] sm:$0xff]
  %v2043 = vld [vmem:[#allocation4 + $0x20] sm:$0xf]
  %v2044 = vadd.f32 %v2039, %v2040
  %v2045 = vadd.f32 %v2044, %v2041
  %v2046 = vadd.f32 %v2045, %v2042
  %vm2047 = vcmask 1043456
  %v2048 = vsel %vm2047, %v2043, 0.0
  %v2049 = vadd.f32 %v2046, %v2048
  %v2050 = vrot.slane %v2049, 4
  %v2051 = vadd.f32 %v2049, %v2050
  %v2052 = vrot.slane %v2051, 2
  %v2053 = vadd.f32 %v2051, %v2052
  %v2054 = vrot.slane %v2053, 1
  %v2055 = vadd.f32 %v2053, %v2054
  %v2056 = vmul.f32 %v2055, 0.0625
  %v2057 = vld [vmem:[#allocation4] sm:$0xff]
  %v2058 = vld [vmem:[#allocation4 + $0x8] sm:$0xff]
  %v2059 = vld [vmem:[#allocation4 + $0x10] sm:$0x3f]
  %v2060 = vpack.c.bf16 %v2058, %v2057
  %v2061 = vpack.c.bf16 %v2059, %v2059
  %v2062 = vld [vmem:[%s5] sm:$0xf]
  %v2063 = vld [vmem:[%s5 + $0x4] sm:$0xf]
  %v2064 = vld [vmem:[%s5 + $0x8] sm:$0xf]
  %v2065 = vld [vmem:[%s5 + $0xc] sm:$0xf]
  %v2066 = vld [vmem:[%s5 + $0x10] sm:$0xf]
  %v2067 = vld [vmem:[%s5 + $0x14] sm:$0xf]
  %v2068 = vld [vmem:[%s5 + $0x18] sm:$0xf]
  %v2069 = vld [vmem:[%s5 + $0x1c] sm:$0xf]
  %v2070 = vld [vmem:[%s5 + $0x20] sm:$0xf]
  %v2071 = vld [vmem:[%s5 + $0x24] sm:$0xf]
  %v2072 = vld [vmem:[%s5 + $0x28] sm:$0xf]
  %v2073 = vld [vmem:[%s5 + $0x2c] sm:$0xf]
  %v2074 = vld [vmem:[%s5 + $0x30] sm:$0xf]
  %v2075 = vld [vmem:[%s5 + $0x34] sm:$0xf]
  %v2076 = vld [vmem:[%s5 + $0x38] sm:$0xf]
  %v2077 = vld [vmem:[%s5 + $0x3c] sm:$0xf]
  %v2078 = vld [vmem:[#allocation4 + $0x1] sm:$0xff]
  %v2079 = vld [vmem:[#allocation4 + $0x9] sm:$0xff]
  %v2080 = vld [vmem:[#allocation4 + $0x11] sm:$0x3f]
  %v2081 = vpack.c.bf16 %v2079, %v2078
  %v2082 = vpack.c.bf16 %v2080, %v2080
  %s2083 = scalar_lea.vmem %s5, 64
  %v2084 = vld [vmem:[%s2083] sm:$0xf]
  %v2085 = vld [vmem:[%s2083 + $0x4] sm:$0xf]
  %v2086 = vld [vmem:[%s2083 + $0x8] sm:$0xf]
  %v2087 = vld [vmem:[%s2083 + $0xc] sm:$0xf]
  %v2088 = vld [vmem:[%s2083 + $0x10] sm:$0xf]
  %v2089 = vld [vmem:[%s2083 + $0x14] sm:$0xf]
  %v2090 = vld [vmem:[%s2083 + $0x18] sm:$0xf]
  %v2091 = vld [vmem:[%s2083 + $0x1c] sm:$0xf]
  %v2092 = vld [vmem:[%s2083 + $0x20] sm:$0xf]
  %v2093 = vld [vmem:[%s2083 + $0x24] sm:$0xf]
  %v2094 = vld [vmem:[%s2083 + $0x28] sm:$0xf]
  %v2095 = vld [vmem:[%s2083 + $0x2c] sm:$0xf]
  %v2096 = vld [vmem:[%s2083 + $0x30] sm:$0xf]
  %v2097 = vld [vmem:[%s2083 + $0x34] sm:$0xf]
  %v2098 = vld [vmem:[%s2083 + $0x38] sm:$0xf]
  %v2099 = vld [vmem:[%s2083 + $0x3c] sm:$0xf]
  %v2116 = vunpack.c.l.b16 %v2084
  %v2117 = vunpack.c.l.b16 %v2085
  %v2118 = vunpack.c.l.b16 %v2086
  %v2119 = vunpack.c.l.b16 %v2087
  %v2120 = vunpack.c.l.b16 %v2088
  %v2121 = vunpack.c.l.b16 %v2089
  %v2122 = vunpack.c.l.b16 %v2090
  %v2123 = vunpack.c.l.b16 %v2091
  %v2124 = vunpack.c.l.b16 %v2092
  %v2125 = vunpack.c.l.b16 %v2093
  %v2126 = vunpack.c.l.b16 %v2094
  %v2127 = vunpack.c.l.b16 %v2095
  %v2128 = vunpack.c.l.b16 %v2096
  %v2129 = vunpack.c.l.b16 %v2097
  %v2130 = vunpack.c.l.b16 %v2098
  %v2131 = vunpack.c.l.b16 %v2099
  %v2132 = vpack.c.b16 %v2117, %v2116
  %v2133 = vpack.c.b16 %v2119, %v2118
  %v2134 = vpack.c.b16 %v2121, %v2120
  %v2135 = vpack.c.b16 %v2123, %v2122
  %v2136 = vpack.c.b16 %v2125, %v2124
  %v2137 = vpack.c.b16 %v2127, %v2126
  %v2138 = vpack.c.b16 %v2129, %v2128
  %v2139 = vpack.c.b16 %v2131, %v2130
  %2148 = vmatprep.subr.bf16.mxu0 0
  %2149 = vmatpush1.bf16.msra.mxu0 %v2139
  %2150 = vmatprep.subr.bf16.mxu0 0
  %2151 = vmatpush1.bf16.msra.mxu0 %v2138
  %2152 = vmatprep.subr.bf16.mxu0 0
  %2153 = vmatpush1.bf16.msra.mxu0 %v2137
  %2154 = vmatprep.subr.bf16.mxu0 0
  %2155 = vmatpush1.bf16.msra.mxu0 %v2136
  %2156 = vmatprep.subr.bf16.mxu0 0
  %2157 = vmatpush1.bf16.msra.mxu0 %v2135
  %2158 = vmatprep.subr.bf16.mxu0 0
  %2159 = vmatpush1.bf16.msra.mxu0 %v2134
  %2160 = vmatprep.subr.bf16.mxu0 0
  %2161 = vmatpush1.bf16.msra.mxu0 %v2133
  %2162 = vmatprep.subr.bf16.mxu0 0
  %2163 = vmatpush1.bf16.msra.mxu0 %v2132
  %2164 = vmatprep.subr.bf16.mxu0 0
  %2165 = vmatpush2.bf16.msra.mxu0 0
  %2166 = vmatprep.subr.bf16.mxu0 0
  %2167 = vmatpush2.bf16.msra.mxu0 0
  %2168 = vmatprep.subr.bf16.mxu0 0
  %2169 = vmatpush2.bf16.msra.mxu0 0
  %2170 = vmatprep.subr.bf16.mxu0 0
  %2171 = vmatpush2.bf16.msra.mxu0 0
  %2172 = vmatprep.subr.bf16.mxu0 0
  %2173 = vmatpush2.bf16.msra.mxu0 0
  %2174 = vmatprep.subr.bf16.mxu0 0
  %2175 = vmatpush2.bf16.msra.mxu0 0
  %2176 = vmatprep.subr.bf16.mxu0 0
  %2177 = vmatpush2.bf16.msra.mxu0 0
  %2178 = vmatprep.subr.bf16.mxu0 0
  %2179 = vmatpush2.bf16.msra.mxu0 0
  %2180 = vmatprep.mubr.bf16.mxu0 0
  %2181 = vmatmul.mubr.bf16.gmra.mxu0 %v2081
  %v2182 = vpop.f32.mrf.mxu0
  %v2183 = vadd.f32 0.0, %v2182
  %v2184 = vpop.f32.mrf.mxu0
  %v2185 = vpop.f32.mrf.mxu0
  %v2186 = vadd.f32 0.0, %v2185
  %v2187 = vpop.f32.mrf.mxu0
  %2188 = vmatprep.mubr.bf16.mxu0 0
  %2189 = vmatmul.mubr.bf16.gmra.mxu0 %v2082
  %v2190 = vpop.f32.mrf.mxu0
  %v2191 = vadd.f32 0.0, %v2190
  %v2192 = vpop.f32.mrf.mxu0
  %v2193 = vpop.f32.mrf.mxu0
  %v2194 = vpop.f32.mrf.mxu0
  %2195 = vdwg.mxu0
  %v2212 = vunpack.c.l.b16 %v2062
  %v2213 = vunpack.c.l.b16 %v2063
  %v2214 = vunpack.c.l.b16 %v2064
  %v2215 = vunpack.c.l.b16 %v2065
  %v2216 = vunpack.c.l.b16 %v2066
  %v2217 = vunpack.c.l.b16 %v2067
  %v2218 = vunpack.c.l.b16 %v2068
  %v2219 = vunpack.c.l.b16 %v2069
  %v2220 = vunpack.c.l.b16 %v2070
  %v2221 = vunpack.c.l.b16 %v2071
  %v2222 = vunpack.c.l.b16 %v2072
  %v2223 = vunpack.c.l.b16 %v2073
  %v2224 = vunpack.c.l.b16 %v2074
  %v2225 = vunpack.c.l.b16 %v2075
  %v2226 = vunpack.c.l.b16 %v2076
  %v2227 = vunpack.c.l.b16 %v2077
  %v2228 = vpack.c.b16 %v2213, %v2212
  %v2229 = vpack.c.b16 %v2215, %v2214
  %v2230 = vpack.c.b16 %v2217, %v2216
  %v2231 = vpack.c.b16 %v2219, %v2218
  %v2232 = vpack.c.b16 %v2221, %v2220
  %v2233 = vpack.c.b16 %v2223, %v2222
  %v2234 = vpack.c.b16 %v2225, %v2224
  %v2235 = vpack.c.b16 %v2227, %v2226
  %2244 = vmatprep.subr.bf16.mxu0 0
  %2245 = vmatpush1.bf16.msra.mxu0 %v2235
  %2246 = vmatprep.subr.bf16.mxu0 0
  %2247 = vmatpush1.bf16.msra.mxu0 %v2234
  %2248 = vmatprep.subr.bf16.mxu0 0
  %2249 = vmatpush1.bf16.msra.mxu0 %v2233
  %2250 = vmatprep.subr.bf16.mxu0 0
  %2251 = vmatpush1.bf16.msra.mxu0 %v2232
  %2252 = vmatprep.subr.bf16.mxu0 0
  %2253 = vmatpush1.bf16.msra.mxu0 %v2231
  %2254 = vmatprep.subr.bf16.mxu0 0
  %2255 = vmatpush1.bf16.msra.mxu0 %v2230
  %2256 = vmatprep.subr.bf16.mxu0 0
  %2257 = vmatpush1.bf16.msra.mxu0 %v2229
  %2258 = vmatprep.subr.bf16.mxu0 0
  %2259 = vmatpush1.bf16.msra.mxu0 %v2228
  %2260 = vmatprep.subr.bf16.mxu0 0
  %2261 = vmatpush2.bf16.msra.mxu0 0
  %2262 = vmatprep.subr.bf16.mxu0 0
  %2263 = vmatpush2.bf16.msra.mxu0 0
  %2264 = vmatprep.subr.bf16.mxu0 0
  %2265 = vmatpush2.bf16.msra.mxu0 0
  %2266 = vmatprep.subr.bf16.mxu0 0
  %2267 = vmatpush2.bf16.msra.mxu0 0
  %2268 = vmatprep.subr.bf16.mxu0 0
  %2269 = vmatpush2.bf16.msra.mxu0 0
  %2270 = vmatprep.subr.bf16.mxu0 0
  %2271 = vmatpush2.bf16.msra.mxu0 0
  %2272 = vmatprep.subr.bf16.mxu0 0
  %2273 = vmatpush2.bf16.msra.mxu0 0
  %2274 = vmatprep.subr.bf16.mxu0 0
  %2275 = vmatpush2.bf16.msra.mxu0 0
  %2276 = vmatprep.mubr.bf16.mxu0 0
  %2277 = vmatmul.mubr.bf16.gmra.mxu0 %v2060
  %v2278 = vpop.f32.mrf.mxu0
  %v2279 = vadd.f32 %v2183, %v2278
  %v2280 = vpop.f32.mrf.mxu0
  %v2281 = vpop.f32.mrf.mxu0
  %v2282 = vadd.f32 %v2186, %v2281
  %v2283 = vpop.f32.mrf.mxu0
  %2284 = vmatprep.mubr.bf16.mxu0 0
  %2285 = vmatmul.mubr.bf16.gmra.mxu0 %v2061
  %v2286 = vpop.f32.mrf.mxu0
  %v2287 = vadd.f32 %v2191, %v2286
  %v2288 = vpop.f32.mrf.mxu0
  %v2289 = vpop.f32.mrf.mxu0
  %v2290 = vpop.f32.mrf.mxu0
  %2291 = vdwg.mxu0
  %v2292 = vld [vmem:[#allocation4 + $0x2] sm:$0xff]
  %v2293 = vld [vmem:[#allocation4 + $0xa] sm:$0xff]
  %v2294 = vld [vmem:[#allocation4 + $0x12] sm:$0x3f]
  %v2295 = vpack.c.bf16 %v2293, %v2292
  %v2296 = vpack.c.bf16 %v2294, %v2294
  %s2297 = scalar_lea.vmem %s5, 128
  %v2298 = vld [vmem:[%s2297] sm:$0xf]
  %v2299 = vld [vmem:[%s2297 + $0x4] sm:$0xf]
  %v2300 = vld [vmem:[%s2297 + $0x8] sm:$0xf]
  %v2301 = vld [vmem:[%s2297 + $0xc] sm:$0xf]
  %v2302 = vld [vmem:[%s2297 + $0x10] sm:$0xf]
  %v2303 = vld [vmem:[%s2297 + $0x14] sm:$0xf]
  %v2304 = vld [vmem:[%s2297 + $0x18] sm:$0xf]
  %v2305 = vld [vmem:[%s2297 + $0x1c] sm:$0xf]
  %v2306 = vld [vmem:[%s2297 + $0x20] sm:$0xf]
  %v2307 = vld [vmem:[%s2297 + $0x24] sm:$0xf]
  %v2308 = vld [vmem:[%s2297 + $0x28] sm:$0xf]
  %v2309 = vld [vmem:[%s2297 + $0x2c] sm:$0xf]
  %v2310 = vld [vmem:[%s2297 + $0x30] sm:$0xf]
  %v2311 = vld [vmem:[%s2297 + $0x34] sm:$0xf]
  %v2312 = vld [vmem:[%s2297 + $0x38] sm:$0xf]
  %v2313 = vld [vmem:[%s2297 + $0x3c] sm:$0xf]
  %v2330 = vunpack.c.l.b16 %v2298
  %v2331 = vunpack.c.l.b16 %v2299
  %v2332 = vunpack.c.l.b16 %v2300
  %v2333 = vunpack.c.l.b16 %v2301
  %v2334 = vunpack.c.l.b16 %v2302
  %v2335 = vunpack.c.l.b16 %v2303
  %v2336 = vunpack.c.l.b16 %v2304
  %v2337 = vunpack.c.l.b16 %v2305
  %v2338 = vunpack.c.l.b16 %v2306
  %v2339 = vunpack.c.l.b16 %v2307
  %v2340 = vunpack.c.l.b16 %v2308
  %v2341 = vunpack.c.l.b16 %v2309
  %v2342 = vunpack.c.l.b16 %v2310
  %v2343 = vunpack.c.l.b16 %v2311
  %v2344 = vunpack.c.l.b16 %v2312
  %v2345 = vunpack.c.l.b16 %v2313
  %v2346 = vpack.c.b16 %v2331, %v2330
  %v2347 = vpack.c.b16 %v2333, %v2332
  %v2348 = vpack.c.b16 %v2335, %v2334
  %v2349 = vpack.c.b16 %v2337, %v2336
  %v2350 = vpack.c.b16 %v2339, %v2338
  %v2351 = vpack.c.b16 %v2341, %v2340
  %v2352 = vpack.c.b16 %v2343, %v2342
  %v2353 = vpack.c.b16 %v2345, %v2344
  %2362 = vmatprep.subr.bf16.mxu0 0
  %2363 = vmatpush1.bf16.msra.mxu0 %v2353
  %2364 = vmatprep.subr.bf16.mxu0 0
  %2365 = vmatpush1.bf16.msra.mxu0 %v2352
  %2366 = vmatprep.subr.bf16.mxu0 0
  %2367 = vmatpush1.bf16.msra.mxu0 %v2351
  %2368 = vmatprep.subr.bf16.mxu0 0
  %2369 = vmatpush1.bf16.msra.mxu0 %v2350
  %2370 = vmatprep.subr.bf16.mxu0 0
  %2371 = vmatpush1.bf16.msra.mxu0 %v2349
  %2372 = vmatprep.subr.bf16.mxu0 0
  %2373 = vmatpush1.bf16.msra.mxu0 %v2348
  %2374 = vmatprep.subr.bf16.mxu0 0
  %2375 = vmatpush1.bf16.msra.mxu0 %v2347
  %2376 = vmatprep.subr.bf16.mxu0 0
  %2377 = vmatpush1.bf16.msra.mxu0 %v2346
  %2378 = vmatprep.subr.bf16.mxu0 0
  %2379 = vmatpush2.bf16.msra.mxu0 0
  %2380 = vmatprep.subr.bf16.mxu0 0
  %2381 = vmatpush2.bf16.msra.mxu0 0
  %2382 = vmatprep.subr.bf16.mxu0 0
  %2383 = vmatpush2.bf16.msra.mxu0 0
  %2384 = vmatprep.subr.bf16.mxu0 0
  %2385 = vmatpush2.bf16.msra.mxu0 0
  %2386 = vmatprep.subr.bf16.mxu0 0
  %2387 = vmatpush2.bf16.msra.mxu0 0
  %2388 = vmatprep.subr.bf16.mxu0 0
  %2389 = vmatpush2.bf16.msra.mxu0 0
  %2390 = vmatprep.subr.bf16.mxu0 0
  %2391 = vmatpush2.bf16.msra.mxu0 0
  %2392 = vmatprep.subr.bf16.mxu0 0
  %2393 = vmatpush2.bf16.msra.mxu0 0
  %2394 = vmatprep.mubr.bf16.mxu0 0
  %2395 = vmatmul.mubr.bf16.gmra.mxu0 %v2295
  %v2396 = vpop.f32.mrf.mxu0
  %v2397 = vadd.f32 0.0, %v2396
  %v2398 = vpop.f32.mrf.mxu0
  %v2399 = vpop.f32.mrf.mxu0
  %v2400 = vadd.f32 0.0, %v2399
  %v2401 = vpop.f32.mrf.mxu0
  %2402 = vmatprep.mubr.bf16.mxu0 0
  %2403 = vmatmul.mubr.bf16.gmra.mxu0 %v2296
  %v2404 = vpop.f32.mrf.mxu0
  %v2405 = vadd.f32 0.0, %v2404
  %v2406 = vpop.f32.mrf.mxu0
  %v2407 = vpop.f32.mrf.mxu0
  %v2408 = vpop.f32.mrf.mxu0
  %2409 = vdwg.mxu0
  %v2410 = vadd.f32 %v2279, %v2397
  %v2411 = vadd.f32 %v2282, %v2400
  %v2412 = vadd.f32 %v2287, %v2405
  %v2413 = vld [vmem:[#allocation4 + $0x6] sm:$0xff]
  %v2414 = vld [vmem:[#allocation4 + $0xe] sm:$0xff]
  %v2415 = vld [vmem:[#allocation4 + $0x16] sm:$0x3f]
  %v2416 = vpack.c.bf16 %v2414, %v2413
  %v2417 = vpack.c.bf16 %v2415, %v2415
  %s2418 = scalar_lea.vmem %s5, 192
  %v2419 = vld [vmem:[%s2418] sm:$0xf]
  %v2420 = vld [vmem:[%s2418 + $0x4] sm:$0xf]
  %v2421 = vld [vmem:[%s2418 + $0x8] sm:$0xf]
  %v2422 = vld [vmem:[%s2418 + $0xc] sm:$0xf]
  %v2423 = vld [vmem:[%s2418 + $0x10] sm:$0xf]
  %v2424 = vld [vmem:[%s2418 + $0x14] sm:$0xf]
  %v2425 = vld [vmem:[%s2418 + $0x18] sm:$0xf]
  %v2426 = vld [vmem:[%s2418 + $0x1c] sm:$0xf]
  %v2427 = vld [vmem:[%s2418 + $0x20] sm:$0xf]
  %v2428 = vld [vmem:[%s2418 + $0x24] sm:$0xf]
  %v2429 = vld [vmem:[%s2418 + $0x28] sm:$0xf]
  %v2430 = vld [vmem:[%s2418 + $0x2c] sm:$0xf]
  %v2431 = vld [vmem:[%s2418 + $0x30] sm:$0xf]
  %v2432 = vld [vmem:[%s2418 + $0x34] sm:$0xf]
  %v2433 = vld [vmem:[%s2418 + $0x38] sm:$0xf]
  %v2434 = vld [vmem:[%s2418 + $0x3c] sm:$0xf]
  %v2451 = vunpack.c.l.b16 %v2419
  %v2452 = vunpack.c.l.b16 %v2420
  %v2453 = vunpack.c.l.b16 %v2421
  %v2454 = vunpack.c.l.b16 %v2422
  %v2455 = vunpack.c.l.b16 %v2423
  %v2456 = vunpack.c.l.b16 %v2424
  %v2457 = vunpack.c.l.b16 %v2425
  %v2458 = vunpack.c.l.b16 %v2426
  %v2459 = vunpack.c.l.b16 %v2427
  %v2460 = vunpack.c.l.b16 %v2428
  %v2461 = vunpack.c.l.b16 %v2429
  %v2462 = vunpack.c.l.b16 %v2430
  %v2463 = vunpack.c.l.b16 %v2431
  %v2464 = vunpack.c.l.b16 %v2432
  %v2465 = vunpack.c.l.b16 %v2433
  %v2466 = vunpack.c.l.b16 %v2434
  %v2467 = vpack.c.b16 %v2452, %v2451
  %v2468 = vpack.c.b16 %v2454, %v2453
  %v2469 = vpack.c.b16 %v2456, %v2455
  %v2470 = vpack.c.b16 %v2458, %v2457
  %v2471 = vpack.c.b16 %v2460, %v2459
  %v2472 = vpack.c.b16 %v2462, %v2461
  %v2473 = vpack.c.b16 %v2464, %v2463
  %v2474 = vpack.c.b16 %v2466, %v2465
  %2483 = vmatprep.subr.bf16.mxu0 0
  %2484 = vmatpush1.bf16.msra.mxu0 %v2474
  %2485 = vmatprep.subr.bf16.mxu0 0
  %2486 = vmatpush1.bf16.msra.mxu0 %v2473
  %2487 = vmatprep.subr.bf16.mxu0 0
  %2488 = vmatpush1.bf16.msra.mxu0 %v2472
  %2489 = vmatprep.subr.bf16.mxu0 0
  %2490 = vmatpush1.bf16.msra.mxu0 %v2471
  %2491 = vmatprep.subr.bf16.mxu0 0
  %2492 = vmatpush1.bf16.msra.mxu0 %v2470
  %2493 = vmatprep.subr.bf16.mxu0 0
  %2494 = vmatpush1.bf16.msra.mxu0 %v2469
  %2495 = vmatprep.subr.bf16.mxu0 0
  %2496 = vmatpush1.bf16.msra.mxu0 %v2468
  %2497 = vmatprep.subr.bf16.mxu0 0
  %2498 = vmatpush1.bf16.msra.mxu0 %v2467
  %2499 = vmatprep.subr.bf16.mxu0 0
  %2500 = vmatpush2.bf16.msra.mxu0 0
  %2501 = vmatprep.subr.bf16.mxu0 0
  %2502 = vmatpush2.bf16.msra.mxu0 0
  %2503 = vmatprep.subr.bf16.mxu0 0
  %2504 = vmatpush2.bf16.msra.mxu0 0
  %2505 = vmatprep.subr.bf16.mxu0 0
  %2506 = vmatpush2.bf16.msra.mxu0 0
  %2507 = vmatprep.subr.bf16.mxu0 0
  %2508 = vmatpush2.bf16.msra.mxu0 0
  %2509 = vmatprep.subr.bf16.mxu0 0
  %2510 = vmatpush2.bf16.msra.mxu0 0
  %2511 = vmatprep.subr.bf16.mxu0 0
  %2512 = vmatpush2.bf16.msra.mxu0 0
  %2513 = vmatprep.subr.bf16.mxu0 0
  %2514 = vmatpush2.bf16.msra.mxu0 0
  %2515 = vmatprep.mubr.bf16.mxu0 0
  %2516 = vmatmul.mubr.bf16.gmra.mxu0 %v2416
  %v2517 = vpop.f32.mrf.mxu0
  %v2518 = vadd.f32 0.0, %v2517
  %v2519 = vpop.f32.mrf.mxu0
  %v2520 = vpop.f32.mrf.mxu0
  %v2521 = vadd.f32 0.0, %v2520
  %v2522 = vpop.f32.mrf.mxu0
  %2523 = vmatprep.mubr.bf16.mxu0 0
  %2524 = vmatmul.mubr.bf16.gmra.mxu0 %v2417
  %v2525 = vpop.f32.mrf.mxu0
  %v2526 = vadd.f32 0.0, %v2525
  %v2527 = vpop.f32.mrf.mxu0
  %v2528 = vpop.f32.mrf.mxu0
  %v2529 = vpop.f32.mrf.mxu0
  %2530 = vdwg.mxu0
  %v2531 = vadd.f32 %v2410, %v2518
  %v2532 = vadd.f32 %v2411, %v2521
  %v2533 = vadd.f32 %v2412, %v2526
  %v2534 = vld [vmem:[#allocation4 + $0x7] sm:$0xff]
  %v2535 = vld [vmem:[#allocation4 + $0xf] sm:$0xff]
  %v2536 = vld [vmem:[#allocation4 + $0x17] sm:$0x3f]
  %v2537 = vpack.c.bf16 %v2535, %v2534
  %v2538 = vpack.c.bf16 %v2536, %v2536
  %s2539 = scalar_lea.vmem %s5, 256
  %v2540 = vld [vmem:[%s2539] sm:$0xf]
  %v2541 = vld [vmem:[%s2539 + $0x4] sm:$0xf]
  %v2542 = vld [vmem:[%s2539 + $0x8] sm:$0xf]
  %v2543 = vld [vmem:[%s2539 + $0xc] sm:$0xf]
  %v2544 = vld [vmem:[%s2539 + $0x10] sm:$0xf]
  %v2545 = vld [vmem:[%s2539 + $0x14] sm:$0xf]
  %v2546 = vld [vmem:[%s2539 + $0x18] sm:$0xf]
  %v2547 = vld [vmem:[%s2539 + $0x1c] sm:$0xf]
  %v2548 = vld [vmem:[%s2539 + $0x20] sm:$0xf]
  %v2549 = vld [vmem:[%s2539 + $0x24] sm:$0xf]
  %v2550 = vld [vmem:[%s2539 + $0x28] sm:$0xf]
  %v2551 = vld [vmem:[%s2539 + $0x2c] sm:$0xf]
  %v2552 = vld [vmem:[%s2539 + $0x30] sm:$0xf]
  %v2553 = vld [vmem:[%s2539 + $0x34] sm:$0xf]
  %v2554 = vld [vmem:[%s2539 + $0x38] sm:$0xf]
  %v2555 = vld [vmem:[%s2539 + $0x3c] sm:$0xf]
  %v2572 = vunpack.c.l.b16 %v2540
  %v2573 = vunpack.c.l.b16 %v2541
  %v2574 = vunpack.c.l.b16 %v2542
  %v2575 = vunpack.c.l.b16 %v2543
  %v2576 = vunpack.c.l.b16 %v2544
  %v2577 = vunpack.c.l.b16 %v2545
  %v2578 = vunpack.c.l.b16 %v2546
  %v2579 = vunpack.c.l.b16 %v2547
  %v2580 = vunpack.c.l.b16 %v2548
  %v2581 = vunpack.c.l.b16 %v2549
  %v2582 = vunpack.c.l.b16 %v2550
  %v2583 = vunpack.c.l.b16 %v2551
  %v2584 = vunpack.c.l.b16 %v2552
  %v2585 = vunpack.c.l.b16 %v2553
  %v2586 = vunpack.c.l.b16 %v2554
  %v2587 = vunpack.c.l.b16 %v2555
  %v2588 = vpack.c.b16 %v2573, %v2572
  %v2589 = vpack.c.b16 %v2575, %v2574
  %v2590 = vpack.c.b16 %v2577, %v2576
  %v2591 = vpack.c.b16 %v2579, %v2578
  %v2592 = vpack.c.b16 %v2581, %v2580
  %v2593 = vpack.c.b16 %v2583, %v2582
  %v2594 = vpack.c.b16 %v2585, %v2584
  %v2595 = vpack.c.b16 %v2587, %v2586
  %2604 = vmatprep.subr.bf16.mxu0 0
  %2605 = vmatpush1.bf16.msra.mxu0 %v2595
  %2606 = vmatprep.subr.bf16.mxu0 0
  %2607 = vmatpush1.bf16.msra.mxu0 %v2594
  %2608 = vmatprep.subr.bf16.mxu0 0
  %2609 = vmatpush1.bf16.msra.mxu0 %v2593
  %2610 = vmatprep.subr.bf16.mxu0 0
  %2611 = vmatpush1.bf16.msra.mxu0 %v2592
  %2612 = vmatprep.subr.bf16.mxu0 0
  %2613 = vmatpush1.bf16.msra.mxu0 %v2591
  %2614 = vmatprep.subr.bf16.mxu0 0
  %2615 = vmatpush1.bf16.msra.mxu0 %v2590
  %2616 = vmatprep.subr.bf16.mxu0 0
  %2617 = vmatpush1.bf16.msra.mxu0 %v2589
  %2618 = vmatprep.subr.bf16.mxu0 0
  %2619 = vmatpush1.bf16.msra.mxu0 %v2588
  %2620 = vmatprep.subr.bf16.mxu0 0
  %2621 = vmatpush2.bf16.msra.mxu0 0
  %2622 = vmatprep.subr.bf16.mxu0 0
  %2623 = vmatpush2.bf16.msra.mxu0 0
  %2624 = vmatprep.subr.bf16.mxu0 0
  %2625 = vmatpush2.bf16.msra.mxu0 0
  %2626 = vmatprep.subr.bf16.mxu0 0
  %2627 = vmatpush2.bf16.msra.mxu0 0
  %2628 = vmatprep.subr.bf16.mxu0 0
  %2629 = vmatpush2.bf16.msra.mxu0 0
  %2630 = vmatprep.subr.bf16.mxu0 0
  %2631 = vmatpush2.bf16.msra.mxu0 0
  %2632 = vmatprep.subr.bf16.mxu0 0
  %2633 = vmatpush2.bf16.msra.mxu0 0
  %2634 = vmatprep.subr.bf16.mxu0 0
  %2635 = vmatpush2.bf16.msra.mxu0 0
  %2636 = vmatprep.mubr.bf16.mxu0 0
  %2637 = vmatmul.mubr.bf16.gmra.mxu0 %v2537
  %v2638 = vpop.f32.mrf.mxu0
  %v2639 = vadd.f32 0.0, %v2638
  %v2640 = vpop.f32.mrf.mxu0
  %v2641 = vpop.f32.mrf.mxu0
  %v2642 = vadd.f32 0.0, %v2641
  %v2643 = vpop.f32.mrf.mxu0
  %2644 = vmatprep.mubr.bf16.mxu0 0
  %2645 = vmatmul.mubr.bf16.gmra.mxu0 %v2538
  %v2646 = vpop.f32.mrf.mxu0
  %v2647 = vadd.f32 0.0, %v2646
  %v2648 = vpop.f32.mrf.mxu0
  %v2649 = vpop.f32.mrf.mxu0
  %v2650 = vpop.f32.mrf.mxu0
  %2651 = vdwg.mxu0
  %v2652 = vadd.f32 %v2531, %v2639
  %v2653 = vadd.f32 %v2532, %v2642
  %v2654 = vadd.f32 %v2533, %v2647
  %v2655 = vld [vmem:[#allocation4 + $0x8] sm:$0xff]
  %v2656 = vld [vmem:[#allocation4 + $0x10] sm:$0xff]
  %v2657 = vld [vmem:[#allocation4 + $0x18] sm:$0x3f]
  %v2658 = vpack.c.bf16 %v2656, %v2655
  %v2659 = vpack.c.bf16 %v2657, %v2657
  %s2660 = scalar_lea.vmem %s5, 320
  %v2661 = vld [vmem:[%s2660] sm:$0xf]
  %v2662 = vld [vmem:[%s2660 + $0x4] sm:$0xf]
  %v2663 = vld [vmem:[%s2660 + $0x8] sm:$0xf]
  %v2664 = vld [vmem:[%s2660 + $0xc] sm:$0xf]
  %v2665 = vld [vmem:[%s2660 + $0x10] sm:$0xf]
  %v2666 = vld [vmem:[%s2660 + $0x14] sm:$0xf]
  %v2667 = vld [vmem:[%s2660 + $0x18] sm:$0xf]
  %v2668 = vld [vmem:[%s2660 + $0x1c] sm:$0xf]
  %v2669 = vld [vmem:[%s2660 + $0x20] sm:$0xf]
  %v2670 = vld [vmem:[%s2660 + $0x24] sm:$0xf]
  %v2671 = vld [vmem:[%s2660 + $0x28] sm:$0xf]
  %v2672 = vld [vmem:[%s2660 + $0x2c] sm:$0xf]
  %v2673 = vld [vmem:[%s2660 + $0x30] sm:$0xf]
  %v2674 = vld [vmem:[%s2660 + $0x34] sm:$0xf]
  %v2675 = vld [vmem:[%s2660 + $0x38] sm:$0xf]
  %v2676 = vld [vmem:[%s2660 + $0x3c] sm:$0xf]
  %v2693 = vunpack.c.l.b16 %v2661
  %v2694 = vunpack.c.l.b16 %v2662
  %v2695 = vunpack.c.l.b16 %v2663
  %v2696 = vunpack.c.l.b16 %v2664
  %v2697 = vunpack.c.l.b16 %v2665
  %v2698 = vunpack.c.l.b16 %v2666
  %v2699 = vunpack.c.l.b16 %v2667
  %v2700 = vunpack.c.l.b16 %v2668
  %v2701 = vunpack.c.l.b16 %v2669
  %v2702 = vunpack.c.l.b16 %v2670
  %v2703 = vunpack.c.l.b16 %v2671
  %v2704 = vunpack.c.l.b16 %v2672
  %v2705 = vunpack.c.l.b16 %v2673
  %v2706 = vunpack.c.l.b16 %v2674
  %v2707 = vunpack.c.l.b16 %v2675
  %v2708 = vunpack.c.l.b16 %v2676
  %v2709 = vpack.c.b16 %v2694, %v2693
  %v2710 = vpack.c.b16 %v2696, %v2695
  %v2711 = vpack.c.b16 %v2698, %v2697
  %v2712 = vpack.c.b16 %v2700, %v2699
  %v2713 = vpack.c.b16 %v2702, %v2701
  %v2714 = vpack.c.b16 %v2704, %v2703
  %v2715 = vpack.c.b16 %v2706, %v2705
  %v2716 = vpack.c.b16 %v2708, %v2707
  %2725 = vmatprep.subr.bf16.mxu0 0
  %2726 = vmatpush1.bf16.msra.mxu0 %v2716
  %2727 = vmatprep.subr.bf16.mxu0 0
  %2728 = vmatpush1.bf16.msra.mxu0 %v2715
  %2729 = vmatprep.subr.bf16.mxu0 0
  %2730 = vmatpush1.bf16.msra.mxu0 %v2714
  %2731 = vmatprep.subr.bf16.mxu0 0
  %2732 = vmatpush1.bf16.msra.mxu0 %v2713
  %2733 = vmatprep.subr.bf16.mxu0 0
  %2734 = vmatpush1.bf16.msra.mxu0 %v2712
  %2735 = vmatprep.subr.bf16.mxu0 0
  %2736 = vmatpush1.bf16.msra.mxu0 %v2711
  %2737 = vmatprep.subr.bf16.mxu0 0
  %2738 = vmatpush1.bf16.msra.mxu0 %v2710
  %2739 = vmatprep.subr.bf16.mxu0 0
  %2740 = vmatpush1.bf16.msra.mxu0 %v2709
  %2741 = vmatprep.subr.bf16.mxu0 0
  %2742 = vmatpush2.bf16.msra.mxu0 0
  %2743 = vmatprep.subr.bf16.mxu0 0
  %2744 = vmatpush2.bf16.msra.mxu0 0
  %2745 = vmatprep.subr.bf16.mxu0 0
  %2746 = vmatpush2.bf16.msra.mxu0 0
  %2747 = vmatprep.subr.bf16.mxu0 0
  %2748 = vmatpush2.bf16.msra.mxu0 0
  %2749 = vmatprep.subr.bf16.mxu0 0
  %2750 = vmatpush2.bf16.msra.mxu0 0
  %2751 = vmatprep.subr.bf16.mxu0 0
  %2752 = vmatpush2.bf16.msra.mxu0 0
  %2753 = vmatprep.subr.bf16.mxu0 0
  %2754 = vmatpush2.bf16.msra.mxu0 0
  %2755 = vmatprep.subr.bf16.mxu0 0
  %2756 = vmatpush2.bf16.msra.mxu0 0
  %2757 = vmatprep.mubr.bf16.mxu0 0
  %2758 = vmatmul.mubr.bf16.gmra.mxu0 %v2658
  %v2759 = vpop.f32.mrf.mxu0
  %v2760 = vadd.f32 0.0, %v2759
  %v2761 = vpop.f32.mrf.mxu0
  %v2762 = vpop.f32.mrf.mxu0
  %v2763 = vadd.f32 0.0, %v2762
  %v2764 = vpop.f32.mrf.mxu0
  %2765 = vmatprep.mubr.bf16.mxu0 0
  %2766 = vmatmul.mubr.bf16.gmra.mxu0 %v2659
  %v2767 = vpop.f32.mrf.mxu0
  %v2768 = vadd.f32 0.0, %v2767
  %v2769 = vpop.f32.mrf.mxu0
  %v2770 = vpop.f32.mrf.mxu0
  %v2771 = vpop.f32.mrf.mxu0
  %2772 = vdwg.mxu0
  %v2773 = vadd.f32 %v2652, %v2760
  %v2774 = vadd.f32 %v2653, %v2763
  %v2775 = vadd.f32 %v2654, %v2768
  %v2776 = vld [vmem:[#allocation4 + $0xc] sm:$0xff]
  %v2777 = vld [vmem:[#allocation4 + $0x14] sm:$0xff]
  %v2778 = vld [vmem:[#allocation4 + $0x1c] sm:$0x3f]
  %v2779 = vpack.c.bf16 %v2777, %v2776
  %v2780 = vpack.c.bf16 %v2778, %v2778
  %s2781 = scalar_lea.vmem %s5, 384
  %v2782 = vld [vmem:[%s2781] sm:$0xf]
  %v2783 = vld [vmem:[%s2781 + $0x4] sm:$0xf]
  %v2784 = vld [vmem:[%s2781 + $0x8] sm:$0xf]
  %v2785 = vld [vmem:[%s2781 + $0xc] sm:$0xf]
  %v2786 = vld [vmem:[%s2781 + $0x10] sm:$0xf]
  %v2787 = vld [vmem:[%s2781 + $0x14] sm:$0xf]
  %v2788 = vld [vmem:[%s2781 + $0x18] sm:$0xf]
  %v2789 = vld [vmem:[%s2781 + $0x1c] sm:$0xf]
  %v2790 = vld [vmem:[%s2781 + $0x20] sm:$0xf]
  %v2791 = vld [vmem:[%s2781 + $0x24] sm:$0xf]
  %v2792 = vld [vmem:[%s2781 + $0x28] sm:$0xf]
  %v2793 = vld [vmem:[%s2781 + $0x2c] sm:$0xf]
  %v2794 = vld [vmem:[%s2781 + $0x30] sm:$0xf]
  %v2795 = vld [vmem:[%s2781 + $0x34] sm:$0xf]
  %v2796 = vld [vmem:[%s2781 + $0x38] sm:$0xf]
  %v2797 = vld [vmem:[%s2781 + $0x3c] sm:$0xf]
  %v2814 = vunpack.c.l.b16 %v2782
  %v2815 = vunpack.c.l.b16 %v2783
  %v2816 = vunpack.c.l.b16 %v2784
  %v2817 = vunpack.c.l.b16 %v2785
  %v2818 = vunpack.c.l.b16 %v2786
  %v2819 = vunpack.c.l.b16 %v2787
  %v2820 = vunpack.c.l.b16 %v2788
  %v2821 = vunpack.c.l.b16 %v2789
  %v2822 = vunpack.c.l.b16 %v2790
  %v2823 = vunpack.c.l.b16 %v2791
  %v2824 = vunpack.c.l.b16 %v2792
  %v2825 = vunpack.c.l.b16 %v2793
  %v2826 = vunpack.c.l.b16 %v2794
  %v2827 = vunpack.c.l.b16 %v2795
  %v2828 = vunpack.c.l.b16 %v2796
  %v2829 = vunpack.c.l.b16 %v2797
  %v2830 = vpack.c.b16 %v2815, %v2814
  %v2831 = vpack.c.b16 %v2817, %v2816
  %v2832 = vpack.c.b16 %v2819, %v2818
  %v2833 = vpack.c.b16 %v2821, %v2820
  %v2834 = vpack.c.b16 %v2823, %v2822
  %v2835 = vpack.c.b16 %v2825, %v2824
  %v2836 = vpack.c.b16 %v2827, %v2826
  %v2837 = vpack.c.b16 %v2829, %v2828
  %2846 = vmatprep.subr.bf16.mxu0 0
  %2847 = vmatpush1.bf16.msra.mxu0 %v2837
  %2848 = vmatprep.subr.bf16.mxu0 0
  %2849 = vmatpush1.bf16.msra.mxu0 %v2836
  %2850 = vmatprep.subr.bf16.mxu0 0
  %2851 = vmatpush1.bf16.msra.mxu0 %v2835
  %2852 = vmatprep.subr.bf16.mxu0 0
  %2853 = vmatpush1.bf16.msra.mxu0 %v2834
  %2854 = vmatprep.subr.bf16.mxu0 0
  %2855 = vmatpush1.bf16.msra.mxu0 %v2833
  %2856 = vmatprep.subr.bf16.mxu0 0
  %2857 = vmatpush1.bf16.msra.mxu0 %v2832
  %2858 = vmatprep.subr.bf16.mxu0 0
  %2859 = vmatpush1.bf16.msra.mxu0 %v2831
  %2860 = vmatprep.subr.bf16.mxu0 0
  %2861 = vmatpush1.bf16.msra.mxu0 %v2830
  %2862 = vmatprep.subr.bf16.mxu0 0
  %2863 = vmatpush2.bf16.msra.mxu0 0
  %2864 = vmatprep.subr.bf16.mxu0 0
  %2865 = vmatpush2.bf16.msra.mxu0 0
  %2866 = vmatprep.subr.bf16.mxu0 0
  %2867 = vmatpush2.bf16.msra.mxu0 0
  %2868 = vmatprep.subr.bf16.mxu0 0
  %2869 = vmatpush2.bf16.msra.mxu0 0
  %2870 = vmatprep.subr.bf16.mxu0 0
  %2871 = vmatpush2.bf16.msra.mxu0 0
  %2872 = vmatprep.subr.bf16.mxu0 0
  %2873 = vmatpush2.bf16.msra.mxu0 0
  %2874 = vmatprep.subr.bf16.mxu0 0
  %2875 = vmatpush2.bf16.msra.mxu0 0
  %2876 = vmatprep.subr.bf16.mxu0 0
  %2877 = vmatpush2.bf16.msra.mxu0 0
  %2878 = vmatprep.mubr.bf16.mxu0 0
  %2879 = vmatmul.mubr.bf16.gmra.mxu0 %v2779
  %v2880 = vpop.f32.mrf.mxu0
  %v2881 = vadd.f32 0.0, %v2880
  %v2882 = vpop.f32.mrf.mxu0
  %v2883 = vpop.f32.mrf.mxu0
  %v2884 = vadd.f32 0.0, %v2883
  %v2885 = vpop.f32.mrf.mxu0
  %2886 = vmatprep.mubr.bf16.mxu0 0
  %2887 = vmatmul.mubr.bf16.gmra.mxu0 %v2780
  %v2888 = vpop.f32.mrf.mxu0
  %v2889 = vadd.f32 0.0, %v2888
  %v2890 = vpop.f32.mrf.mxu0
  %v2891 = vpop.f32.mrf.mxu0
  %v2892 = vpop.f32.mrf.mxu0
  %2893 = vdwg.mxu0
  %v2894 = vadd.f32 %v2773, %v2881
  %v2895 = vadd.f32 %v2774, %v2884
  %v2896 = vadd.f32 %v2775, %v2889
  %v2897 = vld [vmem:[#allocation4 + $0xd] sm:$0xff]
  %v2898 = vld [vmem:[#allocation4 + $0x15] sm:$0xff]
  %v2899 = vld [vmem:[#allocation4 + $0x1d] sm:$0x3f]
  %v2900 = vpack.c.bf16 %v2898, %v2897
  %v2901 = vpack.c.bf16 %v2899, %v2899
  %s2902 = scalar_lea.vmem %s5, 448
  %v2903 = vld [vmem:[%s2902] sm:$0xf]
  %v2904 = vld [vmem:[%s2902 + $0x4] sm:$0xf]
  %v2905 = vld [vmem:[%s2902 + $0x8] sm:$0xf]
  %v2906 = vld [vmem:[%s2902 + $0xc] sm:$0xf]
  %v2907 = vld [vmem:[%s2902 + $0x10] sm:$0xf]
  %v2908 = vld [vmem:[%s2902 + $0x14] sm:$0xf]
  %v2909 = vld [vmem:[%s2902 + $0x18] sm:$0xf]
  %v2910 = vld [vmem:[%s2902 + $0x1c] sm:$0xf]
  %v2911 = vld [vmem:[%s2902 + $0x20] sm:$0xf]
  %v2912 = vld [vmem:[%s2902 + $0x24] sm:$0xf]
  %v2913 = vld [vmem:[%s2902 + $0x28] sm:$0xf]
  %v2914 = vld [vmem:[%s2902 + $0x2c] sm:$0xf]
  %v2915 = vld [vmem:[%s2902 + $0x30] sm:$0xf]
  %v2916 = vld [vmem:[%s2902 + $0x34] sm:$0xf]
  %v2917 = vld [vmem:[%s2902 + $0x38] sm:$0xf]
  %v2918 = vld [vmem:[%s2902 + $0x3c] sm:$0xf]
  %v2935 = vunpack.c.l.b16 %v2903
  %v2936 = vunpack.c.l.b16 %v2904
  %v2937 = vunpack.c.l.b16 %v2905
  %v2938 = vunpack.c.l.b16 %v2906
  %v2939 = vunpack.c.l.b16 %v2907
  %v2940 = vunpack.c.l.b16 %v2908
  %v2941 = vunpack.c.l.b16 %v2909
  %v2942 = vunpack.c.l.b16 %v2910
  %v2943 = vunpack.c.l.b16 %v2911
  %v2944 = vunpack.c.l.b16 %v2912
  %v2945 = vunpack.c.l.b16 %v2913
  %v2946 = vunpack.c.l.b16 %v2914
  %v2947 = vunpack.c.l.b16 %v2915
  %v2948 = vunpack.c.l.b16 %v2916
  %v2949 = vunpack.c.l.b16 %v2917
  %v2950 = vunpack.c.l.b16 %v2918
  %v2951 = vpack.c.b16 %v2936, %v2935
  %v2952 = vpack.c.b16 %v2938, %v2937
  %v2953 = vpack.c.b16 %v2940, %v2939
  %v2954 = vpack.c.b16 %v2942, %v2941
  %v2955 = vpack.c.b16 %v2944, %v2943
  %v2956 = vpack.c.b16 %v2946, %v2945
  %v2957 = vpack.c.b16 %v2948, %v2947
  %v2958 = vpack.c.b16 %v2950, %v2949
  %2967 = vmatprep.subr.bf16.mxu0 0
  %2968 = vmatpush1.bf16.msra.mxu0 %v2958
  %2969 = vmatprep.subr.bf16.mxu0 0
  %2970 = vmatpush1.bf16.msra.mxu0 %v2957
  %2971 = vmatprep.subr.bf16.mxu0 0
  %2972 = vmatpush1.bf16.msra.mxu0 %v2956
  %2973 = vmatprep.subr.bf16.mxu0 0
  %2974 = vmatpush1.bf16.msra.mxu0 %v2955
  %2975 = vmatprep.subr.bf16.mxu0 0
  %2976 = vmatpush1.bf16.msra.mxu0 %v2954
  %2977 = vmatprep.subr.bf16.mxu0 0
  %2978 = vmatpush1.bf16.msra.mxu0 %v2953
  %2979 = vmatprep.subr.bf16.mxu0 0
  %2980 = vmatpush1.bf16.msra.mxu0 %v2952
  %2981 = vmatprep.subr.bf16.mxu0 0
  %2982 = vmatpush1.bf16.msra.mxu0 %v2951
  %2983 = vmatprep.subr.bf16.mxu0 0
  %2984 = vmatpush2.bf16.msra.mxu0 0
  %2985 = vmatprep.subr.bf16.mxu0 0
  %2986 = vmatpush2.bf16.msra.mxu0 0
  %2987 = vmatprep.subr.bf16.mxu0 0
  %2988 = vmatpush2.bf16.msra.mxu0 0
  %2989 = vmatprep.subr.bf16.mxu0 0
  %2990 = vmatpush2.bf16.msra.mxu0 0
  %2991 = vmatprep.subr.bf16.mxu0 0
  %2992 = vmatpush2.bf16.msra.mxu0 0
  %2993 = vmatprep.subr.bf16.mxu0 0
  %2994 = vmatpush2.bf16.msra.mxu0 0
  %2995 = vmatprep.subr.bf16.mxu0 0
  %2996 = vmatpush2.bf16.msra.mxu0 0
  %2997 = vmatprep.subr.bf16.mxu0 0
  %2998 = vmatpush2.bf16.msra.mxu0 0
  %2999 = vmatprep.mubr.bf16.mxu0 0
  %3000 = vmatmul.mubr.bf16.gmra.mxu0 %v2900
  %v3001 = vpop.f32.mrf.mxu0
  %v3002 = vadd.f32 0.0, %v3001
  %v3003 = vpop.f32.mrf.mxu0
  %v3004 = vpop.f32.mrf.mxu0
  %v3005 = vadd.f32 0.0, %v3004
  %v3006 = vpop.f32.mrf.mxu0
  %3007 = vmatprep.mubr.bf16.mxu0 0
  %3008 = vmatmul.mubr.bf16.gmra.mxu0 %v2901
  %v3009 = vpop.f32.mrf.mxu0
  %v3010 = vadd.f32 0.0, %v3009
  %v3011 = vpop.f32.mrf.mxu0
  %v3012 = vpop.f32.mrf.mxu0
  %v3013 = vpop.f32.mrf.mxu0
  %3014 = vdwg.mxu0
  %v3015 = vadd.f32 %v2894, %v3002
  %v3016 = vadd.f32 %v2895, %v3005
  %v3017 = vadd.f32 %v2896, %v3010
  %v3018 = vld [vmem:[#allocation4 + $0xe] sm:$0xff]
  %v3019 = vld [vmem:[#allocation4 + $0x16] sm:$0xff]
  %v3020 = vld [vmem:[#allocation4 + $0x1e] sm:$0x3f]
  %v3021 = vpack.c.bf16 %v3019, %v3018
  %v3022 = vpack.c.bf16 %v3020, %v3020
  %s3023 = scalar_lea.vmem %s5, 512
  %v3024 = vld [vmem:[%s3023] sm:$0xf]
  %v3025 = vld [vmem:[%s3023 + $0x4] sm:$0xf]
  %v3026 = vld [vmem:[%s3023 + $0x8] sm:$0xf]
  %v3027 = vld [vmem:[%s3023 + $0xc] sm:$0xf]
  %v3028 = vld [vmem:[%s3023 + $0x10] sm:$0xf]
  %v3029 = vld [vmem:[%s3023 + $0x14] sm:$0xf]
  %v3030 = vld [vmem:[%s3023 + $0x18] sm:$0xf]
  %v3031 = vld [vmem:[%s3023 + $0x1c] sm:$0xf]
  %v3032 = vld [vmem:[%s3023 + $0x20] sm:$0xf]
  %v3033 = vld [vmem:[%s3023 + $0x24] sm:$0xf]
  %v3034 = vld [vmem:[%s3023 + $0x28] sm:$0xf]
  %v3035 = vld [vmem:[%s3023 + $0x2c] sm:$0xf]
  %v3036 = vld [vmem:[%s3023 + $0x30] sm:$0xf]
  %v3037 = vld [vmem:[%s3023 + $0x34] sm:$0xf]
  %v3038 = vld [vmem:[%s3023 + $0x38] sm:$0xf]
  %v3039 = vld [vmem:[%s3023 + $0x3c] sm:$0xf]
  %v3056 = vunpack.c.l.b16 %v3024
  %v3057 = vunpack.c.l.b16 %v3025
  %v3058 = vunpack.c.l.b16 %v3026
  %v3059 = vunpack.c.l.b16 %v3027
  %v3060 = vunpack.c.l.b16 %v3028
  %v3061 = vunpack.c.l.b16 %v3029
  %v3062 = vunpack.c.l.b16 %v3030
  %v3063 = vunpack.c.l.b16 %v3031
  %v3064 = vunpack.c.l.b16 %v3032
  %v3065 = vunpack.c.l.b16 %v3033
  %v3066 = vunpack.c.l.b16 %v3034
  %v3067 = vunpack.c.l.b16 %v3035
  %v3068 = vunpack.c.l.b16 %v3036
  %v3069 = vunpack.c.l.b16 %v3037
  %v3070 = vunpack.c.l.b16 %v3038
  %v3071 = vunpack.c.l.b16 %v3039
  %v3072 = vpack.c.b16 %v3057, %v3056
  %v3073 = vpack.c.b16 %v3059, %v3058
  %v3074 = vpack.c.b16 %v3061, %v3060
  %v3075 = vpack.c.b16 %v3063, %v3062
  %v3076 = vpack.c.b16 %v3065, %v3064
  %v3077 = vpack.c.b16 %v3067, %v3066
  %v3078 = vpack.c.b16 %v3069, %v3068
  %v3079 = vpack.c.b16 %v3071, %v3070
  %3088 = vmatprep.subr.bf16.mxu0 0
  %3089 = vmatpush1.bf16.msra.mxu0 %v3079
  %3090 = vmatprep.subr.bf16.mxu0 0
  %3091 = vmatpush1.bf16.msra.mxu0 %v3078
  %3092 = vmatprep.subr.bf16.mxu0 0
  %3093 = vmatpush1.bf16.msra.mxu0 %v3077
  %3094 = vmatprep.subr.bf16.mxu0 0
  %3095 = vmatpush1.bf16.msra.mxu0 %v3076
  %3096 = vmatprep.subr.bf16.mxu0 0
  %3097 = vmatpush1.bf16.msra.mxu0 %v3075
  %3098 = vmatprep.subr.bf16.mxu0 0
  %3099 = vmatpush1.bf16.msra.mxu0 %v3074
  %3100 = vmatprep.subr.bf16.mxu0 0
  %3101 = vmatpush1.bf16.msra.mxu0 %v3073
  %3102 = vmatprep.subr.bf16.mxu0 0
  %3103 = vmatpush1.bf16.msra.mxu0 %v3072
  %3104 = vmatprep.subr.bf16.mxu0 0
  %3105 = vmatpush2.bf16.msra.mxu0 0
  %3106 = vmatprep.subr.bf16.mxu0 0
  %3107 = vmatpush2.bf16.msra.mxu0 0
  %3108 = vmatprep.subr.bf16.mxu0 0
  %3109 = vmatpush2.bf16.msra.mxu0 0
  %3110 = vmatprep.subr.bf16.mxu0 0
  %3111 = vmatpush2.bf16.msra.mxu0 0
  %3112 = vmatprep.subr.bf16.mxu0 0
  %3113 = vmatpush2.bf16.msra.mxu0 0
  %3114 = vmatprep.subr.bf16.mxu0 0
  %3115 = vmatpush2.bf16.msra.mxu0 0
  %3116 = vmatprep.subr.bf16.mxu0 0
  %3117 = vmatpush2.bf16.msra.mxu0 0
  %3118 = vmatprep.subr.bf16.mxu0 0
  %3119 = vmatpush2.bf16.msra.mxu0 0
  %3120 = vmatprep.mubr.bf16.mxu0 0
  %3121 = vmatmul.mubr.bf16.gmra.mxu0 %v3021
  %v3122 = vpop.f32.mrf.mxu0
  %v3123 = vadd.f32 0.0, %v3122
  %v3124 = vpop.f32.mrf.mxu0
  %v3125 = vpop.f32.mrf.mxu0
  %v3126 = vadd.f32 0.0, %v3125
  %v3127 = vpop.f32.mrf.mxu0
  %3128 = vmatprep.mubr.bf16.mxu0 0
  %3129 = vmatmul.mubr.bf16.gmra.mxu0 %v3022
  %v3130 = vpop.f32.mrf.mxu0
  %v3131 = vadd.f32 0.0, %v3130
  %v3132 = vpop.f32.mrf.mxu0
  %v3133 = vpop.f32.mrf.mxu0
  %v3134 = vpop.f32.mrf.mxu0
  %3135 = vdwg.mxu0
  %v3136 = vadd.f32 %v3015, %v3123
  %v3137 = vadd.f32 %v3016, %v3126
  %v3138 = vadd.f32 %v3017, %v3131
  %v3139 = vld [vmem:[%s6] sm:$0x1]
  %v3141 = vlaneseq
  %v3142 = vshrl.u32 %v3141, 7
  %v3143 = vsub.s32 0, %v3142
  %v3144 = vrot.slane %v3139, %v3143
  %v3146 = vadd.f32 %v3136, %v3144
  %v3147 = vadd.f32 %v3137, %v3144
  %v3148 = vadd.f32 %v3138, %v3144
  %v3149 = vmax.f32 %v3146, 0.0
  %v3150 = vmax.f32 %v3147, 0.0
  %v3151 = vmax.f32 %v3148, 0.0
  %3152 = vst [vmem:[#allocation5] sm:$0xff] %v3149
  %3153 = vst [vmem:[#allocation5 + $0x8] sm:$0xff] %v3150
  %3154 = vst [vmem:[#allocation5 + $0x10] sm:$0x3f] %v3151
  %v3155 = vld [vmem:[#allocation5] sm:$0xff]
  %v3156 = vld [vmem:[#allocation5 + $0x8] sm:$0x7f]
  %v3157 = vld [vmem:[#allocation5 + $0x1] sm:$0xff]
  %v3158 = vld [vmem:[#allocation5 + $0x9] sm:$0x7f]
  %v3159 = vadd.f32 %v3155, %v3157
  %v3160 = vadd.f32 %v3156, %v3158
  %v3161 = vld [vmem:[#allocation5 + $0x6] sm:$0xff]
  %v3162 = vld [vmem:[#allocation5 + $0xe] sm:$0x7f]
  %v3163 = vadd.f32 %v3159, %v3161
  %v3164 = vadd.f32 %v3160, %v3162
  %v3165 = vld [vmem:[#allocation5 + $0x7] sm:$0xff]
  %v3166 = vld [vmem:[#allocation5 + $0xf] sm:$0x7f]
  %v3167 = vadd.f32 %v3163, %v3165
  %v3168 = vadd.f32 %v3164, %v3166
  %3169 = vst [vmem:[#allocation7] sm:$0xff] %v3167
  %3170 = vst [vmem:[#allocation7 + $0x8] sm:$0x7f] %v3168
  %v3171 = vld [vmem:[#allocation7] ss:$2 sm:$0x3]
  %v3172 = vmul.f32 %v3171, 0.25
  %3173 = vst [vmem:[#allocation8] sm:$0x3] %v3172
  %s3174 = scalar_lea.vmem [#allocation7], 12
  %v3175 = vld [vmem:[%s3174] ss:$2 sm:$0x3]
  %v3176 = vmul.f32 %v3175, 0.25
  %3177 = vst [vmem:[#allocation8 + $0x2] sm:$0x3] %v3176
  %v3178 = vld [vmem:[#allocation8] sm:$0xf]
  %v3179 = vsel %vm2047, %v3178, 0.0
  %v3180 = vrot.slane %v3179, 4
  %v3181 = vadd.f32 %v3179, %v3180
  %v3182 = vrot.slane %v3181, 2
  %v3183 = vadd.f32 %v3181, %v3182
  %v3184 = vrot.slane %v3183, 1
  %v3185 = vadd.f32 %v3183, %v3184
  %v3186 = vmul.f32 %v3185, 0.25
  %v3187 = vpack.c.bf16 %v3178, %v3178
  %v3188 = vld [vmem:[%s7] sm:$0xf]
  %v3189 = vld [vmem:[%s7 + $0x4] sm:$0xf]
  %v3190 = vld [vmem:[%s7 + $0x8] sm:$0xf]
  %v3191 = vld [vmem:[%s7 + $0xc] sm:$0xf]
  %v3192 = vld [vmem:[%s7 + $0x10] sm:$0xf]
  %v3193 = vld [vmem:[%s7 + $0x14] sm:$0xf]
  %v3194 = vld [vmem:[%s7 + $0x18] sm:$0xf]
  %v3195 = vld [vmem:[%s7 + $0x1c] sm:$0xf]
  %v3196 = vld [vmem:[%s7 + $0x20] sm:$0xf]
  %v3197 = vld [vmem:[%s7 + $0x24] sm:$0xf]
  %v3198 = vld [vmem:[%s7 + $0x28] sm:$0xf]
  %v3199 = vld [vmem:[%s7 + $0x2c] sm:$0xf]
  %v3200 = vld [vmem:[%s7 + $0x30] sm:$0xf]
  %v3201 = vld [vmem:[%s7 + $0x34] sm:$0xf]
  %v3202 = vld [vmem:[%s7 + $0x38] sm:$0xf]
  %v3203 = vld [vmem:[%s7 + $0x3c] sm:$0xf]
  %v3204 = vld [vmem:[%s8] sm:$0x1]
  %v3206 = vlaneseq
  %v3207 = vshrl.u32 %v3206, 7
  %v3208 = vsub.s32 0, %v3207
  %v3209 = vrot.slane %v3204, %v3208
  %v3227 = vunpack.c.l.b16 %v3188
  %v3228 = vunpack.c.l.b16 %v3189
  %v3229 = vunpack.c.l.b16 %v3190
  %v3230 = vunpack.c.l.b16 %v3191
  %v3231 = vunpack.c.l.b16 %v3192
  %v3232 = vunpack.c.l.b16 %v3193
  %v3233 = vunpack.c.l.b16 %v3194
  %v3234 = vunpack.c.l.b16 %v3195
  %v3235 = vunpack.c.l.b16 %v3196
  %v3236 = vunpack.c.l.b16 %v3197
  %v3237 = vunpack.c.l.b16 %v3198
  %v3238 = vunpack.c.l.b16 %v3199
  %v3239 = vunpack.c.l.b16 %v3200
  %v3240 = vunpack.c.l.b16 %v3201
  %v3241 = vunpack.c.l.b16 %v3202
  %v3242 = vunpack.c.l.b16 %v3203
  %v3243 = vpack.c.b16 %v3228, %v3227
  %v3244 = vpack.c.b16 %v3230, %v3229
  %v3245 = vpack.c.b16 %v3232, %v3231
  %v3246 = vpack.c.b16 %v3234, %v3233
  %v3247 = vpack.c.b16 %v3236, %v3235
  %v3248 = vpack.c.b16 %v3238, %v3237
  %v3249 = vpack.c.b16 %v3240, %v3239
  %v3250 = vpack.c.b16 %v3242, %v3241
  %3259 = vmatprep.subr.bf16.mxu0 0
  %3260 = vmatpush1.bf16.msra.mxu0 %v3250
  %3261 = vmatprep.subr.bf16.mxu0 0
  %3262 = vmatpush1.bf16.msra.mxu0 %v3249
  %3263 = vmatprep.subr.bf16.mxu0 0
  %3264 = vmatpush1.bf16.msra.mxu0 %v3248
  %3265 = vmatprep.subr.bf16.mxu0 0
  %3266 = vmatpush1.bf16.msra.mxu0 %v3247
  %3267 = vmatprep.subr.bf16.mxu0 0
  %3268 = vmatpush1.bf16.msra.mxu0 %v3246
  %3269 = vmatprep.subr.bf16.mxu0 0
  %3270 = vmatpush1.bf16.msra.mxu0 %v3245
  %3271 = vmatprep.subr.bf16.mxu0 0
  %3272 = vmatpush1.bf16.msra.mxu0 %v3244
  %3273 = vmatprep.subr.bf16.mxu0 0
  %3274 = vmatpush1.bf16.msra.mxu0 %v3243
  %3275 = vmatprep.subr.bf16.mxu0 0
  %3276 = vmatpush2.bf16.msra.mxu0 0
  %3277 = vmatprep.subr.bf16.mxu0 0
  %3278 = vmatpush2.bf16.msra.mxu0 0
  %3279 = vmatprep.subr.bf16.mxu0 0
  %3280 = vmatpush2.bf16.msra.mxu0 0
  %3281 = vmatprep.subr.bf16.mxu0 0
  %3282 = vmatpush2.bf16.msra.mxu0 0
  %3283 = vmatprep.subr.bf16.mxu0 0
  %3284 = vmatpush2.bf16.msra.mxu0 0
  %3285 = vmatprep.subr.bf16.mxu0 0
  %3286 = vmatpush2.bf16.msra.mxu0 0
  %3287 = vmatprep.subr.bf16.mxu0 0
  %3288 = vmatpush2.bf16.msra.mxu0 0
  %3289 = vmatprep.subr.bf16.mxu0 0
  %3290 = vmatpush2.bf16.msra.mxu0 0
  %3291 = vmatprep.mubr.bf16.mxu0 0
  %3292 = vmatmul.mubr.bf16.gmra.mxu0 %v3187
  %v3293 = vpop.f32.mrf.mxu0
  %v3294 = vadd.f32 %v3209, %v3293
  %v3295 = vpop.f32.mrf.mxu0
  %v3296 = vpop.f32.mrf.mxu0
  %v3297 = vpop.f32.mrf.mxu0
  %3298 = vdwg.mxu0
  %v3299 = vmax.f32 %v3294, 0.0
  %v3300 = vsel %vm2047, %v3299, 0.0
  %v3301 = vrot.slane %v3300, 4
  %v3302 = vadd.f32 %v3300, %v3301
  %v3303 = vrot.slane %v3302, 2
  %v3304 = vadd.f32 %v3302, %v3303
  %v3305 = vrot.slane %v3304, 1
  %v3306 = vadd.f32 %v3304, %v3305
  %v3307 = vmul.f32 %v3306, 0.25
  %3308 = vst [vmem:[%s9] sm:$0x1] %v446
  %3309 = vst [vmem:[%s9 + $0x1] sm:$0x1] %v2056
  %3310 = vst [vmem:[%s9 + $0x2] sm:$0x1] %v3186
  %3311 = vst [vmem:[%s9 + $0x3] sm:$0x1] %v3307
  // Predicated region
  $region38: #{convnet2_forward.1} parent=0 // pred_check
    _
  $region39: #{convnet2_forward.1} parent=0 // pred_check_branch
    %3313 = sbr.rel (0) target = $region41
  $region40: #{convnet2_forward.1} parent=0 // pred_region
    _
  $region41: #{convnet2_forward.1} parent=0 // pred_fallthru
    _
  // Predicated region
  $region42: #{convnet2_forward.1} parent=0 // pred_check
    _
  $region43: #{convnet2_forward.1} parent=0 // pred_check_branch
    %3315 = sbr.rel (0) target = $region45
  $region44: #{convnet2_forward.1} parent=0 // pred_region
    _
  $region45: #{convnet2_forward.1} parent=0 // pred_fallthru
    _

</llo_original>
